<compile_context>
chip_gen: v6e
topology: v6e:2x2x1
jax: 0.10.0
libtpu: 0.0.40
codegen_flags: <defaults>
</compile_context>

<pallas_src>
import jax
import jax.numpy as jnp
from jax.experimental import pallas as pl
from jax.experimental.pallas import tpu as pltpu

BN_EPS = 1e-5
MAX_F = 1024                      # widest feature dim -> slab lane width

LAYER_DIMS = (
    (120, 256, True),    # lay1: Linear + BN + ReLU
    (256, 512, True),    # lay2
    (512, 1024, True),   # lay3
    (1024, 512, True),   # mid
    (512, 256, True),    # lay4
    (256, 120, True),    # lay5
    (120, 2, False),     # lay6: Linear only
)
N_LAYERS = len(LAYER_DIMS)
SLAB_ROWS = 2 * N_LAYERS - 1      # gamma/beta per BN layer, bias for lay6


def _home_fused_kernel(x_ref, slab_ref, *refs):
    """All 7 layers; activations stay on-chip; weights hand-prefetched."""
    w_hbm = refs[:N_LAYERS]                       # raw HBM refs (pl.ANY)
    o_ref = refs[N_LAYERS]
    w_vmem = refs[N_LAYERS + 1: 2 * N_LAYERS + 1]  # per-layer VMEM buffers
    sem = refs[2 * N_LAYERS + 1]                   # DMA semaphores (N_LAYERS,)

    # Kick off ALL weight DMAs up front; wait per layer right before its
    # matmul so later layers' copies overlap earlier layers' compute.
    copies = [pltpu.make_async_copy(w_hbm[i], w_vmem[i], sem.at[i])
              for i in range(N_LAYERS)]
    for c in copies:
        c.start()

    h = x_ref[...].astype(jnp.float32)
    for i, (_, fout, has_bn) in enumerate(LAYER_DIMS):
        copies[i].wait()
        w = w_vmem[i][...]                         # bf16 (fin, fout)
        # MXU: bf16 x bf16 with f32 accumulation.
        y = jnp.dot(h.astype(w.dtype), w, preferred_element_type=jnp.float32)
        if has_bn:
            # Train-mode BatchNorm1d: batch mean, biased variance, eps=1e-5.
            # The Linear bias is omitted (cancelled exactly by mean subtraction).
            mean = jnp.mean(y, axis=0, keepdims=True)
            var = jnp.mean(jnp.square(y - mean), axis=0, keepdims=True)
            gamma = slab_ref[2 * i:2 * i + 1, :fout]
            beta = slab_ref[2 * i + 1:2 * i + 2, :fout]
            y = (y - mean) * jax.lax.rsqrt(var + BN_EPS)   # rsqrt rides the EUP
            y = y * gamma + beta
            y = jnp.maximum(y, 0.0)                         # ReLU
        else:
            bias = slab_ref[2 * i:2 * i + 1, :fout]         # lay6 bias
            y = y + bias
        h = y
    o_ref[...] = h.astype(o_ref.dtype)


def home_forward(x, weights, slab):
    B, _ = x.shape
    fout_final = LAYER_DIMS[-1][1]

    in_specs = (
        [pl.BlockSpec(x.shape, lambda i: (0, 0)),          # x: auto VMEM DMA
         pl.BlockSpec(slab.shape, lambda i: (0, 0))]       # packed small vecs
        + [pl.BlockSpec(memory_space=pl.ANY)               # weights: raw HBM
           for _ in range(N_LAYERS)]
    )
    scratch_shapes = (
        [pltpu.VMEM((fin, fout), jnp.bfloat16) for (fin, fout, _) in LAYER_DIMS]
        + [pltpu.SemaphoreType.DMA((N_LAYERS,))]
    )

    return pl.pallas_call(
        _home_fused_kernel,
        out_shape=jax.ShapeDtypeStruct((B, fout_final), jnp.float32),
        grid=(1,),
        in_specs=in_specs,
        out_specs=pl.BlockSpec((B, fout_final), lambda i: (0, 0)),
        scratch_shapes=scratch_shapes,
        compiler_params=pltpu.CompilerParams(
            dimension_semantics=("arbitrary",)),
    )(x, slab, *weights)


# ------------------------ parameter construction ------------------------

def init_params(key):
    weights, biases, gammas, betas = [], [], [], []
    for (fin, fout, _) in LAYER_DIMS:
        key, kw, kb, kg, kbt = jax.random.split(key, 5)
        bound = float(fin) ** -0.5
        # Stored [in, out] (transpose of PyTorch [out, in]); bf16 storage
        # halves the HBM weight traffic, the kernel's DMA floor.
        w = jax.random.uniform(kw, (fin, fout), jnp.float32,
                               -bound, bound).astype(jnp.bfloat16)
        b = jax.random.uniform(kb, (fout,), jnp.float32, -bound, bound)
        # PyTorch BN default is gamma=1, beta=0; randomized here so the affine
        # path is actually exercised by the correctness check.
        g = 1.0 + 0.1 * jax.random.normal(kg, (fout,), jnp.float32)
        bt = 0.1 * jax.random.normal(kbt, (fout,), jnp.float32)
        weights.append(w); biases.append(b); gammas.append(g); betas.append(bt)
    return weights, biases, gammas, betas


def pack_slab(biases, gammas, betas):
    """Pack gamma/beta (BN layers) + final bias into one (13, 1024) f32 slab."""
    slab = jnp.zeros((SLAB_ROWS, MAX_F), jnp.float32)
    for i, (_, fout, has_bn) in enumerate(LAYER_DIMS):
        if has_bn:
            slab = slab.at[2 * i, :fout].set(gammas[i])
            slab = slab.at[2 * i + 1, :fout].set(betas[i])
        else:
            slab = slab.at[2 * i, :fout].set(biases[i])
    return slab


# ----------------------------- reference --------------------------------

def home_forward_ref(x, weights, biases, gammas, betas):
    """Faithful to the PyTorch module: all Linear biases, train-mode BN."""
    h = x
    for i, (_, _, has_bn) in enumerate(LAYER_DIMS):
        w = weights[i]
        y = jnp.dot(h.astype(w.dtype), w,
                    preferred_element_type=jnp.float32) + biases[i]
        if has_bn:
            mean = jnp.mean(y, axis=0, keepdims=True)
            var = jnp.mean(jnp.square(y - mean), axis=0, keepdims=True)
            y = (y - mean) * jax.lax.rsqrt(var + BN_EPS) * gammas[i] + betas[i]
            y = jnp.maximum(y, 0.0)
        h = y
    return h


if __name__ == "__main__":
    key = jax.random.PRNGKey(0)
    kp, kx = jax.random.split(key)
    weights, biases, gammas, betas = init_params(kp)
    slab = pack_slab(biases, gammas, betas)
    x = jax.random.normal(kx, (8, 120), jnp.float32)   # batch=8, features=120

    out = jax.block_until_ready(home_forward(x, weights, slab))
    ref = home_forward_ref(x, weights, biases, gammas, betas)

    assert out.shape == (8, 2), out.shape
    # Tolerance covers MXU-vs-XLA accumulation order and the (exact in real
    # arithmetic) dropped biases on BN-followed layers.
    assert jnp.allclose(out, ref, atol=2e-3, rtol=2e-3), (
        float(jnp.max(jnp.abs(out - ref))))

    print("KERNEL_OK")
</pallas_src>

<mosaic_0001>
module attributes {stable_mosaic.version = 11 : i64} {
  func.func @_home_fused_kernel(%arg0: i32, %arg1: memref<8x120xf32, #tpu.memory_space<vmem>>, %arg2: memref<13x1024xf32, #tpu.memory_space<vmem>>, %arg3: memref<120x256xbf16, #tpu.memory_space<any>>, %arg4: memref<256x512xbf16, #tpu.memory_space<any>>, %arg5: memref<512x1024xbf16, #tpu.memory_space<any>>, %arg6: memref<1024x512xbf16, #tpu.memory_space<any>>, %arg7: memref<512x256xbf16, #tpu.memory_space<any>>, %arg8: memref<256x120xbf16, #tpu.memory_space<any>>, %arg9: memref<120x2xbf16, #tpu.memory_space<any>>, %arg10: memref<8x2xf32, #tpu.memory_space<vmem>>, %arg11: memref<120x256xbf16, #tpu.memory_space<vmem>>, %arg12: memref<256x512xbf16, #tpu.memory_space<vmem>>, %arg13: memref<512x1024xbf16, #tpu.memory_space<vmem>>, %arg14: memref<1024x512xbf16, #tpu.memory_space<vmem>>, %arg15: memref<512x256xbf16, #tpu.memory_space<vmem>>, %arg16: memref<256x120xbf16, #tpu.memory_space<vmem>>, %arg17: memref<120x2xbf16, #tpu.memory_space<vmem>>, %arg18: memref<7x!tpu.dma_semaphore, #tpu.memory_space<semaphore_mem>>) attributes {dimension_semantics = [#tpu.dimension_semantics<arbitrary>], iteration_bounds = array<i64: 1>, scalar_prefetch = 0 : i64, scratch_operands = 8 : i64, tpu.core_type = #tpu.core_type<tc>, window_params = [{pipeline_mode = #tpu.pipeline_mode<synchronous>, transform_indices = @transform_0, window_bounds = array<i64: 8, 120>}, {pipeline_mode = #tpu.pipeline_mode<synchronous>, transform_indices = @transform_1, window_bounds = array<i64: 13, 1024>}, {}, {}, {}, {}, {}, {}, {}, {pipeline_mode = #tpu.pipeline_mode<synchronous>, transform_indices = @transform_9, window_bounds = array<i64: 8, 2>}]} {
    %c0_i32 = arith.constant 0 : i32
    %0 = tpu.memref_slice %arg18[%c0_i32] : memref<7x!tpu.dma_semaphore, #tpu.memory_space<semaphore_mem>> -> memref<1x!tpu.dma_semaphore, #tpu.memory_space<semaphore_mem>>
    %1 = tpu.memref_squeeze %0 : memref<1x!tpu.dma_semaphore, #tpu.memory_space<semaphore_mem>> -> memref<!tpu.dma_semaphore, #tpu.memory_space<semaphore_mem>>
    tpu.enqueue_dma source(%arg3 : memref<120x256xbf16, #tpu.memory_space<any>>) target(%arg11 : memref<120x256xbf16, #tpu.memory_space<vmem>>) target_semaphore(%1 : memref<!tpu.dma_semaphore, #tpu.memory_space<semaphore_mem>>)
    %c1_i32 = arith.constant 1 : i32
    %2 = tpu.memref_slice %arg18[%c1_i32] : memref<7x!tpu.dma_semaphore, #tpu.memory_space<semaphore_mem>> -> memref<1x!tpu.dma_semaphore, #tpu.memory_space<semaphore_mem>>
    %3 = tpu.memref_squeeze %2 : memref<1x!tpu.dma_semaphore, #tpu.memory_space<semaphore_mem>> -> memref<!tpu.dma_semaphore, #tpu.memory_space<semaphore_mem>>
    tpu.enqueue_dma source(%arg4 : memref<256x512xbf16, #tpu.memory_space<any>>) target(%arg12 : memref<256x512xbf16, #tpu.memory_space<vmem>>) target_semaphore(%3 : memref<!tpu.dma_semaphore, #tpu.memory_space<semaphore_mem>>)
    %c2_i32 = arith.constant 2 : i32
    %4 = tpu.memref_slice %arg18[%c2_i32] : memref<7x!tpu.dma_semaphore, #tpu.memory_space<semaphore_mem>> -> memref<1x!tpu.dma_semaphore, #tpu.memory_space<semaphore_mem>>
    %5 = tpu.memref_squeeze %4 : memref<1x!tpu.dma_semaphore, #tpu.memory_space<semaphore_mem>> -> memref<!tpu.dma_semaphore, #tpu.memory_space<semaphore_mem>>
    tpu.enqueue_dma source(%arg5 : memref<512x1024xbf16, #tpu.memory_space<any>>) target(%arg13 : memref<512x1024xbf16, #tpu.memory_space<vmem>>) target_semaphore(%5 : memref<!tpu.dma_semaphore, #tpu.memory_space<semaphore_mem>>)
    %c3_i32 = arith.constant 3 : i32
    %6 = tpu.memref_slice %arg18[%c3_i32] : memref<7x!tpu.dma_semaphore, #tpu.memory_space<semaphore_mem>> -> memref<1x!tpu.dma_semaphore, #tpu.memory_space<semaphore_mem>>
    %7 = tpu.memref_squeeze %6 : memref<1x!tpu.dma_semaphore, #tpu.memory_space<semaphore_mem>> -> memref<!tpu.dma_semaphore, #tpu.memory_space<semaphore_mem>>
    tpu.enqueue_dma source(%arg6 : memref<1024x512xbf16, #tpu.memory_space<any>>) target(%arg14 : memref<1024x512xbf16, #tpu.memory_space<vmem>>) target_semaphore(%7 : memref<!tpu.dma_semaphore, #tpu.memory_space<semaphore_mem>>)
    %c4_i32 = arith.constant 4 : i32
    %8 = tpu.memref_slice %arg18[%c4_i32] : memref<7x!tpu.dma_semaphore, #tpu.memory_space<semaphore_mem>> -> memref<1x!tpu.dma_semaphore, #tpu.memory_space<semaphore_mem>>
    %9 = tpu.memref_squeeze %8 : memref<1x!tpu.dma_semaphore, #tpu.memory_space<semaphore_mem>> -> memref<!tpu.dma_semaphore, #tpu.memory_space<semaphore_mem>>
    tpu.enqueue_dma source(%arg7 : memref<512x256xbf16, #tpu.memory_space<any>>) target(%arg15 : memref<512x256xbf16, #tpu.memory_space<vmem>>) target_semaphore(%9 : memref<!tpu.dma_semaphore, #tpu.memory_space<semaphore_mem>>)
    %c5_i32 = arith.constant 5 : i32
    %10 = tpu.memref_slice %arg18[%c5_i32] : memref<7x!tpu.dma_semaphore, #tpu.memory_space<semaphore_mem>> -> memref<1x!tpu.dma_semaphore, #tpu.memory_space<semaphore_mem>>
    %11 = tpu.memref_squeeze %10 : memref<1x!tpu.dma_semaphore, #tpu.memory_space<semaphore_mem>> -> memref<!tpu.dma_semaphore, #tpu.memory_space<semaphore_mem>>
    tpu.enqueue_dma source(%arg8 : memref<256x120xbf16, #tpu.memory_space<any>>) target(%arg16 : memref<256x120xbf16, #tpu.memory_space<vmem>>) target_semaphore(%11 : memref<!tpu.dma_semaphore, #tpu.memory_space<semaphore_mem>>)
    %c6_i32 = arith.constant 6 : i32
    %12 = tpu.memref_slice %arg18[%c6_i32] : memref<7x!tpu.dma_semaphore, #tpu.memory_space<semaphore_mem>> -> memref<1x!tpu.dma_semaphore, #tpu.memory_space<semaphore_mem>>
    %13 = tpu.memref_squeeze %12 : memref<1x!tpu.dma_semaphore, #tpu.memory_space<semaphore_mem>> -> memref<!tpu.dma_semaphore, #tpu.memory_space<semaphore_mem>>
    tpu.enqueue_dma source(%arg9 : memref<120x2xbf16, #tpu.memory_space<any>>) target(%arg17 : memref<120x2xbf16, #tpu.memory_space<vmem>>) target_semaphore(%13 : memref<!tpu.dma_semaphore, #tpu.memory_space<semaphore_mem>>)
    %c0 = arith.constant 0 : index
    %c0_0 = arith.constant 0 : index
    %14 = vector.load %arg1[%c0, %c0_0] : memref<8x120xf32, #tpu.memory_space<vmem>>, vector<8x120xf32>
    %c0_i32_1 = arith.constant 0 : i32
    %15 = tpu.memref_slice %arg18[%c0_i32_1] : memref<7x!tpu.dma_semaphore, #tpu.memory_space<semaphore_mem>> -> memref<1x!tpu.dma_semaphore, #tpu.memory_space<semaphore_mem>>
    %16 = tpu.memref_squeeze %15 : memref<1x!tpu.dma_semaphore, #tpu.memory_space<semaphore_mem>> -> memref<!tpu.dma_semaphore, #tpu.memory_space<semaphore_mem>>
    tpu.wait_dma2 semaphore(%16 : memref<!tpu.dma_semaphore, #tpu.memory_space<semaphore_mem>>) src(%arg3 : memref<120x256xbf16, #tpu.memory_space<any>>) dst(%arg11 : memref<120x256xbf16, #tpu.memory_space<vmem>>)
    %c0_2 = arith.constant 0 : index
    %c0_3 = arith.constant 0 : index
    %17 = vector.load %arg11[%c0_2, %c0_3] : memref<120x256xbf16, #tpu.memory_space<vmem>>, vector<120x256xbf16>
    %18 = arith.truncf %14 : vector<8x120xf32> to vector<8x120xbf16>
    %cst = arith.constant dense<0.000000e+00> : vector<8x256xf32>
    %19 = tpu.matmul %18, %17, %cst {dimension_numbers = #tpu.dot_dimension_numbers<[1], [0], [0], [1], [0, 0, 1, 1], [], []>} : vector<8x120xbf16>, vector<120x256xbf16>, vector<8x256xf32> -> vector<8x256xf32>
    %cst_4 = arith.constant dense<0.000000e+00> : vector<256xf32>
    %20 = vector.multi_reduction <add>, %19, %cst_4 [0] : vector<8x256xf32> to vector<256xf32>
    %21 = vector.shape_cast %20 : vector<256xf32> to vector<1x256xf32>
    %cst_5 = arith.constant 8.000000e+00 : f32
    %22 = vector.broadcast %cst_5 : f32 to vector<1x256xf32>
    %23 = arith.divf %21, %22 : vector<1x256xf32>
    %24 = vector.broadcast %23 : vector<1x256xf32> to vector<8x256xf32>
    %25 = arith.subf %19, %24 : vector<8x256xf32>
    %26 = arith.mulf %25, %25 : vector<8x256xf32>
    %cst_6 = arith.constant dense<0.000000e+00> : vector<256xf32>
    %27 = vector.multi_reduction <add>, %26, %cst_6 [0] : vector<8x256xf32> to vector<256xf32>
    %28 = vector.shape_cast %27 : vector<256xf32> to vector<1x256xf32>
    %cst_7 = arith.constant 8.000000e+00 : f32
    %29 = vector.broadcast %cst_7 : f32 to vector<1x256xf32>
    %30 = arith.divf %28, %29 : vector<1x256xf32>
    %c0_8 = arith.constant 0 : index
    %c0_9 = arith.constant 0 : index
    %31 = vector.load %arg2[%c0_8, %c0_9] : memref<13x1024xf32, #tpu.memory_space<vmem>>, vector<1x256xf32>
    %c1 = arith.constant 1 : index
    %c0_10 = arith.constant 0 : index
    %32 = vector.load %arg2[%c1, %c0_10] : memref<13x1024xf32, #tpu.memory_space<vmem>>, vector<1x256xf32>
    %33 = vector.broadcast %23 : vector<1x256xf32> to vector<8x256xf32>
    %34 = arith.subf %19, %33 : vector<8x256xf32>
    %cst_11 = arith.constant 9.99999974E-6 : f32
    %35 = vector.broadcast %cst_11 : f32 to vector<1x256xf32>
    %36 = arith.addf %30, %35 : vector<1x256xf32>
    %37 = math.rsqrt %36 : vector<1x256xf32>
    %38 = vector.broadcast %37 : vector<1x256xf32> to vector<8x256xf32>
    %39 = arith.mulf %34, %38 : vector<8x256xf32>
    %40 = vector.broadcast %31 : vector<1x256xf32> to vector<8x256xf32>
    %41 = arith.mulf %39, %40 : vector<8x256xf32>
    %42 = vector.broadcast %32 : vector<1x256xf32> to vector<8x256xf32>
    %43 = arith.addf %41, %42 : vector<8x256xf32>
    %cst_12 = arith.constant 0.000000e+00 : f32
    %44 = vector.broadcast %cst_12 : f32 to vector<8x256xf32>
    %45 = arith.maximumf %43, %44 : vector<8x256xf32>
    %c1_i32_13 = arith.constant 1 : i32
    %46 = tpu.memref_slice %arg18[%c1_i32_13] : memref<7x!tpu.dma_semaphore, #tpu.memory_space<semaphore_mem>> -> memref<1x!tpu.dma_semaphore, #tpu.memory_space<semaphore_mem>>
    %47 = tpu.memref_squeeze %46 : memref<1x!tpu.dma_semaphore, #tpu.memory_space<semaphore_mem>> -> memref<!tpu.dma_semaphore, #tpu.memory_space<semaphore_mem>>
    tpu.wait_dma2 semaphore(%47 : memref<!tpu.dma_semaphore, #tpu.memory_space<semaphore_mem>>) src(%arg4 : memref<256x512xbf16, #tpu.memory_space<any>>) dst(%arg12 : memref<256x512xbf16, #tpu.memory_space<vmem>>)
    %c0_14 = arith.constant 0 : index
    %c0_15 = arith.constant 0 : index
    %48 = vector.load %arg12[%c0_14, %c0_15] : memref<256x512xbf16, #tpu.memory_space<vmem>>, vector<256x512xbf16>
    %49 = arith.truncf %45 : vector<8x256xf32> to vector<8x256xbf16>
    %cst_16 = arith.constant dense<0.000000e+00> : vector<8x512xf32>
    %50 = tpu.matmul %49, %48, %cst_16 {dimension_numbers = #tpu.dot_dimension_numbers<[1], [0], [0], [1], [0, 0, 1, 1], [], []>} : vector<8x256xbf16>, vector<256x512xbf16>, vector<8x512xf32> -> vector<8x512xf32>
    %cst_17 = arith.constant dense<0.000000e+00> : vector<512xf32>
    %51 = vector.multi_reduction <add>, %50, %cst_17 [0] : vector<8x512xf32> to vector<512xf32>
    %52 = vector.shape_cast %51 : vector<512xf32> to vector<1x512xf32>
    %cst_18 = arith.constant 8.000000e+00 : f32
    %53 = vector.broadcast %cst_18 : f32 to vector<1x512xf32>
    %54 = arith.divf %52, %53 : vector<1x512xf32>
    %55 = vector.broadcast %54 : vector<1x512xf32> to vector<8x512xf32>
    %56 = arith.subf %50, %55 : vector<8x512xf32>
    %57 = arith.mulf %56, %56 : vector<8x512xf32>
    %cst_19 = arith.constant dense<0.000000e+00> : vector<512xf32>
    %58 = vector.multi_reduction <add>, %57, %cst_19 [0] : vector<8x512xf32> to vector<512xf32>
    %59 = vector.shape_cast %58 : vector<512xf32> to vector<1x512xf32>
    %cst_20 = arith.constant 8.000000e+00 : f32
    %60 = vector.broadcast %cst_20 : f32 to vector<1x512xf32>
    %61 = arith.divf %59, %60 : vector<1x512xf32>
    %c2 = arith.constant 2 : index
    %c0_21 = arith.constant 0 : index
    %62 = vector.load %arg2[%c2, %c0_21] : memref<13x1024xf32, #tpu.memory_space<vmem>>, vector<1x512xf32>
    %c3 = arith.constant 3 : index
    %c0_22 = arith.constant 0 : index
    %63 = vector.load %arg2[%c3, %c0_22] : memref<13x1024xf32, #tpu.memory_space<vmem>>, vector<1x512xf32>
    %64 = vector.broadcast %54 : vector<1x512xf32> to vector<8x512xf32>
    %65 = arith.subf %50, %64 : vector<8x512xf32>
    %cst_23 = arith.constant 9.99999974E-6 : f32
    %66 = vector.broadcast %cst_23 : f32 to vector<1x512xf32>
    %67 = arith.addf %61, %66 : vector<1x512xf32>
    %68 = math.rsqrt %67 : vector<1x512xf32>
    %69 = vector.broadcast %68 : vector<1x512xf32> to vector<8x512xf32>
    %70 = arith.mulf %65, %69 : vector<8x512xf32>
    %71 = vector.broadcast %62 : vector<1x512xf32> to vector<8x512xf32>
    %72 = arith.mulf %70, %71 : vector<8x512xf32>
    %73 = vector.broadcast %63 : vector<1x512xf32> to vector<8x512xf32>
    %74 = arith.addf %72, %73 : vector<8x512xf32>
    %cst_24 = arith.constant 0.000000e+00 : f32
    %75 = vector.broadcast %cst_24 : f32 to vector<8x512xf32>
    %76 = arith.maximumf %74, %75 : vector<8x512xf32>
    %c2_i32_25 = arith.constant 2 : i32
    %77 = tpu.memref_slice %arg18[%c2_i32_25] : memref<7x!tpu.dma_semaphore, #tpu.memory_space<semaphore_mem>> -> memref<1x!tpu.dma_semaphore, #tpu.memory_space<semaphore_mem>>
    %78 = tpu.memref_squeeze %77 : memref<1x!tpu.dma_semaphore, #tpu.memory_space<semaphore_mem>> -> memref<!tpu.dma_semaphore, #tpu.memory_space<semaphore_mem>>
    tpu.wait_dma2 semaphore(%78 : memref<!tpu.dma_semaphore, #tpu.memory_space<semaphore_mem>>) src(%arg5 : memref<512x1024xbf16, #tpu.memory_space<any>>) dst(%arg13 : memref<512x1024xbf16, #tpu.memory_space<vmem>>)
    %c0_26 = arith.constant 0 : index
    %c0_27 = arith.constant 0 : index
    %79 = vector.load %arg13[%c0_26, %c0_27] : memref<512x1024xbf16, #tpu.memory_space<vmem>>, vector<512x1024xbf16>
    %80 = arith.truncf %76 : vector<8x512xf32> to vector<8x512xbf16>
    %cst_28 = arith.constant dense<0.000000e+00> : vector<8x1024xf32>
    %81 = tpu.matmul %80, %79, %cst_28 {dimension_numbers = #tpu.dot_dimension_numbers<[1], [0], [0], [1], [0, 0, 1, 1], [], []>} : vector<8x512xbf16>, vector<512x1024xbf16>, vector<8x1024xf32> -> vector<8x1024xf32>
    %cst_29 = arith.constant dense<0.000000e+00> : vector<1024xf32>
    %82 = vector.multi_reduction <add>, %81, %cst_29 [0] : vector<8x1024xf32> to vector<1024xf32>
    %83 = vector.shape_cast %82 : vector<1024xf32> to vector<1x1024xf32>
    %cst_30 = arith.constant 8.000000e+00 : f32
    %84 = vector.broadcast %cst_30 : f32 to vector<1x1024xf32>
    %85 = arith.divf %83, %84 : vector<1x1024xf32>
    %86 = vector.broadcast %85 : vector<1x1024xf32> to vector<8x1024xf32>
    %87 = arith.subf %81, %86 : vector<8x1024xf32>
    %88 = arith.mulf %87, %87 : vector<8x1024xf32>
    %cst_31 = arith.constant dense<0.000000e+00> : vector<1024xf32>
    %89 = vector.multi_reduction <add>, %88, %cst_31 [0] : vector<8x1024xf32> to vector<1024xf32>
    %90 = vector.shape_cast %89 : vector<1024xf32> to vector<1x1024xf32>
    %cst_32 = arith.constant 8.000000e+00 : f32
    %91 = vector.broadcast %cst_32 : f32 to vector<1x1024xf32>
    %92 = arith.divf %90, %91 : vector<1x1024xf32>
    %c4 = arith.constant 4 : index
    %c0_33 = arith.constant 0 : index
    %93 = vector.load %arg2[%c4, %c0_33] : memref<13x1024xf32, #tpu.memory_space<vmem>>, vector<1x1024xf32>
    %c5 = arith.constant 5 : index
    %c0_34 = arith.constant 0 : index
    %94 = vector.load %arg2[%c5, %c0_34] : memref<13x1024xf32, #tpu.memory_space<vmem>>, vector<1x1024xf32>
    %95 = vector.broadcast %85 : vector<1x1024xf32> to vector<8x1024xf32>
    %96 = arith.subf %81, %95 : vector<8x1024xf32>
    %cst_35 = arith.constant 9.99999974E-6 : f32
    %97 = vector.broadcast %cst_35 : f32 to vector<1x1024xf32>
    %98 = arith.addf %92, %97 : vector<1x1024xf32>
    %99 = math.rsqrt %98 : vector<1x1024xf32>
    %100 = vector.broadcast %99 : vector<1x1024xf32> to vector<8x1024xf32>
    %101 = arith.mulf %96, %100 : vector<8x1024xf32>
    %102 = vector.broadcast %93 : vector<1x1024xf32> to vector<8x1024xf32>
    %103 = arith.mulf %101, %102 : vector<8x1024xf32>
    %104 = vector.broadcast %94 : vector<1x1024xf32> to vector<8x1024xf32>
    %105 = arith.addf %103, %104 : vector<8x1024xf32>
    %cst_36 = arith.constant 0.000000e+00 : f32
    %106 = vector.broadcast %cst_36 : f32 to vector<8x1024xf32>
    %107 = arith.maximumf %105, %106 : vector<8x1024xf32>
    %c3_i32_37 = arith.constant 3 : i32
    %108 = tpu.memref_slice %arg18[%c3_i32_37] : memref<7x!tpu.dma_semaphore, #tpu.memory_space<semaphore_mem>> -> memref<1x!tpu.dma_semaphore, #tpu.memory_space<semaphore_mem>>
    %109 = tpu.memref_squeeze %108 : memref<1x!tpu.dma_semaphore, #tpu.memory_space<semaphore_mem>> -> memref<!tpu.dma_semaphore, #tpu.memory_space<semaphore_mem>>
    tpu.wait_dma2 semaphore(%109 : memref<!tpu.dma_semaphore, #tpu.memory_space<semaphore_mem>>) src(%arg6 : memref<1024x512xbf16, #tpu.memory_space<any>>) dst(%arg14 : memref<1024x512xbf16, #tpu.memory_space<vmem>>)
    %c0_38 = arith.constant 0 : index
    %c0_39 = arith.constant 0 : index
    %110 = vector.load %arg14[%c0_38, %c0_39] : memref<1024x512xbf16, #tpu.memory_space<vmem>>, vector<1024x512xbf16>
    %111 = arith.truncf %107 : vector<8x1024xf32> to vector<8x1024xbf16>
    %cst_40 = arith.constant dense<0.000000e+00> : vector<8x512xf32>
    %112 = tpu.matmul %111, %110, %cst_40 {dimension_numbers = #tpu.dot_dimension_numbers<[1], [0], [0], [1], [0, 0, 1, 1], [], []>} : vector<8x1024xbf16>, vector<1024x512xbf16>, vector<8x512xf32> -> vector<8x512xf32>
    %cst_41 = arith.constant dense<0.000000e+00> : vector<512xf32>
    %113 = vector.multi_reduction <add>, %112, %cst_41 [0] : vector<8x512xf32> to vector<512xf32>
    %114 = vector.shape_cast %113 : vector<512xf32> to vector<1x512xf32>
    %cst_42 = arith.constant 8.000000e+00 : f32
    %115 = vector.broadcast %cst_42 : f32 to vector<1x512xf32>
    %116 = arith.divf %114, %115 : vector<1x512xf32>
    %117 = vector.broadcast %116 : vector<1x512xf32> to vector<8x512xf32>
    %118 = arith.subf %112, %117 : vector<8x512xf32>
    %119 = arith.mulf %118, %118 : vector<8x512xf32>
    %cst_43 = arith.constant dense<0.000000e+00> : vector<512xf32>
    %120 = vector.multi_reduction <add>, %119, %cst_43 [0] : vector<8x512xf32> to vector<512xf32>
    %121 = vector.shape_cast %120 : vector<512xf32> to vector<1x512xf32>
    %cst_44 = arith.constant 8.000000e+00 : f32
    %122 = vector.broadcast %cst_44 : f32 to vector<1x512xf32>
    %123 = arith.divf %121, %122 : vector<1x512xf32>
    %c6 = arith.constant 6 : index
    %c0_45 = arith.constant 0 : index
    %124 = vector.load %arg2[%c6, %c0_45] : memref<13x1024xf32, #tpu.memory_space<vmem>>, vector<1x512xf32>
    %c7 = arith.constant 7 : index
    %c0_46 = arith.constant 0 : index
    %125 = vector.load %arg2[%c7, %c0_46] : memref<13x1024xf32, #tpu.memory_space<vmem>>, vector<1x512xf32>
    %126 = vector.broadcast %116 : vector<1x512xf32> to vector<8x512xf32>
    %127 = arith.subf %112, %126 : vector<8x512xf32>
    %cst_47 = arith.constant 9.99999974E-6 : f32
    %128 = vector.broadcast %cst_47 : f32 to vector<1x512xf32>
    %129 = arith.addf %123, %128 : vector<1x512xf32>
    %130 = math.rsqrt %129 : vector<1x512xf32>
    %131 = vector.broadcast %130 : vector<1x512xf32> to vector<8x512xf32>
    %132 = arith.mulf %127, %131 : vector<8x512xf32>
    %133 = vector.broadcast %124 : vector<1x512xf32> to vector<8x512xf32>
    %134 = arith.mulf %132, %133 : vector<8x512xf32>
    %135 = vector.broadcast %125 : vector<1x512xf32> to vector<8x512xf32>
    %136 = arith.addf %134, %135 : vector<8x512xf32>
    %cst_48 = arith.constant 0.000000e+00 : f32
    %137 = vector.broadcast %cst_48 : f32 to vector<8x512xf32>
    %138 = arith.maximumf %136, %137 : vector<8x512xf32>
    %c4_i32_49 = arith.constant 4 : i32
    %139 = tpu.memref_slice %arg18[%c4_i32_49] : memref<7x!tpu.dma_semaphore, #tpu.memory_space<semaphore_mem>> -> memref<1x!tpu.dma_semaphore, #tpu.memory_space<semaphore_mem>>
    %140 = tpu.memref_squeeze %139 : memref<1x!tpu.dma_semaphore, #tpu.memory_space<semaphore_mem>> -> memref<!tpu.dma_semaphore, #tpu.memory_space<semaphore_mem>>
    tpu.wait_dma2 semaphore(%140 : memref<!tpu.dma_semaphore, #tpu.memory_space<semaphore_mem>>) src(%arg7 : memref<512x256xbf16, #tpu.memory_space<any>>) dst(%arg15 : memref<512x256xbf16, #tpu.memory_space<vmem>>)
    %c0_50 = arith.constant 0 : index
    %c0_51 = arith.constant 0 : index
    %141 = vector.load %arg15[%c0_50, %c0_51] : memref<512x256xbf16, #tpu.memory_space<vmem>>, vector<512x256xbf16>
    %142 = arith.truncf %138 : vector<8x512xf32> to vector<8x512xbf16>
    %cst_52 = arith.constant dense<0.000000e+00> : vector<8x256xf32>
    %143 = tpu.matmul %142, %141, %cst_52 {dimension_numbers = #tpu.dot_dimension_numbers<[1], [0], [0], [1], [0, 0, 1, 1], [], []>} : vector<8x512xbf16>, vector<512x256xbf16>, vector<8x256xf32> -> vector<8x256xf32>
    %cst_53 = arith.constant dense<0.000000e+00> : vector<256xf32>
    %144 = vector.multi_reduction <add>, %143, %cst_53 [0] : vector<8x256xf32> to vector<256xf32>
    %145 = vector.shape_cast %144 : vector<256xf32> to vector<1x256xf32>
    %cst_54 = arith.constant 8.000000e+00 : f32
    %146 = vector.broadcast %cst_54 : f32 to vector<1x256xf32>
    %147 = arith.divf %145, %146 : vector<1x256xf32>
    %148 = vector.broadcast %147 : vector<1x256xf32> to vector<8x256xf32>
    %149 = arith.subf %143, %148 : vector<8x256xf32>
    %150 = arith.mulf %149, %149 : vector<8x256xf32>
    %cst_55 = arith.constant dense<0.000000e+00> : vector<256xf32>
    %151 = vector.multi_reduction <add>, %150, %cst_55 [0] : vector<8x256xf32> to vector<256xf32>
    %152 = vector.shape_cast %151 : vector<256xf32> to vector<1x256xf32>
    %cst_56 = arith.constant 8.000000e+00 : f32
    %153 = vector.broadcast %cst_56 : f32 to vector<1x256xf32>
    %154 = arith.divf %152, %153 : vector<1x256xf32>
    %c8 = arith.constant 8 : index
    %c0_57 = arith.constant 0 : index
    %155 = vector.load %arg2[%c8, %c0_57] : memref<13x1024xf32, #tpu.memory_space<vmem>>, vector<1x256xf32>
    %c9 = arith.constant 9 : index
    %c0_58 = arith.constant 0 : index
    %156 = vector.load %arg2[%c9, %c0_58] : memref<13x1024xf32, #tpu.memory_space<vmem>>, vector<1x256xf32>
    %157 = vector.broadcast %147 : vector<1x256xf32> to vector<8x256xf32>
    %158 = arith.subf %143, %157 : vector<8x256xf32>
    %cst_59 = arith.constant 9.99999974E-6 : f32
    %159 = vector.broadcast %cst_59 : f32 to vector<1x256xf32>
    %160 = arith.addf %154, %159 : vector<1x256xf32>
    %161 = math.rsqrt %160 : vector<1x256xf32>
    %162 = vector.broadcast %161 : vector<1x256xf32> to vector<8x256xf32>
    %163 = arith.mulf %158, %162 : vector<8x256xf32>
    %164 = vector.broadcast %155 : vector<1x256xf32> to vector<8x256xf32>
    %165 = arith.mulf %163, %164 : vector<8x256xf32>
    %166 = vector.broadcast %156 : vector<1x256xf32> to vector<8x256xf32>
    %167 = arith.addf %165, %166 : vector<8x256xf32>
    %cst_60 = arith.constant 0.000000e+00 : f32
    %168 = vector.broadcast %cst_60 : f32 to vector<8x256xf32>
    %169 = arith.maximumf %167, %168 : vector<8x256xf32>
    %c5_i32_61 = arith.constant 5 : i32
    %170 = tpu.memref_slice %arg18[%c5_i32_61] : memref<7x!tpu.dma_semaphore, #tpu.memory_space<semaphore_mem>> -> memref<1x!tpu.dma_semaphore, #tpu.memory_space<semaphore_mem>>
    %171 = tpu.memref_squeeze %170 : memref<1x!tpu.dma_semaphore, #tpu.memory_space<semaphore_mem>> -> memref<!tpu.dma_semaphore, #tpu.memory_space<semaphore_mem>>
    tpu.wait_dma2 semaphore(%171 : memref<!tpu.dma_semaphore, #tpu.memory_space<semaphore_mem>>) src(%arg8 : memref<256x120xbf16, #tpu.memory_space<any>>) dst(%arg16 : memref<256x120xbf16, #tpu.memory_space<vmem>>)
    %c0_62 = arith.constant 0 : index
    %c0_63 = arith.constant 0 : index
    %172 = vector.load %arg16[%c0_62, %c0_63] : memref<256x120xbf16, #tpu.memory_space<vmem>>, vector<256x120xbf16>
    %173 = arith.truncf %169 : vector<8x256xf32> to vector<8x256xbf16>
    %cst_64 = arith.constant dense<0.000000e+00> : vector<8x120xf32>
    %174 = tpu.matmul %173, %172, %cst_64 {dimension_numbers = #tpu.dot_dimension_numbers<[1], [0], [0], [1], [0, 0, 1, 1], [], []>} : vector<8x256xbf16>, vector<256x120xbf16>, vector<8x120xf32> -> vector<8x120xf32>
    %cst_65 = arith.constant dense<0.000000e+00> : vector<120xf32>
    %175 = vector.multi_reduction <add>, %174, %cst_65 [0] : vector<8x120xf32> to vector<120xf32>
    %176 = vector.shape_cast %175 : vector<120xf32> to vector<1x120xf32>
    %cst_66 = arith.constant 8.000000e+00 : f32
    %177 = vector.broadcast %cst_66 : f32 to vector<1x120xf32>
    %178 = arith.divf %176, %177 : vector<1x120xf32>
    %179 = vector.broadcast %178 : vector<1x120xf32> to vector<8x120xf32>
    %180 = arith.subf %174, %179 : vector<8x120xf32>
    %181 = arith.mulf %180, %180 : vector<8x120xf32>
    %cst_67 = arith.constant dense<0.000000e+00> : vector<120xf32>
    %182 = vector.multi_reduction <add>, %181, %cst_67 [0] : vector<8x120xf32> to vector<120xf32>
    %183 = vector.shape_cast %182 : vector<120xf32> to vector<1x120xf32>
    %cst_68 = arith.constant 8.000000e+00 : f32
    %184 = vector.broadcast %cst_68 : f32 to vector<1x120xf32>
    %185 = arith.divf %183, %184 : vector<1x120xf32>
    %c10 = arith.constant 10 : index
    %c0_69 = arith.constant 0 : index
    %186 = vector.load %arg2[%c10, %c0_69] : memref<13x1024xf32, #tpu.memory_space<vmem>>, vector<1x120xf32>
    %c11 = arith.constant 11 : index
    %c0_70 = arith.constant 0 : index
    %187 = vector.load %arg2[%c11, %c0_70] : memref<13x1024xf32, #tpu.memory_space<vmem>>, vector<1x120xf32>
    %188 = vector.broadcast %178 : vector<1x120xf32> to vector<8x120xf32>
    %189 = arith.subf %174, %188 : vector<8x120xf32>
    %cst_71 = arith.constant 9.99999974E-6 : f32
    %190 = vector.broadcast %cst_71 : f32 to vector<1x120xf32>
    %191 = arith.addf %185, %190 : vector<1x120xf32>
    %192 = math.rsqrt %191 : vector<1x120xf32>
    %193 = vector.broadcast %192 : vector<1x120xf32> to vector<8x120xf32>
    %194 = arith.mulf %189, %193 : vector<8x120xf32>
    %195 = vector.broadcast %186 : vector<1x120xf32> to vector<8x120xf32>
    %196 = arith.mulf %194, %195 : vector<8x120xf32>
    %197 = vector.broadcast %187 : vector<1x120xf32> to vector<8x120xf32>
    %198 = arith.addf %196, %197 : vector<8x120xf32>
    %cst_72 = arith.constant 0.000000e+00 : f32
    %199 = vector.broadcast %cst_72 : f32 to vector<8x120xf32>
    %200 = arith.maximumf %198, %199 : vector<8x120xf32>
    %c6_i32_73 = arith.constant 6 : i32
    %201 = tpu.memref_slice %arg18[%c6_i32_73] : memref<7x!tpu.dma_semaphore, #tpu.memory_space<semaphore_mem>> -> memref<1x!tpu.dma_semaphore, #tpu.memory_space<semaphore_mem>>
    %202 = tpu.memref_squeeze %201 : memref<1x!tpu.dma_semaphore, #tpu.memory_space<semaphore_mem>> -> memref<!tpu.dma_semaphore, #tpu.memory_space<semaphore_mem>>
    tpu.wait_dma2 semaphore(%202 : memref<!tpu.dma_semaphore, #tpu.memory_space<semaphore_mem>>) src(%arg9 : memref<120x2xbf16, #tpu.memory_space<any>>) dst(%arg17 : memref<120x2xbf16, #tpu.memory_space<vmem>>)
    %c0_74 = arith.constant 0 : index
    %c0_75 = arith.constant 0 : index
    %203 = vector.load %arg17[%c0_74, %c0_75] : memref<120x2xbf16, #tpu.memory_space<vmem>>, vector<120x2xbf16>
    %204 = arith.truncf %200 : vector<8x120xf32> to vector<8x120xbf16>
    %cst_76 = arith.constant dense<0.000000e+00> : vector<8x2xf32>
    %205 = tpu.matmul %204, %203, %cst_76 {dimension_numbers = #tpu.dot_dimension_numbers<[1], [0], [0], [1], [0, 0, 1, 1], [], []>} : vector<8x120xbf16>, vector<120x2xbf16>, vector<8x2xf32> -> vector<8x2xf32>
    %c12 = arith.constant 12 : index
    %c0_77 = arith.constant 0 : index
    %206 = vector.load %arg2[%c12, %c0_77] : memref<13x1024xf32, #tpu.memory_space<vmem>>, vector<1x2xf32>
    %207 = vector.broadcast %206 : vector<1x2xf32> to vector<8x2xf32>
    %208 = arith.addf %205, %207 : vector<8x2xf32>
    %c0_78 = arith.constant 0 : index
    %c0_79 = arith.constant 0 : index
    %209 = vector.load %arg10[%c0_78, %c0_79] : memref<8x2xf32, #tpu.memory_space<vmem>>, vector<8x2xf32>
    tpu.vector_store %arg10[%c0_78, %c0_79], %208 {strides = array<i32>} : memref<8x2xf32, #tpu.memory_space<vmem>>, vector<8x2xf32>,
    return
  }
  func.func @transform_0(%arg0: i32) -> (i32, i32) {
    %c0_i32 = arith.constant 0 : i32
    %c0_i32_0 = arith.constant 0 : i32
    %c0_i32_1 = arith.constant 0 : i32
    return %c0_i32, %c0_i32_0 : i32, i32
  }
  func.func @transform_1(%arg0: i32) -> (i32, i32) {
    %c0_i32 = arith.constant 0 : i32
    %c0_i32_0 = arith.constant 0 : i32
    %c0_i32_1 = arith.constant 0 : i32
    return %c0_i32, %c0_i32_0 : i32, i32
  }
  func.func @transform_9(%arg0: i32) -> (i32, i32) {
    %c0_i32 = arith.constant 0 : i32
    %c0_i32_0 = arith.constant 0 : i32
    %c0_i32_1 = arith.constant 0 : i32
    return %c0_i32, %c0_i32_0 : i32, i32
  }
}

</mosaic_0001>

<llo_original>
// kernel: tpu_custom_call.1
$region0: #{tpu_custom_call.1}
  #allocation0 [shape = 'u32[]', space=smem, size = 0x4, offset = 0x4, fixed_abs, tag = 'smem constant byte address 0x4 - core index']
  #allocation1 [shape = 'u32[144,128]{1,0:T(1,128)}', space=vmem, size = 0x12000, scoped, tag = 'internal scratch']
  #allocation2 [shape = 'bf16[120,256]{1,0:T(8,128)(2,1)}', space=vmem, size = 0xf000, scoped, tag = 'scratch operand']
  #allocation3 [shape = 'bf16[256,512]{1,0:T(8,128)(2,1)}', space=vmem, size = 0x40000, scoped, tag = 'scratch operand']
  #allocation4 [shape = 'bf16[512,1024]{1,0:T(8,128)(2,1)}', space=vmem, size = 0x100000, scoped, tag = 'scratch operand']
  #allocation5 [shape = 'bf16[1024,512]{1,0:T(8,128)(2,1)}', space=vmem, size = 0x100000, scoped, tag = 'scratch operand']
  #allocation6 [shape = 'bf16[512,256]{1,0:T(8,128)(2,1)}', space=vmem, size = 0x40000, scoped, tag = 'scratch operand']
  #allocation7 [shape = 'bf16[256,120]{1,0:T(8,128)(2,1)}', space=vmem, size = 0x10000, scoped, tag = 'scratch operand']
  #allocation8 [shape = 'bf16[120,2]{1,0:T(8,128)(2,1)}', space=vmem, size = 0x7800, scoped, tag = 'scratch operand']
  #allocation9 [shape = 's32[7]{0}', space=sflag, size = 0x1c, scoped, tag = 'scratch operand']
  #allocation10 [shape = 's32[]', space=sflag, size = 0x4, offset = 0, fixed_abs, tag = 'sflag constant byte address 0x0 - dummy sync flag']
  #allocation11 [shape = 's32[]', space=sflag, size = 0x4, offset = 0, fixed_abs, tag = 'sflag constant byte address 0x0 - dummy sync flag']
  #allocation12 [shape = 's32[]', space=sflag, size = 0x4, offset = 0, fixed_abs, tag = 'sflag constant byte address 0x0 - dummy sync flag']
  #allocation13 [shape = 'u32[]', space=smem, size = 0x4, offset = 0x44, fixed_abs, tag = 'smem constant byte address 0x44 - assertion arg 0']
  #allocation14 [shape = 'u32[]', space=smem, size = 0x4, offset = 0x48, fixed_abs, tag = 'smem constant byte address 0x48 - assertion arg 1']
  #allocation15 [shape = 's32[]', space=sflag, size = 0x4, offset = 0, fixed_abs, tag = 'sflag constant byte address 0x0 - dummy sync flag']
  #allocation16 [shape = 's32[]', space=sflag, size = 0x4, offset = 0, fixed_abs, tag = 'sflag constant byte address 0x0 - dummy sync flag']
  #allocation17 [shape = 's32[]', space=sflag, size = 0x4, offset = 0, fixed_abs, tag = 'sflag constant byte address 0x0 - dummy sync flag']
  #allocation18 [shape = 's32[]', space=sflag, size = 0x4, offset = 0, fixed_abs, tag = 'sflag constant byte address 0x0 - dummy sync flag']
  #allocation19 [shape = 's32[]', space=sflag, size = 0x4, offset = 0, fixed_abs, tag = 'sflag constant byte address 0x0 - dummy sync flag']
  #allocation20 [shape = 's32[]', space=sflag, size = 0x4, offset = 0, fixed_abs, tag = 'sflag constant byte address 0x0 - dummy sync flag']
  #allocation21 [shape = 's32[]', space=sflag, size = 0x4, offset = 0, fixed_abs, tag = 'sflag constant byte address 0x0 - dummy sync flag']
  #allocation22 [shape = 's32[]', space=sflag, size = 0x4, offset = 0, fixed_abs, tag = 'sflag constant byte address 0x0 - dummy sync flag']
  %s0 = inlined_call_operand.vmem [shape: f32[8,120], index: 0, kind: input, shape index: {}]
  %s1 = inlined_call_operand.vmem [shape: f32[13,1024], index: 1, kind: input, shape index: {}]
  %s2 = inlined_call_operand.vmem [shape: bf16[120,256], index: 2, kind: input, shape index: {}]
  %s3 = inlined_call_operand.hbm [shape: bf16[256,512], index: 3, kind: input, shape index: {}]
  %s4 = inlined_call_operand.hbm [shape: bf16[512,1024], index: 4, kind: input, shape index: {}]
  %s5 = inlined_call_operand.hbm [shape: bf16[1024,512], index: 5, kind: input, shape index: {}]
  %s6 = inlined_call_operand.hbm [shape: bf16[512,256], index: 6, kind: input, shape index: {}]
  %s7 = inlined_call_operand.vmem [shape: bf16[256,120], index: 7, kind: input, shape index: {}]
  %s8 = inlined_call_operand.vmem [shape: bf16[120,2], index: 8, kind: input, shape index: {}]
  %s9 = inlined_call_operand.vmem [shape: f32[8,2], index: 9, kind: output, shape index: {}]
  %s10 = sld [smem:[#allocation0]]
  $region139: #{tpu_custom_call.1} parent=0
    _
  %s12 = ssub.s32 1, %s10
  %s13 = scalar_select 0, %s12, %s10
  // Predicated region
  $region2: #{tpu_custom_call.1} parent=0 // pred_check
    _
  $region3: #{tpu_custom_call.1} parent=0 // pred_check_branch
    %15 = sbr.rel (0) target = $region5
  $region4: #{tpu_custom_call.1} parent=0 // pred_region
    _
  $region5: #{tpu_custom_call.1} parent=0 // pred_fallthru
    _
  // Predicated region
  $region6: #{tpu_custom_call.1} parent=0 // pred_check
    _
  $region7: #{tpu_custom_call.1} parent=0 // pred_check_branch
    %17 = sbr.rel (0) target = $region9
  $region8: #{tpu_custom_call.1} parent=0 // pred_region
    _
  $region9: #{tpu_custom_call.1} parent=0 // pred_fallthru
    _
  %p20 = scmp.lt.u32.totalorder 120, 8
  %p21 = pneg %p20
  // Predicated region
  $region10: #{tpu_custom_call.1} parent=0 // pred_check
    _
  $region11: #{tpu_custom_call.1} parent=0 // pred_check_branch
    %23 = sbr.rel (%p20) target = $region13
  $region12: #{tpu_custom_call.1} parent=0 // pred_region
    %s39 = sand.u32 120, 7
    %p40 = scmp.eq.s32.totalorder %s39, 0
    // Predicated region
    $region25: #{tpu_custom_call.1} parent=12 // pred_check
      %p41 = pneg %p40
    $region26: #{tpu_custom_call.1} parent=12 // pred_check_branch
      %43 = sbr.rel (%p41) target = $region28
    $region27: #{tpu_custom_call.1} parent=12 // pred_region
      loop: start=0, step=1, limit=1
      $region29: #{tpu_custom_call.1} parent=27 // loop_pre_header
        _
      $region30: #{tpu_custom_call.1} parent=27 // loop_header
        %s45 = sphi 0, %s49
        %p46 = scmp.ge.s32.totalorder %s45, 1
        %s50 = sphi %s2, %s2
        %s51 = sphi [#allocation2], [#allocation2]
      $region31: #{tpu_custom_call.1} parent=27 // loop_header_branch
        %48 = sbr.rel (%p46) target = $region35
      $region32: #{tpu_custom_call.1} parent=27 // loop_body
        %v52 = vld [vmem:[%s50] sm:$0xff]
        %53 = vst [vmem:[%s51] sm:$0xff] %v52
        %v54 = vld [vmem:[%s50 + $0x8] sm:$0xff]
        %55 = vst [vmem:[%s51 + $0x8] sm:$0xff] %v54
        %v56 = vld [vmem:[%s50 + $0x10] sm:$0xff]
        %57 = vst [vmem:[%s51 + $0x10] sm:$0xff] %v56
        %v58 = vld [vmem:[%s50 + $0x18] sm:$0xff]
        %59 = vst [vmem:[%s51 + $0x18] sm:$0xff] %v58
        %v60 = vld [vmem:[%s50 + $0x20] sm:$0xff]
        %61 = vst [vmem:[%s51 + $0x20] sm:$0xff] %v60
        %v62 = vld [vmem:[%s50 + $0x28] sm:$0xff]
        %63 = vst [vmem:[%s51 + $0x28] sm:$0xff] %v62
        %v64 = vld [vmem:[%s50 + $0x30] sm:$0xff]
        %65 = vst [vmem:[%s51 + $0x30] sm:$0xff] %v64
        %v66 = vld [vmem:[%s50 + $0x38] sm:$0xff]
        %67 = vst [vmem:[%s51 + $0x38] sm:$0xff] %v66
        %v68 = vld [vmem:[%s50 + $0x40] sm:$0xff]
        %69 = vst [vmem:[%s51 + $0x40] sm:$0xff] %v68
        %v70 = vld [vmem:[%s50 + $0x48] sm:$0xff]
        %71 = vst [vmem:[%s51 + $0x48] sm:$0xff] %v70
        %v72 = vld [vmem:[%s50 + $0x50] sm:$0xff]
        %73 = vst [vmem:[%s51 + $0x50] sm:$0xff] %v72
        %v74 = vld [vmem:[%s50 + $0x58] sm:$0xff]
        %75 = vst [vmem:[%s51 + $0x58] sm:$0xff] %v74
        %v76 = vld [vmem:[%s50 + $0x60] sm:$0xff]
        %77 = vst [vmem:[%s51 + $0x60] sm:$0xff] %v76
        %v78 = vld [vmem:[%s50 + $0x68] sm:$0xff]
        %79 = vst [vmem:[%s51 + $0x68] sm:$0xff] %v78
        %v80 = vld [vmem:[%s50 + $0x70] sm:$0xff]
        %81 = vst [vmem:[%s51 + $0x70] sm:$0xff] %v80
      $region33: #{tpu_custom_call.1} parent=27 // loop_footer
        %s49 = sadd.s32 1, %s45
      $region34: #{tpu_custom_call.1} parent=27 // loop_footer_branch
        %44 = sbr.rel target = $region30
      $region35: #{tpu_custom_call.1} parent=27 // loop_exit
        _
    $region28: #{tpu_custom_call.1} parent=12 // pred_fallthru
      _
    %p82 = pneg %p40
    // Predicated region
    $region36: #{tpu_custom_call.1} parent=12 // pred_check
      _
    $region37: #{tpu_custom_call.1} parent=12 // pred_check_branch
      %84 = sbr.rel (%p40) target = $region39
    $region38: #{tpu_custom_call.1} parent=12 // pred_region
      %s85 = sand.u32 120, 7
    $region39: #{tpu_custom_call.1} parent=12 // pred_fallthru
      _
  $region13: #{tpu_custom_call.1} parent=0 // pred_fallthru
    _
  // Predicated region
  $region14: #{tpu_custom_call.1} parent=0 // pred_check
    %p24 = pneg %p20
  $region15: #{tpu_custom_call.1} parent=0 // pred_check_branch
    %26 = sbr.rel (%p24) target = $region17
  $region16: #{tpu_custom_call.1} parent=0 // pred_region
    %s27 = sshll.u32 1, 120
    %s28 = ssub.s32 %s27, 1
    loop: start=0, step=1, limit=1
    $region18: #{tpu_custom_call.1} parent=16 // loop_pre_header
      _
    $region19: #{tpu_custom_call.1} parent=16 // loop_header
      %s30 = sphi 0, %s34
      %p31 = scmp.ge.s32.totalorder %s30, 1
      %s35 = sphi %s2, %s2
      %s36 = sphi [#allocation2], [#allocation2]
    $region20: #{tpu_custom_call.1} parent=16 // loop_header_branch
      %33 = sbr.rel (%p31) target = $region24
    $region21: #{tpu_custom_call.1} parent=16 // loop_body
      %v37 = vld [vmem:[%s35] sm:%s28]
      %38 = vst [vmem:[%s36] sm:%s28] %v37
    $region22: #{tpu_custom_call.1} parent=16 // loop_footer
      %s34 = sadd.s32 1, %s30
    $region23: #{tpu_custom_call.1} parent=16 // loop_footer_branch
      %29 = sbr.rel target = $region19
    $region24: #{tpu_custom_call.1} parent=16 // loop_exit
      _
  $region17: #{tpu_custom_call.1} parent=0 // pred_fallthru
    _
  // Predicated region
  $region40: #{tpu_custom_call.1} parent=0 // pred_check
    _
  $region41: #{tpu_custom_call.1} parent=0 // pred_check_branch
    %88 = sbr.rel (0) target = $region43
  $region42: #{tpu_custom_call.1} parent=0 // pred_region
    %89 = vsyncadd [#allocation9], 1920
  $region43: #{tpu_custom_call.1} parent=0 // pred_fallthru
    _
  %s90 = scalar_lea.sflag [#allocation9], 1
  // Predicated region
  $region44: #{tpu_custom_call.1} parent=0 // pred_check
    _
  $region45: #{tpu_custom_call.1} parent=0 // pred_check_branch
    %92 = sbr.rel target = $region47
  $region46: #{tpu_custom_call.1} parent=0 // pred_region
    %93 = sst [smem:[#allocation13]] [#allocation12]
    %94 = sst [smem:[#allocation14]] [#allocation11]
  $region47: #{tpu_custom_call.1} parent=0 // pred_fallthru
    _
  %96 = shalt.err (0)
  %s98 = sshll.u32 [#allocation3], 4
  %s99 = int_to_ptr.vmem [resolvable:$true] %s98
  %101 = dma.hbm_to_vmem [thread:$0]  %s3, 8192, %s99, %s90
  %s102 = scalar_lea.sflag [#allocation9], 2
  // Predicated region
  $region48: #{tpu_custom_call.1} parent=0 // pred_check
    _
  $region49: #{tpu_custom_call.1} parent=0 // pred_check_branch
    %104 = sbr.rel target = $region51
  $region50: #{tpu_custom_call.1} parent=0 // pred_region
    %105 = sst [smem:[#allocation13]] [#allocation16]
    %106 = sst [smem:[#allocation14]] [#allocation15]
  $region51: #{tpu_custom_call.1} parent=0 // pred_fallthru
    _
  %108 = shalt.err (0)
  %s110 = sshll.u32 [#allocation4], 4
  %s111 = int_to_ptr.vmem [resolvable:$true] %s110
  %113 = dma.hbm_to_vmem [thread:$0]  %s4, 32768, %s111, %s102
  %s114 = scalar_lea.sflag [#allocation9], 3
  // Predicated region
  $region52: #{tpu_custom_call.1} parent=0 // pred_check
    _
  $region53: #{tpu_custom_call.1} parent=0 // pred_check_branch
    %116 = sbr.rel target = $region55
  $region54: #{tpu_custom_call.1} parent=0 // pred_region
    %117 = sst [smem:[#allocation13]] [#allocation18]
    %118 = sst [smem:[#allocation14]] [#allocation17]
  $region55: #{tpu_custom_call.1} parent=0 // pred_fallthru
    _
  %120 = shalt.err (0)
  %s122 = sshll.u32 [#allocation5], 4
  %s123 = int_to_ptr.vmem [resolvable:$true] %s122
  %125 = dma.hbm_to_vmem [thread:$0]  %s5, 32768, %s123, %s114
  %s126 = scalar_lea.sflag [#allocation9], 4
  // Predicated region
  $region56: #{tpu_custom_call.1} parent=0 // pred_check
    _
  $region57: #{tpu_custom_call.1} parent=0 // pred_check_branch
    %128 = sbr.rel target = $region59
  $region58: #{tpu_custom_call.1} parent=0 // pred_region
    %129 = sst [smem:[#allocation13]] [#allocation20]
    %130 = sst [smem:[#allocation14]] [#allocation19]
  $region59: #{tpu_custom_call.1} parent=0 // pred_fallthru
    _
  %132 = shalt.err (0)
  %s134 = sshll.u32 [#allocation6], 4
  %s135 = int_to_ptr.vmem [resolvable:$true] %s134
  %137 = dma.hbm_to_vmem [thread:$0]  %s6, 8192, %s135, %s126
  %s138 = scalar_lea.sflag [#allocation9], 5
  %p140 = scmp.lt.u32.totalorder 128, 8
  %p141 = pneg %p140
  // Predicated region
  $region60: #{tpu_custom_call.1} parent=0 // pred_check
    _
  $region61: #{tpu_custom_call.1} parent=0 // pred_check_branch
    %143 = sbr.rel (%p140) target = $region63
  $region62: #{tpu_custom_call.1} parent=0 // pred_region
    %s159 = sand.u32 128, 7
    %p160 = scmp.eq.s32.totalorder %s159, 0
    // Predicated region
    $region75: #{tpu_custom_call.1} parent=62 // pred_check
      %p161 = pneg %p160
    $region76: #{tpu_custom_call.1} parent=62 // pred_check_branch
      %163 = sbr.rel (%p161) target = $region78
    $region77: #{tpu_custom_call.1} parent=62 // pred_region
      loop: start=0, step=1, limit=1
      $region79: #{tpu_custom_call.1} parent=77 // loop_pre_header
        _
      $region80: #{tpu_custom_call.1} parent=77 // loop_header
        %s165 = sphi 0, %s169
        %p166 = scmp.ge.s32.totalorder %s165, 1
        %s170 = sphi %s7, %s7
        %s171 = sphi [#allocation7], [#allocation7]
      $region81: #{tpu_custom_call.1} parent=77 // loop_header_branch
        %168 = sbr.rel (%p166) target = $region85
      $region82: #{tpu_custom_call.1} parent=77 // loop_body
        %v172 = vld [vmem:[%s170] sm:$0xff]
        %173 = vst [vmem:[%s171] sm:$0xff] %v172
        %v174 = vld [vmem:[%s170 + $0x8] sm:$0xff]
        %175 = vst [vmem:[%s171 + $0x8] sm:$0xff] %v174
        %v176 = vld [vmem:[%s170 + $0x10] sm:$0xff]
        %177 = vst [vmem:[%s171 + $0x10] sm:$0xff] %v176
        %v178 = vld [vmem:[%s170 + $0x18] sm:$0xff]
        %179 = vst [vmem:[%s171 + $0x18] sm:$0xff] %v178
        %v180 = vld [vmem:[%s170 + $0x20] sm:$0xff]
        %181 = vst [vmem:[%s171 + $0x20] sm:$0xff] %v180
        %v182 = vld [vmem:[%s170 + $0x28] sm:$0xff]
        %183 = vst [vmem:[%s171 + $0x28] sm:$0xff] %v182
        %v184 = vld [vmem:[%s170 + $0x30] sm:$0xff]
        %185 = vst [vmem:[%s171 + $0x30] sm:$0xff] %v184
        %v186 = vld [vmem:[%s170 + $0x38] sm:$0xff]
        %187 = vst [vmem:[%s171 + $0x38] sm:$0xff] %v186
        %v188 = vld [vmem:[%s170 + $0x40] sm:$0xff]
        %189 = vst [vmem:[%s171 + $0x40] sm:$0xff] %v188
        %v190 = vld [vmem:[%s170 + $0x48] sm:$0xff]
        %191 = vst [vmem:[%s171 + $0x48] sm:$0xff] %v190
        %v192 = vld [vmem:[%s170 + $0x50] sm:$0xff]
        %193 = vst [vmem:[%s171 + $0x50] sm:$0xff] %v192
        %v194 = vld [vmem:[%s170 + $0x58] sm:$0xff]
        %195 = vst [vmem:[%s171 + $0x58] sm:$0xff] %v194
        %v196 = vld [vmem:[%s170 + $0x60] sm:$0xff]
        %197 = vst [vmem:[%s171 + $0x60] sm:$0xff] %v196
        %v198 = vld [vmem:[%s170 + $0x68] sm:$0xff]
        %199 = vst [vmem:[%s171 + $0x68] sm:$0xff] %v198
        %v200 = vld [vmem:[%s170 + $0x70] sm:$0xff]
        %201 = vst [vmem:[%s171 + $0x70] sm:$0xff] %v200
        %v202 = vld [vmem:[%s170 + $0x78] sm:$0xff]
        %203 = vst [vmem:[%s171 + $0x78] sm:$0xff] %v202
      $region83: #{tpu_custom_call.1} parent=77 // loop_footer
        %s169 = sadd.s32 1, %s165
      $region84: #{tpu_custom_call.1} parent=77 // loop_footer_branch
        %164 = sbr.rel target = $region80
      $region85: #{tpu_custom_call.1} parent=77 // loop_exit
        _
    $region78: #{tpu_custom_call.1} parent=62 // pred_fallthru
      _
    %p204 = pneg %p160
    // Predicated region
    $region86: #{tpu_custom_call.1} parent=62 // pred_check
      _
    $region87: #{tpu_custom_call.1} parent=62 // pred_check_branch
      %206 = sbr.rel (%p160) target = $region89
    $region88: #{tpu_custom_call.1} parent=62 // pred_region
      %s207 = sand.u32 128, 7
    $region89: #{tpu_custom_call.1} parent=62 // pred_fallthru
      _
  $region63: #{tpu_custom_call.1} parent=0 // pred_fallthru
    _
  // Predicated region
  $region64: #{tpu_custom_call.1} parent=0 // pred_check
    %p144 = pneg %p140
  $region65: #{tpu_custom_call.1} parent=0 // pred_check_branch
    %146 = sbr.rel (%p144) target = $region67
  $region66: #{tpu_custom_call.1} parent=0 // pred_region
    %s147 = sshll.u32 1, 128
    %s148 = ssub.s32 %s147, 1
    loop: start=0, step=1, limit=1
    $region68: #{tpu_custom_call.1} parent=66 // loop_pre_header
      _
    $region69: #{tpu_custom_call.1} parent=66 // loop_header
      %s150 = sphi 0, %s154
      %p151 = scmp.ge.s32.totalorder %s150, 1
      %s155 = sphi %s7, %s7
      %s156 = sphi [#allocation7], [#allocation7]
    $region70: #{tpu_custom_call.1} parent=66 // loop_header_branch
      %153 = sbr.rel (%p151) target = $region74
    $region71: #{tpu_custom_call.1} parent=66 // loop_body
      %v157 = vld [vmem:[%s155] sm:%s148]
      %158 = vst [vmem:[%s156] sm:%s148] %v157
    $region72: #{tpu_custom_call.1} parent=66 // loop_footer
      %s154 = sadd.s32 1, %s150
    $region73: #{tpu_custom_call.1} parent=66 // loop_footer_branch
      %149 = sbr.rel target = $region69
    $region74: #{tpu_custom_call.1} parent=66 // loop_exit
      _
  $region67: #{tpu_custom_call.1} parent=0 // pred_fallthru
    _
  // Predicated region
  $region90: #{tpu_custom_call.1} parent=0 // pred_check
    _
  $region91: #{tpu_custom_call.1} parent=0 // pred_check_branch
    %210 = sbr.rel (0) target = $region93
  $region92: #{tpu_custom_call.1} parent=0 // pred_region
    %211 = vsyncadd %s138, 2048
  $region93: #{tpu_custom_call.1} parent=0 // pred_fallthru
    _
  %s212 = scalar_lea.sflag [#allocation9], 6
  %p214 = scmp.lt.u32.totalorder 60, 8
  %p215 = pneg %p214
  // Predicated region
  $region94: #{tpu_custom_call.1} parent=0 // pred_check
    _
  $region95: #{tpu_custom_call.1} parent=0 // pred_check_branch
    %217 = sbr.rel (%p214) target = $region97
  $region96: #{tpu_custom_call.1} parent=0 // pred_region
    %s233 = sand.u32 60, 7
    %p234 = scmp.eq.s32.totalorder %s233, 0
    %p235 = pneg %p234
    // Predicated region
    $region109: #{tpu_custom_call.1} parent=96 // pred_check
      _
    $region110: #{tpu_custom_call.1} parent=96 // pred_check_branch
      %237 = sbr.rel (%p234) target = $region112
    $region111: #{tpu_custom_call.1} parent=96 // pred_region
      %s238 = sand.u32 60, 7
      %s239 = ssub.s32 60, %s238
      %s240 = scalar_lea.vmem %s8, %s239
      %s241 = ssub.s32 60, %s238
      %s242 = scalar_lea.vmem [#allocation8], %s241
      loop: start=0, step=1, limit=1
      $region113: #{tpu_custom_call.1} parent=111 // loop_pre_header
        _
      $region114: #{tpu_custom_call.1} parent=111 // loop_header
        %s244 = sphi 0, %s248
        %p245 = scmp.ge.s32.totalorder %s244, 1
        %s249 = sphi %s8, %s8
        %s250 = sphi [#allocation8], [#allocation8]
      $region115: #{tpu_custom_call.1} parent=111 // loop_header_branch
        %247 = sbr.rel (%p245) target = $region119
      $region116: #{tpu_custom_call.1} parent=111 // loop_body
        %v251 = vld [vmem:[%s249] sm:$0xff]
        %252 = vst [vmem:[%s250] sm:$0xff] %v251
        %v253 = vld [vmem:[%s249 + $0x8] sm:$0xff]
        %254 = vst [vmem:[%s250 + $0x8] sm:$0xff] %v253
        %v255 = vld [vmem:[%s249 + $0x10] sm:$0xff]
        %256 = vst [vmem:[%s250 + $0x10] sm:$0xff] %v255
        %v257 = vld [vmem:[%s249 + $0x18] sm:$0xff]
        %258 = vst [vmem:[%s250 + $0x18] sm:$0xff] %v257
        %v259 = vld [vmem:[%s249 + $0x20] sm:$0xff]
        %260 = vst [vmem:[%s250 + $0x20] sm:$0xff] %v259
        %v261 = vld [vmem:[%s249 + $0x28] sm:$0xff]
        %262 = vst [vmem:[%s250 + $0x28] sm:$0xff] %v261
        %v263 = vld [vmem:[%s249 + $0x30] sm:$0xff]
        %264 = vst [vmem:[%s250 + $0x30] sm:$0xff] %v263
      $region117: #{tpu_custom_call.1} parent=111 // loop_footer
        %s248 = sadd.s32 1, %s244
      $region118: #{tpu_custom_call.1} parent=111 // loop_footer_branch
        %243 = sbr.rel target = $region114
      $region119: #{tpu_custom_call.1} parent=111 // loop_exit
        _
      %s265 = sshll.u32 1, %s238
      %s266 = ssub.s32 %s265, 1
      loop: start=0, step=1, limit=1
      $region120: #{tpu_custom_call.1} parent=111 // loop_pre_header
        _
      $region121: #{tpu_custom_call.1} parent=111 // loop_header
        %s268 = sphi 0, %s272
        %p269 = scmp.ge.s32.totalorder %s268, 1
        %s273 = sphi %s240, %s240
        %s274 = sphi %s242, %s242
      $region122: #{tpu_custom_call.1} parent=111 // loop_header_branch
        %271 = sbr.rel (%p269) target = $region126
      $region123: #{tpu_custom_call.1} parent=111 // loop_body
        %v275 = vld [vmem:[%s273] sm:%s266]
        %276 = vst [vmem:[%s274] sm:%s266] %v275
      $region124: #{tpu_custom_call.1} parent=111 // loop_footer
        %s272 = sadd.s32 1, %s268
      $region125: #{tpu_custom_call.1} parent=111 // loop_footer_branch
        %267 = sbr.rel target = $region121
      $region126: #{tpu_custom_call.1} parent=111 // loop_exit
        _
    $region112: #{tpu_custom_call.1} parent=96 // pred_fallthru
      _
  $region97: #{tpu_custom_call.1} parent=0 // pred_fallthru
    _
  // Predicated region
  $region98: #{tpu_custom_call.1} parent=0 // pred_check
    %p218 = pneg %p214
  $region99: #{tpu_custom_call.1} parent=0 // pred_check_branch
    %220 = sbr.rel (%p218) target = $region101
  $region100: #{tpu_custom_call.1} parent=0 // pred_region
    %s221 = sshll.u32 1, 60
    %s222 = ssub.s32 %s221, 1
    loop: start=0, step=1, limit=1
    $region102: #{tpu_custom_call.1} parent=100 // loop_pre_header
      _
    $region103: #{tpu_custom_call.1} parent=100 // loop_header
      %s224 = sphi 0, %s228
      %p225 = scmp.ge.s32.totalorder %s224, 1
      %s229 = sphi %s8, %s8
      %s230 = sphi [#allocation8], [#allocation8]
    $region104: #{tpu_custom_call.1} parent=100 // loop_header_branch
      %227 = sbr.rel (%p225) target = $region108
    $region105: #{tpu_custom_call.1} parent=100 // loop_body
      %v231 = vld [vmem:[%s229] sm:%s222]
      %232 = vst [vmem:[%s230] sm:%s222] %v231
    $region106: #{tpu_custom_call.1} parent=100 // loop_footer
      %s228 = sadd.s32 1, %s224
    $region107: #{tpu_custom_call.1} parent=100 // loop_footer_branch
      %223 = sbr.rel target = $region103
    $region108: #{tpu_custom_call.1} parent=100 // loop_exit
      _
  $region101: #{tpu_custom_call.1} parent=0 // pred_fallthru
    _
  // Predicated region
  $region127: #{tpu_custom_call.1} parent=0 // pred_check
    _
  $region128: #{tpu_custom_call.1} parent=0 // pred_check_branch
    %279 = sbr.rel (0) target = $region130
  $region129: #{tpu_custom_call.1} parent=0 // pred_region
    %280 = vsyncadd %s212, 960
  $region130: #{tpu_custom_call.1} parent=0 // pred_fallthru
    _
  %v281 = vld [vmem:[%s0] sm:$0xff]
  %s282 = smul.u32 4, 15
  %s283 = smul.u32 %s282, 2
  %s284 = sshll.u32 %s283, 4
  %285 = dma.done [#allocation9], %s284
  %v286 = vld [vmem:[#allocation2] sm:$0xff]
  %v287 = vld [vmem:[#allocation2 + $0x8] sm:$0xff]
  %v288 = vld [vmem:[#allocation2 + $0x10] sm:$0xff]
  %v289 = vld [vmem:[#allocation2 + $0x18] sm:$0xff]
  %v290 = vld [vmem:[#allocation2 + $0x20] sm:$0xff]
  %v291 = vld [vmem:[#allocation2 + $0x28] sm:$0xff]
  %v292 = vld [vmem:[#allocation2 + $0x30] sm:$0xff]
  %v293 = vld [vmem:[#allocation2 + $0x38] sm:$0xff]
  %v294 = vld [vmem:[#allocation2 + $0x40] sm:$0xff]
  %v295 = vld [vmem:[#allocation2 + $0x48] sm:$0xff]
  %v296 = vld [vmem:[#allocation2 + $0x50] sm:$0xff]
  %v297 = vld [vmem:[#allocation2 + $0x58] sm:$0xff]
  %v298 = vld [vmem:[#allocation2 + $0x60] sm:$0xff]
  %v299 = vld [vmem:[#allocation2 + $0x68] sm:$0xff]
  %v300 = vld [vmem:[#allocation2 + $0x70] sm:$0xff]
  %v301 = vpack.c.bf16 %v281, %v281
  %v317 = vunpack.c.l.b16 %v286
  %v318 = vunpack.c.h.b16 %v286
  %v319 = vunpack.c.l.b16 %v287
  %v320 = vunpack.c.h.b16 %v287
  %v321 = vunpack.c.l.b16 %v288
  %v322 = vunpack.c.h.b16 %v288
  %v323 = vunpack.c.l.b16 %v289
  %v324 = vunpack.c.h.b16 %v289
  %v325 = vunpack.c.l.b16 %v290
  %v326 = vunpack.c.h.b16 %v290
  %v327 = vunpack.c.l.b16 %v291
  %v328 = vunpack.c.h.b16 %v291
  %v329 = vunpack.c.l.b16 %v292
  %v330 = vunpack.c.h.b16 %v292
  %v331 = vunpack.c.l.b16 %v293
  %v332 = vunpack.c.h.b16 %v293
  %v333 = vunpack.c.l.b16 %v294
  %v334 = vunpack.c.h.b16 %v294
  %v335 = vunpack.c.l.b16 %v295
  %v336 = vunpack.c.h.b16 %v295
  %v337 = vunpack.c.l.b16 %v296
  %v338 = vunpack.c.h.b16 %v296
  %v339 = vunpack.c.l.b16 %v297
  %v340 = vunpack.c.h.b16 %v297
  %v341 = vunpack.c.l.b16 %v298
  %v342 = vunpack.c.h.b16 %v298
  %v343 = vunpack.c.l.b16 %v299
  %v344 = vunpack.c.h.b16 %v299
  %v345 = vunpack.c.l.b16 %v300
  %v346 = vunpack.c.h.b16 %v300
  %v347 = vpack.c.b16 %v319, %v317
  %v348 = vpack.c.b16 %v320, %v318
  %v349 = vpack.c.b16 %v323, %v321
  %v350 = vpack.c.b16 %v324, %v322
  %v351 = vpack.c.b16 %v327, %v325
  %v352 = vpack.c.b16 %v328, %v326
  %v353 = vpack.c.b16 %v331, %v329
  %v354 = vpack.c.b16 %v332, %v330
  %v355 = vpack.c.b16 %v335, %v333
  %v356 = vpack.c.b16 %v336, %v334
  %v357 = vpack.c.b16 %v339, %v337
  %v358 = vpack.c.b16 %v340, %v338
  %v359 = vpack.c.b16 %v343, %v341
  %v360 = vpack.c.b16 %v344, %v342
  %v361 = vpack.c.b16 %v345, %v345
  %v362 = vpack.c.b16 %v346, %v346
  %vm377 = vcmask 982016
  %v379 = vsel %vm377, %v301, 0
  %vm381 = vcmask 1043456
  %v383 = vsel %vm381, %v361, 0
  %v386 = vsel %vm381, %v362, 0
  %388 = vmatprep.subr.bf16.mxu0 %v386
  %389 = vmatpush1.bf16.msra.mxu0 %v383
  %390 = vmatprep.subr.bf16.mxu0 %v360
  %391 = vmatpush1.bf16.msra.mxu0 %v359
  %392 = vmatprep.subr.bf16.mxu0 %v358
  %393 = vmatpush1.bf16.msra.mxu0 %v357
  %394 = vmatprep.subr.bf16.mxu0 %v356
  %395 = vmatpush1.bf16.msra.mxu0 %v355
  %396 = vmatprep.subr.bf16.mxu0 %v354
  %397 = vmatpush1.bf16.msra.mxu0 %v353
  %398 = vmatprep.subr.bf16.mxu0 %v352
  %399 = vmatpush1.bf16.msra.mxu0 %v351
  %400 = vmatprep.subr.bf16.mxu0 %v350
  %401 = vmatpush1.bf16.msra.mxu0 %v349
  %402 = vmatprep.subr.bf16.mxu0 %v348
  %403 = vmatpush1.bf16.msra.mxu0 %v347
  %404 = vmatprep.subr.bf16.mxu0 0
  %405 = vmatpush2.bf16.msra.mxu0 0
  %406 = vmatprep.subr.bf16.mxu0 0
  %407 = vmatpush2.bf16.msra.mxu0 0
  %408 = vmatprep.subr.bf16.mxu0 0
  %409 = vmatpush2.bf16.msra.mxu0 0
  %410 = vmatprep.subr.bf16.mxu0 0
  %411 = vmatpush2.bf16.msra.mxu0 0
  %412 = vmatprep.subr.bf16.mxu0 0
  %413 = vmatpush2.bf16.msra.mxu0 0
  %414 = vmatprep.subr.bf16.mxu0 0
  %415 = vmatpush2.bf16.msra.mxu0 0
  %416 = vmatprep.subr.bf16.mxu0 0
  %417 = vmatpush2.bf16.msra.mxu0 0
  %418 = vmatprep.subr.bf16.mxu0 0
  %419 = vmatpush2.bf16.msra.mxu0 0
  %420 = vmatprep.mubr.bf16.mxu0 0
  %421 = vmatmul.mubr.bf16.gmra.mxu0 %v379
  %v422 = vpop.f32.mrf.mxu0
  %v423 = vadd.f32 0.0, %v422
  %v424 = vpop.f32.mrf.mxu0
  %v425 = vadd.f32 0.0, %v424
  %v426 = vpop.f32.mrf.mxu0
  %v427 = vpop.f32.mrf.mxu0
  %428 = vdwg.mxu0
  %v429 = vrot.slane %v423, 4
  %v430 = vadd.f32 %v423, %v429
  %v431 = vrot.slane %v430, 2
  %v432 = vadd.f32 %v430, %v431
  %v433 = vrot.slane %v432, 1
  %v434 = vadd.f32 %v432, %v433
  %v435 = vrot.slane %v425, 4
  %v436 = vadd.f32 %v425, %v435
  %v437 = vrot.slane %v436, 2
  %v438 = vadd.f32 %v436, %v437
  %v439 = vrot.slane %v438, 1
  %v440 = vadd.f32 %v438, %v439
  %v441 = vrcp.pop 8.0
  %v442 = vmul.f32 %v434, %v441
  %v443 = vmul.f32 %v440, %v441
  %v444 = vsub.f32 %v423, %v442
  %v445 = vsub.f32 %v425, %v443
  %v446 = vmul.f32 %v444, %v444
  %v447 = vmul.f32 %v445, %v445
  %v448 = vrot.slane %v446, 4
  %v449 = vadd.f32 %v446, %v448
  %v450 = vrot.slane %v449, 2
  %v451 = vadd.f32 %v449, %v450
  %v452 = vrot.slane %v451, 1
  %v453 = vadd.f32 %v451, %v452
  %v454 = vrot.slane %v447, 4
  %v455 = vadd.f32 %v447, %v454
  %v456 = vrot.slane %v455, 2
  %v457 = vadd.f32 %v455, %v456
  %v458 = vrot.slane %v457, 1
  %v459 = vadd.f32 %v457, %v458
  %v460 = vmul.f32 %v453, %v441
  %v461 = vmul.f32 %v459, %v441
  %v462 = vld [vmem:[%s1] ss:$8 sm:$0x3]
  %s463 = scalar_lea.vmem %s1, 1
  %v464 = vld [vmem:[%s463] ss:$8 sm:$0x3]
  %v465 = vadd.f32 %v460, 1e-05
  %v466 = vadd.f32 %v461, 1e-05
  %v467 = vrsqrt.pop %v465
  %v468 = vrsqrt.pop %v466
  %v469 = vmul.f32 %v444, %v467
  %v470 = vmul.f32 %v445, %v468
  %v472 = vlaneseq
  %v473 = vshrl.u32 %v472, 7
  %v474 = vsub.s32 0, %v473
  %v475 = vrot.slane %v462, %v474
  %v476 = vlaneseq
  %v477 = vshrl.u32 %v476, 7
  %v478 = vsub.s32 1, %v477
  %v479 = vrot.slane %v462, %v478
  %v482 = vmul.f32 %v469, %v475
  %v483 = vmul.f32 %v470, %v479
  %v485 = vlaneseq
  %v486 = vshrl.u32 %v485, 7
  %v487 = vsub.s32 0, %v486
  %v488 = vrot.slane %v464, %v487
  %v489 = vlaneseq
  %v490 = vshrl.u32 %v489, 7
  %v491 = vsub.s32 1, %v490
  %v492 = vrot.slane %v464, %v491
  %v495 = vadd.f32 %v482, %v488
  %v496 = vadd.f32 %v483, %v492
  %v497 = vmax.f32 %v495, 0.0
  %v498 = vmax.f32 %v496, 0.0
  %s499 = smul.u32 4, 32
  %s500 = smul.u32 %s499, 4
  %s501 = sshll.u32 %s500, 4
  %502 = dma.done %s90, %s501
  %v503 = vld [vmem:[#allocation3] sm:$0xff]
  %v504 = vld [vmem:[#allocation3 + $0x8] sm:$0xff]
  %v505 = vld [vmem:[#allocation3 + $0x10] sm:$0xff]
  %v506 = vld [vmem:[#allocation3 + $0x18] sm:$0xff]
  %v507 = vld [vmem:[#allocation3 + $0x20] sm:$0xff]
  %v508 = vld [vmem:[#allocation3 + $0x28] sm:$0xff]
  %v509 = vld [vmem:[#allocation3 + $0x30] sm:$0xff]
  %v510 = vld [vmem:[#allocation3 + $0x38] sm:$0xff]
  %v511 = vld [vmem:[#allocation3 + $0x40] sm:$0xff]
  %v512 = vld [vmem:[#allocation3 + $0x48] sm:$0xff]
  %v513 = vld [vmem:[#allocation3 + $0x50] sm:$0xff]
  %v514 = vld [vmem:[#allocation3 + $0x58] sm:$0xff]
  %v515 = vld [vmem:[#allocation3 + $0x60] sm:$0xff]
  %v516 = vld [vmem:[#allocation3 + $0x68] sm:$0xff]
  %v517 = vld [vmem:[#allocation3 + $0x70] sm:$0xff]
  %v518 = vld [vmem:[#allocation3 + $0x78] sm:$0xff]
  %v519 = vld [vmem:[#allocation3 + $0x80] sm:$0xff]
  %v520 = vld [vmem:[#allocation3 + $0x88] sm:$0xff]
  %v521 = vld [vmem:[#allocation3 + $0x90] sm:$0xff]
  %v522 = vld [vmem:[#allocation3 + $0x98] sm:$0xff]
  %v523 = vld [vmem:[#allocation3 + $0xa0] sm:$0xff]
  %v524 = vld [vmem:[#allocation3 + $0xa8] sm:$0xff]
  %v525 = vld [vmem:[#allocation3 + $0xb0] sm:$0xff]
  %v526 = vld [vmem:[#allocation3 + $0xb8] sm:$0xff]
  %v527 = vld [vmem:[#allocation3 + $0xc0] sm:$0xff]
  %v528 = vld [vmem:[#allocation3 + $0xc8] sm:$0xff]
  %v529 = vld [vmem:[#allocation3 + $0xd0] sm:$0xff]
  %v530 = vld [vmem:[#allocation3 + $0xd8] sm:$0xff]
  %v531 = vld [vmem:[#allocation3 + $0xe0] sm:$0xff]
  %v532 = vld [vmem:[#allocation3 + $0xe8] sm:$0xff]
  %v533 = vld [vmem:[#allocation3 + $0xf0] sm:$0xff]
  %v534 = vld [vmem:[#allocation3 + $0xf8] sm:$0xff]
  %v535 = vld [vmem:[#allocation3 + $0x100] sm:$0xff]
  %v536 = vld [vmem:[#allocation3 + $0x108] sm:$0xff]
  %v537 = vld [vmem:[#allocation3 + $0x110] sm:$0xff]
  %v538 = vld [vmem:[#allocation3 + $0x118] sm:$0xff]
  %v539 = vld [vmem:[#allocation3 + $0x120] sm:$0xff]
  %v540 = vld [vmem:[#allocation3 + $0x128] sm:$0xff]
  %v541 = vld [vmem:[#allocation3 + $0x130] sm:$0xff]
  %v542 = vld [vmem:[#allocation3 + $0x138] sm:$0xff]
  %v543 = vld [vmem:[#allocation3 + $0x140] sm:$0xff]
  %v544 = vld [vmem:[#allocation3 + $0x148] sm:$0xff]
  %v545 = vld [vmem:[#allocation3 + $0x150] sm:$0xff]
  %v546 = vld [vmem:[#allocation3 + $0x158] sm:$0xff]
  %v547 = vld [vmem:[#allocation3 + $0x160] sm:$0xff]
  %v548 = vld [vmem:[#allocation3 + $0x168] sm:$0xff]
  %v549 = vld [vmem:[#allocation3 + $0x170] sm:$0xff]
  %v550 = vld [vmem:[#allocation3 + $0x178] sm:$0xff]
  %v551 = vld [vmem:[#allocation3 + $0x180] sm:$0xff]
  %v552 = vld [vmem:[#allocation3 + $0x188] sm:$0xff]
  %v553 = vld [vmem:[#allocation3 + $0x190] sm:$0xff]
  %v554 = vld [vmem:[#allocation3 + $0x198] sm:$0xff]
  %v555 = vld [vmem:[#allocation3 + $0x1a0] sm:$0xff]
  %v556 = vld [vmem:[#allocation3 + $0x1a8] sm:$0xff]
  %v557 = vld [vmem:[#allocation3 + $0x1b0] sm:$0xff]
  %v558 = vld [vmem:[#allocation3 + $0x1b8] sm:$0xff]
  %v559 = vld [vmem:[#allocation3 + $0x1c0] sm:$0xff]
  %v560 = vld [vmem:[#allocation3 + $0x1c8] sm:$0xff]
  %v561 = vld [vmem:[#allocation3 + $0x1d0] sm:$0xff]
  %v562 = vld [vmem:[#allocation3 + $0x1d8] sm:$0xff]
  %v563 = vld [vmem:[#allocation3 + $0x1e0] sm:$0xff]
  %v564 = vld [vmem:[#allocation3 + $0x1e8] sm:$0xff]
  %v565 = vld [vmem:[#allocation3 + $0x1f0] sm:$0xff]
  %v566 = vld [vmem:[#allocation3 + $0x1f8] sm:$0xff]
  %v567 = vpack.c.bf16 %v497, %v497
  %v568 = vpack.c.bf16 %v498, %v498
  %v633 = vunpack.c.l.b16 %v503
  %v634 = vunpack.c.h.b16 %v503
  %v635 = vunpack.c.l.b16 %v504
  %v636 = vunpack.c.h.b16 %v504
  %v637 = vunpack.c.l.b16 %v505
  %v638 = vunpack.c.h.b16 %v505
  %v639 = vunpack.c.l.b16 %v506
  %v640 = vunpack.c.h.b16 %v506
  %v641 = vunpack.c.l.b16 %v507
  %v642 = vunpack.c.h.b16 %v507
  %v643 = vunpack.c.l.b16 %v508
  %v644 = vunpack.c.h.b16 %v508
  %v645 = vunpack.c.l.b16 %v509
  %v646 = vunpack.c.h.b16 %v509
  %v647 = vunpack.c.l.b16 %v510
  %v648 = vunpack.c.h.b16 %v510
  %v649 = vunpack.c.l.b16 %v511
  %v650 = vunpack.c.h.b16 %v511
  %v651 = vunpack.c.l.b16 %v512
  %v652 = vunpack.c.h.b16 %v512
  %v653 = vunpack.c.l.b16 %v513
  %v654 = vunpack.c.h.b16 %v513
  %v655 = vunpack.c.l.b16 %v514
  %v656 = vunpack.c.h.b16 %v514
  %v657 = vunpack.c.l.b16 %v515
  %v658 = vunpack.c.h.b16 %v515
  %v659 = vunpack.c.l.b16 %v516
  %v660 = vunpack.c.h.b16 %v516
  %v661 = vunpack.c.l.b16 %v517
  %v662 = vunpack.c.h.b16 %v517
  %v663 = vunpack.c.l.b16 %v518
  %v664 = vunpack.c.h.b16 %v518
  %v665 = vunpack.c.l.b16 %v519
  %v666 = vunpack.c.h.b16 %v519
  %v667 = vunpack.c.l.b16 %v520
  %v668 = vunpack.c.h.b16 %v520
  %v669 = vunpack.c.l.b16 %v521
  %v670 = vunpack.c.h.b16 %v521
  %v671 = vunpack.c.l.b16 %v522
  %v672 = vunpack.c.h.b16 %v522
  %v673 = vunpack.c.l.b16 %v523
  %v674 = vunpack.c.h.b16 %v523
  %v675 = vunpack.c.l.b16 %v524
  %v676 = vunpack.c.h.b16 %v524
  %v677 = vunpack.c.l.b16 %v525
  %v678 = vunpack.c.h.b16 %v525
  %v679 = vunpack.c.l.b16 %v526
  %v680 = vunpack.c.h.b16 %v526
  %v681 = vunpack.c.l.b16 %v527
  %v682 = vunpack.c.h.b16 %v527
  %v683 = vunpack.c.l.b16 %v528
  %v684 = vunpack.c.h.b16 %v528
  %v685 = vunpack.c.l.b16 %v529
  %v686 = vunpack.c.h.b16 %v529
  %v687 = vunpack.c.l.b16 %v530
  %v688 = vunpack.c.h.b16 %v530
  %v689 = vunpack.c.l.b16 %v531
  %v690 = vunpack.c.h.b16 %v531
  %v691 = vunpack.c.l.b16 %v532
  %v692 = vunpack.c.h.b16 %v532
  %v693 = vunpack.c.l.b16 %v533
  %v694 = vunpack.c.h.b16 %v533
  %v695 = vunpack.c.l.b16 %v534
  %v696 = vunpack.c.h.b16 %v534
  %v697 = vunpack.c.l.b16 %v535
  %v698 = vunpack.c.h.b16 %v535
  %v699 = vunpack.c.l.b16 %v536
  %v700 = vunpack.c.h.b16 %v536
  %v701 = vunpack.c.l.b16 %v537
  %v702 = vunpack.c.h.b16 %v537
  %v703 = vunpack.c.l.b16 %v538
  %v704 = vunpack.c.h.b16 %v538
  %v705 = vunpack.c.l.b16 %v539
  %v706 = vunpack.c.h.b16 %v539
  %v707 = vunpack.c.l.b16 %v540
  %v708 = vunpack.c.h.b16 %v540
  %v709 = vunpack.c.l.b16 %v541
  %v710 = vunpack.c.h.b16 %v541
  %v711 = vunpack.c.l.b16 %v542
  %v712 = vunpack.c.h.b16 %v542
  %v713 = vunpack.c.l.b16 %v543
  %v714 = vunpack.c.h.b16 %v543
  %v715 = vunpack.c.l.b16 %v544
  %v716 = vunpack.c.h.b16 %v544
  %v717 = vunpack.c.l.b16 %v545
  %v718 = vunpack.c.h.b16 %v545
  %v719 = vunpack.c.l.b16 %v546
  %v720 = vunpack.c.h.b16 %v546
  %v721 = vunpack.c.l.b16 %v547
  %v722 = vunpack.c.h.b16 %v547
  %v723 = vunpack.c.l.b16 %v548
  %v724 = vunpack.c.h.b16 %v548
  %v725 = vunpack.c.l.b16 %v549
  %v726 = vunpack.c.h.b16 %v549
  %v727 = vunpack.c.l.b16 %v550
  %v728 = vunpack.c.h.b16 %v550
  %v729 = vunpack.c.l.b16 %v551
  %v730 = vunpack.c.h.b16 %v551
  %v731 = vunpack.c.l.b16 %v552
  %v732 = vunpack.c.h.b16 %v552
  %v733 = vunpack.c.l.b16 %v553
  %v734 = vunpack.c.h.b16 %v553
  %v735 = vunpack.c.l.b16 %v554
  %v736 = vunpack.c.h.b16 %v554
  %v737 = vunpack.c.l.b16 %v555
  %v738 = vunpack.c.h.b16 %v555
  %v739 = vunpack.c.l.b16 %v556
  %v740 = vunpack.c.h.b16 %v556
  %v741 = vunpack.c.l.b16 %v557
  %v742 = vunpack.c.h.b16 %v557
  %v743 = vunpack.c.l.b16 %v558
  %v744 = vunpack.c.h.b16 %v558
  %v745 = vunpack.c.l.b16 %v559
  %v746 = vunpack.c.h.b16 %v559
  %v747 = vunpack.c.l.b16 %v560
  %v748 = vunpack.c.h.b16 %v560
  %v749 = vunpack.c.l.b16 %v561
  %v750 = vunpack.c.h.b16 %v561
  %v751 = vunpack.c.l.b16 %v562
  %v752 = vunpack.c.h.b16 %v562
  %v753 = vunpack.c.l.b16 %v563
  %v754 = vunpack.c.h.b16 %v563
  %v755 = vunpack.c.l.b16 %v564
  %v756 = vunpack.c.h.b16 %v564
  %v757 = vunpack.c.l.b16 %v565
  %v758 = vunpack.c.h.b16 %v565
  %v759 = vunpack.c.l.b16 %v566
  %v760 = vunpack.c.h.b16 %v566
  %v761 = vpack.c.b16 %v637, %v633
  %v762 = vpack.c.b16 %v638, %v634
  %v763 = vpack.c.b16 %v639, %v635
  %v764 = vpack.c.b16 %v640, %v636
  %v765 = vpack.c.b16 %v645, %v641
  %v766 = vpack.c.b16 %v646, %v642
  %v767 = vpack.c.b16 %v647, %v643
  %v768 = vpack.c.b16 %v648, %v644
  %v769 = vpack.c.b16 %v653, %v649
  %v770 = vpack.c.b16 %v654, %v650
  %v771 = vpack.c.b16 %v655, %v651
  %v772 = vpack.c.b16 %v656, %v652
  %v773 = vpack.c.b16 %v661, %v657
  %v774 = vpack.c.b16 %v662, %v658
  %v775 = vpack.c.b16 %v663, %v659
  %v776 = vpack.c.b16 %v664, %v660
  %v777 = vpack.c.b16 %v669, %v665
  %v778 = vpack.c.b16 %v670, %v666
  %v779 = vpack.c.b16 %v671, %v667
  %v780 = vpack.c.b16 %v672, %v668
  %v781 = vpack.c.b16 %v677, %v673
  %v782 = vpack.c.b16 %v678, %v674
  %v783 = vpack.c.b16 %v679, %v675
  %v784 = vpack.c.b16 %v680, %v676
  %v785 = vpack.c.b16 %v685, %v681
  %v786 = vpack.c.b16 %v686, %v682
  %v787 = vpack.c.b16 %v687, %v683
  %v788 = vpack.c.b16 %v688, %v684
  %v789 = vpack.c.b16 %v693, %v689
  %v790 = vpack.c.b16 %v694, %v690
  %v791 = vpack.c.b16 %v695, %v691
  %v792 = vpack.c.b16 %v696, %v692
  %v793 = vpack.c.b16 %v701, %v697
  %v794 = vpack.c.b16 %v702, %v698
  %v795 = vpack.c.b16 %v703, %v699
  %v796 = vpack.c.b16 %v704, %v700
  %v797 = vpack.c.b16 %v709, %v705
  %v798 = vpack.c.b16 %v710, %v706
  %v799 = vpack.c.b16 %v711, %v707
  %v800 = vpack.c.b16 %v712, %v708
  %v801 = vpack.c.b16 %v717, %v713
  %v802 = vpack.c.b16 %v718, %v714
  %v803 = vpack.c.b16 %v719, %v715
  %v804 = vpack.c.b16 %v720, %v716
  %v805 = vpack.c.b16 %v725, %v721
  %v806 = vpack.c.b16 %v726, %v722
  %v807 = vpack.c.b16 %v727, %v723
  %v808 = vpack.c.b16 %v728, %v724
  %v809 = vpack.c.b16 %v733, %v729
  %v810 = vpack.c.b16 %v734, %v730
  %v811 = vpack.c.b16 %v735, %v731
  %v812 = vpack.c.b16 %v736, %v732
  %v813 = vpack.c.b16 %v741, %v737
  %v814 = vpack.c.b16 %v742, %v738
  %v815 = vpack.c.b16 %v743, %v739
  %v816 = vpack.c.b16 %v744, %v740
  %v817 = vpack.c.b16 %v749, %v745
  %v818 = vpack.c.b16 %v750, %v746
  %v819 = vpack.c.b16 %v751, %v747
  %v820 = vpack.c.b16 %v752, %v748
  %v821 = vpack.c.b16 %v757, %v753
  %v822 = vpack.c.b16 %v758, %v754
  %v823 = vpack.c.b16 %v759, %v755
  %v824 = vpack.c.b16 %v760, %v756
  %889 = vmatprep.subr.bf16.mxu0 %v790
  %890 = vmatpush1.bf16.msra.mxu0 %v789
  %891 = vmatprep.subr.bf16.mxu0 %v786
  %892 = vmatpush1.bf16.msra.mxu0 %v785
  %893 = vmatprep.subr.bf16.mxu0 %v782
  %894 = vmatpush1.bf16.msra.mxu0 %v781
  %895 = vmatprep.subr.bf16.mxu0 %v778
  %896 = vmatpush1.bf16.msra.mxu0 %v777
  %897 = vmatprep.subr.bf16.mxu0 %v774
  %898 = vmatpush1.bf16.msra.mxu0 %v773
  %899 = vmatprep.subr.bf16.mxu0 %v770
  %900 = vmatpush1.bf16.msra.mxu0 %v769
  %901 = vmatprep.subr.bf16.mxu0 %v766
  %902 = vmatpush1.bf16.msra.mxu0 %v765
  %903 = vmatprep.subr.bf16.mxu0 %v762
  %904 = vmatpush1.bf16.msra.mxu0 %v761
  %905 = vmatprep.subr.bf16.mxu0 %v822
  %906 = vmatpush2.bf16.msra.mxu0 %v821
  %907 = vmatprep.subr.bf16.mxu0 %v818
  %908 = vmatpush2.bf16.msra.mxu0 %v817
  %909 = vmatprep.subr.bf16.mxu0 %v814
  %910 = vmatpush2.bf16.msra.mxu0 %v813
  %911 = vmatprep.subr.bf16.mxu0 %v810
  %912 = vmatpush2.bf16.msra.mxu0 %v809
  %913 = vmatprep.subr.bf16.mxu0 %v806
  %914 = vmatpush2.bf16.msra.mxu0 %v805
  %915 = vmatprep.subr.bf16.mxu0 %v802
  %916 = vmatpush2.bf16.msra.mxu0 %v801
  %917 = vmatprep.subr.bf16.mxu0 %v798
  %918 = vmatpush2.bf16.msra.mxu0 %v797
  %919 = vmatprep.subr.bf16.mxu0 %v794
  %920 = vmatpush2.bf16.msra.mxu0 %v793
  %921 = vmatprep.mubr.bf16.mxu0 %v568
  %922 = vmatmul.mubr.bf16.gmra.mxu0 %v567
  %v923 = vpop.f32.mrf.mxu0
  %v924 = vadd.f32 0.0, %v923
  %v925 = vpop.f32.mrf.mxu0
  %v926 = vadd.f32 0.0, %v925
  %v927 = vpop.f32.mrf.mxu0
  %v928 = vpop.f32.mrf.mxu0
  %929 = vdwg.mxu0
  %930 = vmatprep.subr.bf16.mxu0 %v792
  %931 = vmatpush1.bf16.msra.mxu0 %v791
  %932 = vmatprep.subr.bf16.mxu0 %v788
  %933 = vmatpush1.bf16.msra.mxu0 %v787
  %934 = vmatprep.subr.bf16.mxu0 %v784
  %935 = vmatpush1.bf16.msra.mxu0 %v783
  %936 = vmatprep.subr.bf16.mxu0 %v780
  %937 = vmatpush1.bf16.msra.mxu0 %v779
  %938 = vmatprep.subr.bf16.mxu0 %v776
  %939 = vmatpush1.bf16.msra.mxu0 %v775
  %940 = vmatprep.subr.bf16.mxu0 %v772
  %941 = vmatpush1.bf16.msra.mxu0 %v771
  %942 = vmatprep.subr.bf16.mxu0 %v768
  %943 = vmatpush1.bf16.msra.mxu0 %v767
  %944 = vmatprep.subr.bf16.mxu0 %v764
  %945 = vmatpush1.bf16.msra.mxu0 %v763
  %946 = vmatprep.subr.bf16.mxu0 %v824
  %947 = vmatpush2.bf16.msra.mxu0 %v823
  %948 = vmatprep.subr.bf16.mxu0 %v820
  %949 = vmatpush2.bf16.msra.mxu0 %v819
  %950 = vmatprep.subr.bf16.mxu0 %v816
  %951 = vmatpush2.bf16.msra.mxu0 %v815
  %952 = vmatprep.subr.bf16.mxu0 %v812
  %953 = vmatpush2.bf16.msra.mxu0 %v811
  %954 = vmatprep.subr.bf16.mxu0 %v808
  %955 = vmatpush2.bf16.msra.mxu0 %v807
  %956 = vmatprep.subr.bf16.mxu0 %v804
  %957 = vmatpush2.bf16.msra.mxu0 %v803
  %958 = vmatprep.subr.bf16.mxu0 %v800
  %959 = vmatpush2.bf16.msra.mxu0 %v799
  %960 = vmatprep.subr.bf16.mxu0 %v796
  %961 = vmatpush2.bf16.msra.mxu0 %v795
  %962 = vmatprep.mubr.bf16.mxu0 %v568
  %963 = vmatmul.mubr.bf16.gmra.mxu0 %v567
  %v964 = vpop.f32.mrf.mxu0
  %v965 = vadd.f32 0.0, %v964
  %v966 = vpop.f32.mrf.mxu0
  %v967 = vadd.f32 0.0, %v966
  %v968 = vpop.f32.mrf.mxu0
  %v969 = vpop.f32.mrf.mxu0
  %970 = vdwg.mxu0
  %v971 = vrot.slane %v924, 4
  %v972 = vadd.f32 %v924, %v971
  %v973 = vrot.slane %v972, 2
  %v974 = vadd.f32 %v972, %v973
  %v975 = vrot.slane %v974, 1
  %v976 = vadd.f32 %v974, %v975
  %v977 = vrot.slane %v926, 4
  %v978 = vadd.f32 %v926, %v977
  %v979 = vrot.slane %v978, 2
  %v980 = vadd.f32 %v978, %v979
  %v981 = vrot.slane %v980, 1
  %v982 = vadd.f32 %v980, %v981
  %v983 = vrot.slane %v965, 4
  %v984 = vadd.f32 %v965, %v983
  %v985 = vrot.slane %v984, 2
  %v986 = vadd.f32 %v984, %v985
  %v987 = vrot.slane %v986, 1
  %v988 = vadd.f32 %v986, %v987
  %v989 = vrot.slane %v967, 4
  %v990 = vadd.f32 %v967, %v989
  %v991 = vrot.slane %v990, 2
  %v992 = vadd.f32 %v990, %v991
  %v993 = vrot.slane %v992, 1
  %v994 = vadd.f32 %v992, %v993
  %v995 = vmul.f32 %v976, %v441
  %v996 = vmul.f32 %v982, %v441
  %v997 = vmul.f32 %v988, %v441
  %v998 = vmul.f32 %v994, %v441
  %v999 = vsub.f32 %v924, %v995
  %v1000 = vsub.f32 %v926, %v996
  %v1001 = vsub.f32 %v965, %v997
  %v1002 = vsub.f32 %v967, %v998
  %v1003 = vmul.f32 %v999, %v999
  %v1004 = vmul.f32 %v1000, %v1000
  %v1005 = vmul.f32 %v1001, %v1001
  %v1006 = vmul.f32 %v1002, %v1002
  %v1007 = vrot.slane %v1003, 4
  %v1008 = vadd.f32 %v1003, %v1007
  %v1009 = vrot.slane %v1008, 2
  %v1010 = vadd.f32 %v1008, %v1009
  %v1011 = vrot.slane %v1010, 1
  %v1012 = vadd.f32 %v1010, %v1011
  %v1013 = vrot.slane %v1004, 4
  %v1014 = vadd.f32 %v1004, %v1013
  %v1015 = vrot.slane %v1014, 2
  %v1016 = vadd.f32 %v1014, %v1015
  %v1017 = vrot.slane %v1016, 1
  %v1018 = vadd.f32 %v1016, %v1017
  %v1019 = vrot.slane %v1005, 4
  %v1020 = vadd.f32 %v1005, %v1019
  %v1021 = vrot.slane %v1020, 2
  %v1022 = vadd.f32 %v1020, %v1021
  %v1023 = vrot.slane %v1022, 1
  %v1024 = vadd.f32 %v1022, %v1023
  %v1025 = vrot.slane %v1006, 4
  %v1026 = vadd.f32 %v1006, %v1025
  %v1027 = vrot.slane %v1026, 2
  %v1028 = vadd.f32 %v1026, %v1027
  %v1029 = vrot.slane %v1028, 1
  %v1030 = vadd.f32 %v1028, %v1029
  %v1031 = vmul.f32 %v1012, %v441
  %v1032 = vmul.f32 %v1018, %v441
  %v1033 = vmul.f32 %v1024, %v441
  %v1034 = vmul.f32 %v1030, %v441
  %s1035 = scalar_lea.vmem %s1, 2
  %v1036 = vld [vmem:[%s1035] ss:$8 sm:$0xf]
  %s1037 = scalar_lea.vmem %s1, 3
  %v1038 = vld [vmem:[%s1037] ss:$8 sm:$0xf]
  %v1039 = vadd.f32 %v1031, 1e-05
  %v1040 = vadd.f32 %v1032, 1e-05
  %v1041 = vadd.f32 %v1033, 1e-05
  %v1042 = vadd.f32 %v1034, 1e-05
  %v1043 = vrsqrt.pop %v1039
  %v1044 = vrsqrt.pop %v1040
  %v1045 = vrsqrt.pop %v1041
  %v1046 = vrsqrt.pop %v1042
  %v1047 = vmul.f32 %v999, %v1043
  %v1048 = vmul.f32 %v1000, %v1044
  %v1049 = vmul.f32 %v1001, %v1045
  %v1050 = vmul.f32 %v1002, %v1046
  %v1052 = vlaneseq
  %v1053 = vshrl.u32 %v1052, 7
  %v1054 = vsub.s32 0, %v1053
  %v1055 = vrot.slane %v1036, %v1054
  %v1056 = vlaneseq
  %v1057 = vshrl.u32 %v1056, 7
  %v1058 = vsub.s32 1, %v1057
  %v1059 = vrot.slane %v1036, %v1058
  %v1060 = vlaneseq
  %v1061 = vshrl.u32 %v1060, 7
  %v1062 = vsub.s32 2, %v1061
  %v1063 = vrot.slane %v1036, %v1062
  %v1064 = vlaneseq
  %v1065 = vshrl.u32 %v1064, 7
  %v1066 = vsub.s32 3, %v1065
  %v1067 = vrot.slane %v1036, %v1066
  %v1072 = vmul.f32 %v1047, %v1055
  %v1073 = vmul.f32 %v1048, %v1059
  %v1074 = vmul.f32 %v1049, %v1063
  %v1075 = vmul.f32 %v1050, %v1067
  %v1077 = vlaneseq
  %v1078 = vshrl.u32 %v1077, 7
  %v1079 = vsub.s32 0, %v1078
  %v1080 = vrot.slane %v1038, %v1079
  %v1081 = vlaneseq
  %v1082 = vshrl.u32 %v1081, 7
  %v1083 = vsub.s32 1, %v1082
  %v1084 = vrot.slane %v1038, %v1083
  %v1085 = vlaneseq
  %v1086 = vshrl.u32 %v1085, 7
  %v1087 = vsub.s32 2, %v1086
  %v1088 = vrot.slane %v1038, %v1087
  %v1089 = vlaneseq
  %v1090 = vshrl.u32 %v1089, 7
  %v1091 = vsub.s32 3, %v1090
  %v1092 = vrot.slane %v1038, %v1091
  %v1097 = vadd.f32 %v1072, %v1080
  %v1098 = vadd.f32 %v1073, %v1084
  %v1099 = vadd.f32 %v1074, %v1088
  %v1100 = vadd.f32 %v1075, %v1092
  %v1101 = vmax.f32 %v1097, 0.0
  %v1102 = vmax.f32 %v1098, 0.0
  %v1103 = vmax.f32 %v1099, 0.0
  %v1104 = vmax.f32 %v1100, 0.0
  %s1105 = smul.u32 4, 64
  %s1106 = smul.u32 %s1105, 8
  %s1107 = sshll.u32 %s1106, 4
  %1108 = dma.done %s102, %s1107
  %v1109 = vld [vmem:[#allocation4] sm:$0xff]
  %v1110 = vld [vmem:[#allocation4 + $0x8] sm:$0xff]
  %v1111 = vld [vmem:[#allocation4 + $0x10] sm:$0xff]
  %v1112 = vld [vmem:[#allocation4 + $0x18] sm:$0xff]
  %v1113 = vld [vmem:[#allocation4 + $0x20] sm:$0xff]
  %v1114 = vld [vmem:[#allocation4 + $0x28] sm:$0xff]
  %v1115 = vld [vmem:[#allocation4 + $0x30] sm:$0xff]
  %v1116 = vld [vmem:[#allocation4 + $0x38] sm:$0xff]
  %v1117 = vld [vmem:[#allocation4 + $0x40] sm:$0xff]
  %v1118 = vld [vmem:[#allocation4 + $0x48] sm:$0xff]
  %v1119 = vld [vmem:[#allocation4 + $0x50] sm:$0xff]
  %v1120 = vld [vmem:[#allocation4 + $0x58] sm:$0xff]
  %v1121 = vld [vmem:[#allocation4 + $0x60] sm:$0xff]
  %v1122 = vld [vmem:[#allocation4 + $0x68] sm:$0xff]
  %v1123 = vld [vmem:[#allocation4 + $0x70] sm:$0xff]
  %v1124 = vld [vmem:[#allocation4 + $0x78] sm:$0xff]
  %v1125 = vld [vmem:[#allocation4 + $0x80] sm:$0xff]
  %v1126 = vld [vmem:[#allocation4 + $0x88] sm:$0xff]
  %v1127 = vld [vmem:[#allocation4 + $0x90] sm:$0xff]
  %v1128 = vld [vmem:[#allocation4 + $0x98] sm:$0xff]
  %v1129 = vld [vmem:[#allocation4 + $0xa0] sm:$0xff]
  %v1130 = vld [vmem:[#allocation4 + $0xa8] sm:$0xff]
  %v1131 = vld [vmem:[#allocation4 + $0xb0] sm:$0xff]
  %v1132 = vld [vmem:[#allocation4 + $0xb8] sm:$0xff]
  %v1133 = vld [vmem:[#allocation4 + $0xc0] sm:$0xff]
  %v1134 = vld [vmem:[#allocation4 + $0xc8] sm:$0xff]
  %v1135 = vld [vmem:[#allocation4 + $0xd0] sm:$0xff]
  %v1136 = vld [vmem:[#allocation4 + $0xd8] sm:$0xff]
  %v1137 = vld [vmem:[#allocation4 + $0xe0] sm:$0xff]
  %v1138 = vld [vmem:[#allocation4 + $0xe8] sm:$0xff]
  %v1139 = vld [vmem:[#allocation4 + $0xf0] sm:$0xff]
  %v1140 = vld [vmem:[#allocation4 + $0xf8] sm:$0xff]
  %v1141 = vld [vmem:[#allocation4 + $0x100] sm:$0xff]
  %v1142 = vld [vmem:[#allocation4 + $0x108] sm:$0xff]
  %v1143 = vld [vmem:[#allocation4 + $0x110] sm:$0xff]
  %v1144 = vld [vmem:[#allocation4 + $0x118] sm:$0xff]
  %v1145 = vld [vmem:[#allocation4 + $0x120] sm:$0xff]
  %v1146 = vld [vmem:[#allocation4 + $0x128] sm:$0xff]
  %v1147 = vld [vmem:[#allocation4 + $0x130] sm:$0xff]
  %v1148 = vld [vmem:[#allocation4 + $0x138] sm:$0xff]
  %v1149 = vld [vmem:[#allocation4 + $0x140] sm:$0xff]
  %v1150 = vld [vmem:[#allocation4 + $0x148] sm:$0xff]
  %v1151 = vld [vmem:[#allocation4 + $0x150] sm:$0xff]
  %v1152 = vld [vmem:[#allocation4 + $0x158] sm:$0xff]
  %v1153 = vld [vmem:[#allocation4 + $0x160] sm:$0xff]
  %v1154 = vld [vmem:[#allocation4 + $0x168] sm:$0xff]
  %v1155 = vld [vmem:[#allocation4 + $0x170] sm:$0xff]
  %v1156 = vld [vmem:[#allocation4 + $0x178] sm:$0xff]
  %v1157 = vld [vmem:[#allocation4 + $0x180] sm:$0xff]
  %v1158 = vld [vmem:[#allocation4 + $0x188] sm:$0xff]
  %v1159 = vld [vmem:[#allocation4 + $0x190] sm:$0xff]
  %v1160 = vld [vmem:[#allocation4 + $0x198] sm:$0xff]
  %v1161 = vld [vmem:[#allocation4 + $0x1a0] sm:$0xff]
  %v1162 = vld [vmem:[#allocation4 + $0x1a8] sm:$0xff]
  %v1163 = vld [vmem:[#allocation4 + $0x1b0] sm:$0xff]
  %v1164 = vld [vmem:[#allocation4 + $0x1b8] sm:$0xff]
  %v1165 = vld [vmem:[#allocation4 + $0x1c0] sm:$0xff]
  %v1166 = vld [vmem:[#allocation4 + $0x1c8] sm:$0xff]
  %v1167 = vld [vmem:[#allocation4 + $0x1d0] sm:$0xff]
  %v1168 = vld [vmem:[#allocation4 + $0x1d8] sm:$0xff]
  %v1169 = vld [vmem:[#allocation4 + $0x1e0] sm:$0xff]
  %v1170 = vld [vmem:[#allocation4 + $0x1e8] sm:$0xff]
  %v1171 = vld [vmem:[#allocation4 + $0x1f0] sm:$0xff]
  %v1172 = vld [vmem:[#allocation4 + $0x1f8] sm:$0xff]
  %v1173 = vld [vmem:[#allocation4 + $0x200] sm:$0xff]
  %v1174 = vld [vmem:[#allocation4 + $0x208] sm:$0xff]
  %v1175 = vld [vmem:[#allocation4 + $0x210] sm:$0xff]
  %v1176 = vld [vmem:[#allocation4 + $0x218] sm:$0xff]
  %v1177 = vld [vmem:[#allocation4 + $0x220] sm:$0xff]
  %v1178 = vld [vmem:[#allocation4 + $0x228] sm:$0xff]
  %v1179 = vld [vmem:[#allocation4 + $0x230] sm:$0xff]
  %v1180 = vld [vmem:[#allocation4 + $0x238] sm:$0xff]
  %v1181 = vld [vmem:[#allocation4 + $0x240] sm:$0xff]
  %v1182 = vld [vmem:[#allocation4 + $0x248] sm:$0xff]
  %v1183 = vld [vmem:[#allocation4 + $0x250] sm:$0xff]
  %v1184 = vld [vmem:[#allocation4 + $0x258] sm:$0xff]
  %v1185 = vld [vmem:[#allocation4 + $0x260] sm:$0xff]
  %v1186 = vld [vmem:[#allocation4 + $0x268] sm:$0xff]
  %v1187 = vld [vmem:[#allocation4 + $0x270] sm:$0xff]
  %v1188 = vld [vmem:[#allocation4 + $0x278] sm:$0xff]
  %v1189 = vld [vmem:[#allocation4 + $0x280] sm:$0xff]
  %v1190 = vld [vmem:[#allocation4 + $0x288] sm:$0xff]
  %v1191 = vld [vmem:[#allocation4 + $0x290] sm:$0xff]
  %v1192 = vld [vmem:[#allocation4 + $0x298] sm:$0xff]
  %v1193 = vld [vmem:[#allocation4 + $0x2a0] sm:$0xff]
  %v1194 = vld [vmem:[#allocation4 + $0x2a8] sm:$0xff]
  %v1195 = vld [vmem:[#allocation4 + $0x2b0] sm:$0xff]
  %v1196 = vld [vmem:[#allocation4 + $0x2b8] sm:$0xff]
  %v1197 = vld [vmem:[#allocation4 + $0x2c0] sm:$0xff]
  %v1198 = vld [vmem:[#allocation4 + $0x2c8] sm:$0xff]
  %v1199 = vld [vmem:[#allocation4 + $0x2d0] sm:$0xff]
  %v1200 = vld [vmem:[#allocation4 + $0x2d8] sm:$0xff]
  %v1201 = vld [vmem:[#allocation4 + $0x2e0] sm:$0xff]
  %v1202 = vld [vmem:[#allocation4 + $0x2e8] sm:$0xff]
  %v1203 = vld [vmem:[#allocation4 + $0x2f0] sm:$0xff]
  %v1204 = vld [vmem:[#allocation4 + $0x2f8] sm:$0xff]
  %v1205 = vld [vmem:[#allocation4 + $0x300] sm:$0xff]
  %v1206 = vld [vmem:[#allocation4 + $0x308] sm:$0xff]
  %v1207 = vld [vmem:[#allocation4 + $0x310] sm:$0xff]
  %v1208 = vld [vmem:[#allocation4 + $0x318] sm:$0xff]
  %v1209 = vld [vmem:[#allocation4 + $0x320] sm:$0xff]
  %v1210 = vld [vmem:[#allocation4 + $0x328] sm:$0xff]
  %v1211 = vld [vmem:[#allocation4 + $0x330] sm:$0xff]
  %v1212 = vld [vmem:[#allocation4 + $0x338] sm:$0xff]
  %v1213 = vld [vmem:[#allocation4 + $0x340] sm:$0xff]
  %v1214 = vld [vmem:[#allocation4 + $0x348] sm:$0xff]
  %v1215 = vld [vmem:[#allocation4 + $0x350] sm:$0xff]
  %v1216 = vld [vmem:[#allocation4 + $0x358] sm:$0xff]
  %v1217 = vld [vmem:[#allocation4 + $0x360] sm:$0xff]
  %v1218 = vld [vmem:[#allocation4 + $0x368] sm:$0xff]
  %v1219 = vld [vmem:[#allocation4 + $0x370] sm:$0xff]
  %v1220 = vld [vmem:[#allocation4 + $0x378] sm:$0xff]
  %v1221 = vld [vmem:[#allocation4 + $0x380] sm:$0xff]
  %v1222 = vld [vmem:[#allocation4 + $0x388] sm:$0xff]
  %v1223 = vld [vmem:[#allocation4 + $0x390] sm:$0xff]
  %v1224 = vld [vmem:[#allocation4 + $0x398] sm:$0xff]
  %v1225 = vld [vmem:[#allocation4 + $0x3a0] sm:$0xff]
  %v1226 = vld [vmem:[#allocation4 + $0x3a8] sm:$0xff]
  %v1227 = vld [vmem:[#allocation4 + $0x3b0] sm:$0xff]
  %v1228 = vld [vmem:[#allocation4 + $0x3b8] sm:$0xff]
  %v1229 = vld [vmem:[#allocation4 + $0x3c0] sm:$0xff]
  %v1230 = vld [vmem:[#allocation4 + $0x3c8] sm:$0xff]
  %v1231 = vld [vmem:[#allocation4 + $0x3d0] sm:$0xff]
  %v1232 = vld [vmem:[#allocation4 + $0x3d8] sm:$0xff]
  %v1233 = vld [vmem:[#allocation4 + $0x3e0] sm:$0xff]
  %v1234 = vld [vmem:[#allocation4 + $0x3e8] sm:$0xff]
  %v1235 = vld [vmem:[#allocation4 + $0x3f0] sm:$0xff]
  %v1236 = vld [vmem:[#allocation4 + $0x3f8] sm:$0xff]
  %v1237 = vld [vmem:[#allocation4 + $0x400] sm:$0xff]
  %v1238 = vld [vmem:[#allocation4 + $0x408] sm:$0xff]
  %v1239 = vld [vmem:[#allocation4 + $0x410] sm:$0xff]
  %v1240 = vld [vmem:[#allocation4 + $0x418] sm:$0xff]
  %v1241 = vld [vmem:[#allocation4 + $0x420] sm:$0xff]
  %v1242 = vld [vmem:[#allocation4 + $0x428] sm:$0xff]
  %v1243 = vld [vmem:[#allocation4 + $0x430] sm:$0xff]
  %v1244 = vld [vmem:[#allocation4 + $0x438] sm:$0xff]
  %v1245 = vld [vmem:[#allocation4 + $0x440] sm:$0xff]
  %v1246 = vld [vmem:[#allocation4 + $0x448] sm:$0xff]
  %v1247 = vld [vmem:[#allocation4 + $0x450] sm:$0xff]
  %v1248 = vld [vmem:[#allocation4 + $0x458] sm:$0xff]
  %v1249 = vld [vmem:[#allocation4 + $0x460] sm:$0xff]
  %v1250 = vld [vmem:[#allocation4 + $0x468] sm:$0xff]
  %v1251 = vld [vmem:[#allocation4 + $0x470] sm:$0xff]
  %v1252 = vld [vmem:[#allocation4 + $0x478] sm:$0xff]
  %v1253 = vld [vmem:[#allocation4 + $0x480] sm:$0xff]
  %v1254 = vld [vmem:[#allocation4 + $0x488] sm:$0xff]
  %v1255 = vld [vmem:[#allocation4 + $0x490] sm:$0xff]
  %v1256 = vld [vmem:[#allocation4 + $0x498] sm:$0xff]
  %v1257 = vld [vmem:[#allocation4 + $0x4a0] sm:$0xff]
  %v1258 = vld [vmem:[#allocation4 + $0x4a8] sm:$0xff]
  %v1259 = vld [vmem:[#allocation4 + $0x4b0] sm:$0xff]
  %v1260 = vld [vmem:[#allocation4 + $0x4b8] sm:$0xff]
  %v1261 = vld [vmem:[#allocation4 + $0x4c0] sm:$0xff]
  %v1262 = vld [vmem:[#allocation4 + $0x4c8] sm:$0xff]
  %v1263 = vld [vmem:[#allocation4 + $0x4d0] sm:$0xff]
  %v1264 = vld [vmem:[#allocation4 + $0x4d8] sm:$0xff]
  %v1265 = vld [vmem:[#allocation4 + $0x4e0] sm:$0xff]
  %v1266 = vld [vmem:[#allocation4 + $0x4e8] sm:$0xff]
  %v1267 = vld [vmem:[#allocation4 + $0x4f0] sm:$0xff]
  %v1268 = vld [vmem:[#allocation4 + $0x4f8] sm:$0xff]
  %v1269 = vld [vmem:[#allocation4 + $0x500] sm:$0xff]
  %v1270 = vld [vmem:[#allocation4 + $0x508] sm:$0xff]
  %v1271 = vld [vmem:[#allocation4 + $0x510] sm:$0xff]
  %v1272 = vld [vmem:[#allocation4 + $0x518] sm:$0xff]
  %v1273 = vld [vmem:[#allocation4 + $0x520] sm:$0xff]
  %v1274 = vld [vmem:[#allocation4 + $0x528] sm:$0xff]
  %v1275 = vld [vmem:[#allocation4 + $0x530] sm:$0xff]
  %v1276 = vld [vmem:[#allocation4 + $0x538] sm:$0xff]
  %v1277 = vld [vmem:[#allocation4 + $0x540] sm:$0xff]
  %v1278 = vld [vmem:[#allocation4 + $0x548] sm:$0xff]
  %v1279 = vld [vmem:[#allocation4 + $0x550] sm:$0xff]
  %v1280 = vld [vmem:[#allocation4 + $0x558] sm:$0xff]
  %v1281 = vld [vmem:[#allocation4 + $0x560] sm:$0xff]
  %v1282 = vld [vmem:[#allocation4 + $0x568] sm:$0xff]
  %v1283 = vld [vmem:[#allocation4 + $0x570] sm:$0xff]
  %v1284 = vld [vmem:[#allocation4 + $0x578] sm:$0xff]
  %v1285 = vld [vmem:[#allocation4 + $0x580] sm:$0xff]
  %v1286 = vld [vmem:[#allocation4 + $0x588] sm:$0xff]
  %v1287 = vld [vmem:[#allocation4 + $0x590] sm:$0xff]
  %v1288 = vld [vmem:[#allocation4 + $0x598] sm:$0xff]
  %v1289 = vld [vmem:[#allocation4 + $0x5a0] sm:$0xff]
  %v1290 = vld [vmem:[#allocation4 + $0x5a8] sm:$0xff]
  %v1291 = vld [vmem:[#allocation4 + $0x5b0] sm:$0xff]
  %v1292 = vld [vmem:[#allocation4 + $0x5b8] sm:$0xff]
  %v1293 = vld [vmem:[#allocation4 + $0x5c0] sm:$0xff]
  %v1294 = vld [vmem:[#allocation4 + $0x5c8] sm:$0xff]
  %v1295 = vld [vmem:[#allocation4 + $0x5d0] sm:$0xff]
  %v1296 = vld [vmem:[#allocation4 + $0x5d8] sm:$0xff]
  %v1297 = vld [vmem:[#allocation4 + $0x5e0] sm:$0xff]
  %v1298 = vld [vmem:[#allocation4 + $0x5e8] sm:$0xff]
  %v1299 = vld [vmem:[#allocation4 + $0x5f0] sm:$0xff]
  %v1300 = vld [vmem:[#allocation4 + $0x5f8] sm:$0xff]
  %v1301 = vld [vmem:[#allocation4 + $0x600] sm:$0xff]
  %v1302 = vld [vmem:[#allocation4 + $0x608] sm:$0xff]
  %v1303 = vld [vmem:[#allocation4 + $0x610] sm:$0xff]
  %v1304 = vld [vmem:[#allocation4 + $0x618] sm:$0xff]
  %v1305 = vld [vmem:[#allocation4 + $0x620] sm:$0xff]
  %v1306 = vld [vmem:[#allocation4 + $0x628] sm:$0xff]
  %v1307 = vld [vmem:[#allocation4 + $0x630] sm:$0xff]
  %v1308 = vld [vmem:[#allocation4 + $0x638] sm:$0xff]
  %v1309 = vld [vmem:[#allocation4 + $0x640] sm:$0xff]
  %v1310 = vld [vmem:[#allocation4 + $0x648] sm:$0xff]
  %v1311 = vld [vmem:[#allocation4 + $0x650] sm:$0xff]
  %v1312 = vld [vmem:[#allocation4 + $0x658] sm:$0xff]
  %v1313 = vld [vmem:[#allocation4 + $0x660] sm:$0xff]
  %v1314 = vld [vmem:[#allocation4 + $0x668] sm:$0xff]
  %v1315 = vld [vmem:[#allocation4 + $0x670] sm:$0xff]
  %v1316 = vld [vmem:[#allocation4 + $0x678] sm:$0xff]
  %v1317 = vld [vmem:[#allocation4 + $0x680] sm:$0xff]
  %v1318 = vld [vmem:[#allocation4 + $0x688] sm:$0xff]
  %v1319 = vld [vmem:[#allocation4 + $0x690] sm:$0xff]
  %v1320 = vld [vmem:[#allocation4 + $0x698] sm:$0xff]
  %v1321 = vld [vmem:[#allocation4 + $0x6a0] sm:$0xff]
  %v1322 = vld [vmem:[#allocation4 + $0x6a8] sm:$0xff]
  %v1323 = vld [vmem:[#allocation4 + $0x6b0] sm:$0xff]
  %v1324 = vld [vmem:[#allocation4 + $0x6b8] sm:$0xff]
  %v1325 = vld [vmem:[#allocation4 + $0x6c0] sm:$0xff]
  %v1326 = vld [vmem:[#allocation4 + $0x6c8] sm:$0xff]
  %v1327 = vld [vmem:[#allocation4 + $0x6d0] sm:$0xff]
  %v1328 = vld [vmem:[#allocation4 + $0x6d8] sm:$0xff]
  %v1329 = vld [vmem:[#allocation4 + $0x6e0] sm:$0xff]
  %v1330 = vld [vmem:[#allocation4 + $0x6e8] sm:$0xff]
  %v1331 = vld [vmem:[#allocation4 + $0x6f0] sm:$0xff]
  %v1332 = vld [vmem:[#allocation4 + $0x6f8] sm:$0xff]
  %v1333 = vld [vmem:[#allocation4 + $0x700] sm:$0xff]
  %v1334 = vld [vmem:[#allocation4 + $0x708] sm:$0xff]
  %v1335 = vld [vmem:[#allocation4 + $0x710] sm:$0xff]
  %v1336 = vld [vmem:[#allocation4 + $0x718] sm:$0xff]
  %v1337 = vld [vmem:[#allocation4 + $0x720] sm:$0xff]
  %v1338 = vld [vmem:[#allocation4 + $0x728] sm:$0xff]
  %v1339 = vld [vmem:[#allocation4 + $0x730] sm:$0xff]
  %v1340 = vld [vmem:[#allocation4 + $0x738] sm:$0xff]
  %v1341 = vld [vmem:[#allocation4 + $0x740] sm:$0xff]
  %v1342 = vld [vmem:[#allocation4 + $0x748] sm:$0xff]
  %v1343 = vld [vmem:[#allocation4 + $0x750] sm:$0xff]
  %v1344 = vld [vmem:[#allocation4 + $0x758] sm:$0xff]
  %v1345 = vld [vmem:[#allocation4 + $0x760] sm:$0xff]
  %v1346 = vld [vmem:[#allocation4 + $0x768] sm:$0xff]
  %v1347 = vld [vmem:[#allocation4 + $0x770] sm:$0xff]
  %v1348 = vld [vmem:[#allocation4 + $0x778] sm:$0xff]
  %v1349 = vld [vmem:[#allocation4 + $0x780] sm:$0xff]
  %v1350 = vld [vmem:[#allocation4 + $0x788] sm:$0xff]
  %v1351 = vld [vmem:[#allocation4 + $0x790] sm:$0xff]
  %v1352 = vld [vmem:[#allocation4 + $0x798] sm:$0xff]
  %v1353 = vld [vmem:[#allocation4 + $0x7a0] sm:$0xff]
  %v1354 = vld [vmem:[#allocation4 + $0x7a8] sm:$0xff]
  %v1355 = vld [vmem:[#allocation4 + $0x7b0] sm:$0xff]
  %v1356 = vld [vmem:[#allocation4 + $0x7b8] sm:$0xff]
  %v1357 = vld [vmem:[#allocation4 + $0x7c0] sm:$0xff]
  %v1358 = vld [vmem:[#allocation4 + $0x7c8] sm:$0xff]
  %v1359 = vld [vmem:[#allocation4 + $0x7d0] sm:$0xff]
  %v1360 = vld [vmem:[#allocation4 + $0x7d8] sm:$0xff]
  %v1361 = vld [vmem:[#allocation4 + $0x7e0] sm:$0xff]
  %v1362 = vld [vmem:[#allocation4 + $0x7e8] sm:$0xff]
  %v1363 = vld [vmem:[#allocation4 + $0x7f0] sm:$0xff]
  %v1364 = vld [vmem:[#allocation4 + $0x7f8] sm:$0xff]
  %v1365 = vpack.c.bf16 %v1101, %v1101
  %v1366 = vpack.c.bf16 %v1102, %v1102
  %v1367 = vpack.c.bf16 %v1103, %v1103
  %v1368 = vpack.c.bf16 %v1104, %v1104
  %v1625 = vunpack.c.l.b16 %v1109
  %v1626 = vunpack.c.h.b16 %v1109
  %v1627 = vunpack.c.l.b16 %v1110
  %v1628 = vunpack.c.h.b16 %v1110
  %v1629 = vunpack.c.l.b16 %v1111
  %v1630 = vunpack.c.h.b16 %v1111
  %v1631 = vunpack.c.l.b16 %v1112
  %v1632 = vunpack.c.h.b16 %v1112
  %v1633 = vunpack.c.l.b16 %v1113
  %v1634 = vunpack.c.h.b16 %v1113
  %v1635 = vunpack.c.l.b16 %v1114
  %v1636 = vunpack.c.h.b16 %v1114
  %v1637 = vunpack.c.l.b16 %v1115
  %v1638 = vunpack.c.h.b16 %v1115
  %v1639 = vunpack.c.l.b16 %v1116
  %v1640 = vunpack.c.h.b16 %v1116
  %v1641 = vunpack.c.l.b16 %v1117
  %v1642 = vunpack.c.h.b16 %v1117
  %v1643 = vunpack.c.l.b16 %v1118
  %v1644 = vunpack.c.h.b16 %v1118
  %v1645 = vunpack.c.l.b16 %v1119
  %v1646 = vunpack.c.h.b16 %v1119
  %v1647 = vunpack.c.l.b16 %v1120
  %v1648 = vunpack.c.h.b16 %v1120
  %v1649 = vunpack.c.l.b16 %v1121
  %v1650 = vunpack.c.h.b16 %v1121
  %v1651 = vunpack.c.l.b16 %v1122
  %v1652 = vunpack.c.h.b16 %v1122
  %v1653 = vunpack.c.l.b16 %v1123
  %v1654 = vunpack.c.h.b16 %v1123
  %v1655 = vunpack.c.l.b16 %v1124
  %v1656 = vunpack.c.h.b16 %v1124
  %v1657 = vunpack.c.l.b16 %v1125
  %v1658 = vunpack.c.h.b16 %v1125
  %v1659 = vunpack.c.l.b16 %v1126
  %v1660 = vunpack.c.h.b16 %v1126
  %v1661 = vunpack.c.l.b16 %v1127
  %v1662 = vunpack.c.h.b16 %v1127
  %v1663 = vunpack.c.l.b16 %v1128
  %v1664 = vunpack.c.h.b16 %v1128
  %v1665 = vunpack.c.l.b16 %v1129
  %v1666 = vunpack.c.h.b16 %v1129
  %v1667 = vunpack.c.l.b16 %v1130
  %v1668 = vunpack.c.h.b16 %v1130
  %v1669 = vunpack.c.l.b16 %v1131
  %v1670 = vunpack.c.h.b16 %v1131
  %v1671 = vunpack.c.l.b16 %v1132
  %v1672 = vunpack.c.h.b16 %v1132
  %v1673 = vunpack.c.l.b16 %v1133
  %v1674 = vunpack.c.h.b16 %v1133
  %v1675 = vunpack.c.l.b16 %v1134
  %v1676 = vunpack.c.h.b16 %v1134
  %v1677 = vunpack.c.l.b16 %v1135
  %v1678 = vunpack.c.h.b16 %v1135
  %v1679 = vunpack.c.l.b16 %v1136
  %v1680 = vunpack.c.h.b16 %v1136
  %v1681 = vunpack.c.l.b16 %v1137
  %v1682 = vunpack.c.h.b16 %v1137
  %v1683 = vunpack.c.l.b16 %v1138
  %v1684 = vunpack.c.h.b16 %v1138
  %v1685 = vunpack.c.l.b16 %v1139
  %v1686 = vunpack.c.h.b16 %v1139
  %v1687 = vunpack.c.l.b16 %v1140
  %v1688 = vunpack.c.h.b16 %v1140
  %v1689 = vunpack.c.l.b16 %v1141
  %v1690 = vunpack.c.h.b16 %v1141
  %v1691 = vunpack.c.l.b16 %v1142
  %v1692 = vunpack.c.h.b16 %v1142
  %v1693 = vunpack.c.l.b16 %v1143
  %v1694 = vunpack.c.h.b16 %v1143
  %v1695 = vunpack.c.l.b16 %v1144
  %v1696 = vunpack.c.h.b16 %v1144
  %v1697 = vunpack.c.l.b16 %v1145
  %v1698 = vunpack.c.h.b16 %v1145
  %v1699 = vunpack.c.l.b16 %v1146
  %v1700 = vunpack.c.h.b16 %v1146
  %v1701 = vunpack.c.l.b16 %v1147
  %v1702 = vunpack.c.h.b16 %v1147
  %v1703 = vunpack.c.l.b16 %v1148
  %v1704 = vunpack.c.h.b16 %v1148
  %v1705 = vunpack.c.l.b16 %v1149
  %v1706 = vunpack.c.h.b16 %v1149
  %v1707 = vunpack.c.l.b16 %v1150
  %v1708 = vunpack.c.h.b16 %v1150
  %v1709 = vunpack.c.l.b16 %v1151
  %v1710 = vunpack.c.h.b16 %v1151
  %v1711 = vunpack.c.l.b16 %v1152
  %v1712 = vunpack.c.h.b16 %v1152
  %v1713 = vunpack.c.l.b16 %v1153
  %v1714 = vunpack.c.h.b16 %v1153
  %v1715 = vunpack.c.l.b16 %v1154
  %v1716 = vunpack.c.h.b16 %v1154
  %v1717 = vunpack.c.l.b16 %v1155
  %v1718 = vunpack.c.h.b16 %v1155
  %v1719 = vunpack.c.l.b16 %v1156
  %v1720 = vunpack.c.h.b16 %v1156
  %v1721 = vunpack.c.l.b16 %v1157
  %v1722 = vunpack.c.h.b16 %v1157
  %v1723 = vunpack.c.l.b16 %v1158
  %v1724 = vunpack.c.h.b16 %v1158
  %v1725 = vunpack.c.l.b16 %v1159
  %v1726 = vunpack.c.h.b16 %v1159
  %v1727 = vunpack.c.l.b16 %v1160
  %v1728 = vunpack.c.h.b16 %v1160
  %v1729 = vunpack.c.l.b16 %v1161
  %v1730 = vunpack.c.h.b16 %v1161
  %v1731 = vunpack.c.l.b16 %v1162
  %v1732 = vunpack.c.h.b16 %v1162
  %v1733 = vunpack.c.l.b16 %v1163
  %v1734 = vunpack.c.h.b16 %v1163
  %v1735 = vunpack.c.l.b16 %v1164
  %v1736 = vunpack.c.h.b16 %v1164
  %v1737 = vunpack.c.l.b16 %v1165
  %v1738 = vunpack.c.h.b16 %v1165
  %v1739 = vunpack.c.l.b16 %v1166
  %v1740 = vunpack.c.h.b16 %v1166
  %v1741 = vunpack.c.l.b16 %v1167
  %v1742 = vunpack.c.h.b16 %v1167
  %v1743 = vunpack.c.l.b16 %v1168
  %v1744 = vunpack.c.h.b16 %v1168
  %v1745 = vunpack.c.l.b16 %v1169
  %v1746 = vunpack.c.h.b16 %v1169
  %v1747 = vunpack.c.l.b16 %v1170
  %v1748 = vunpack.c.h.b16 %v1170
  %v1749 = vunpack.c.l.b16 %v1171
  %v1750 = vunpack.c.h.b16 %v1171
  %v1751 = vunpack.c.l.b16 %v1172
  %v1752 = vunpack.c.h.b16 %v1172
  %v1753 = vunpack.c.l.b16 %v1173
  %v1754 = vunpack.c.h.b16 %v1173
  %v1755 = vunpack.c.l.b16 %v1174
  %v1756 = vunpack.c.h.b16 %v1174
  %v1757 = vunpack.c.l.b16 %v1175
  %v1758 = vunpack.c.h.b16 %v1175
  %v1759 = vunpack.c.l.b16 %v1176
  %v1760 = vunpack.c.h.b16 %v1176
  %v1761 = vunpack.c.l.b16 %v1177
  %v1762 = vunpack.c.h.b16 %v1177
  %v1763 = vunpack.c.l.b16 %v1178
  %v1764 = vunpack.c.h.b16 %v1178
  %v1765 = vunpack.c.l.b16 %v1179
  %v1766 = vunpack.c.h.b16 %v1179
  %v1767 = vunpack.c.l.b16 %v1180
  %v1768 = vunpack.c.h.b16 %v1180
  %v1769 = vunpack.c.l.b16 %v1181
  %v1770 = vunpack.c.h.b16 %v1181
  %v1771 = vunpack.c.l.b16 %v1182
  %v1772 = vunpack.c.h.b16 %v1182
  %v1773 = vunpack.c.l.b16 %v1183
  %v1774 = vunpack.c.h.b16 %v1183
  %v1775 = vunpack.c.l.b16 %v1184
  %v1776 = vunpack.c.h.b16 %v1184
  %v1777 = vunpack.c.l.b16 %v1185
  %v1778 = vunpack.c.h.b16 %v1185
  %v1779 = vunpack.c.l.b16 %v1186
  %v1780 = vunpack.c.h.b16 %v1186
  %v1781 = vunpack.c.l.b16 %v1187
  %v1782 = vunpack.c.h.b16 %v1187
  %v1783 = vunpack.c.l.b16 %v1188
  %v1784 = vunpack.c.h.b16 %v1188
  %v1785 = vunpack.c.l.b16 %v1189
  %v1786 = vunpack.c.h.b16 %v1189
  %v1787 = vunpack.c.l.b16 %v1190
  %v1788 = vunpack.c.h.b16 %v1190
  %v1789 = vunpack.c.l.b16 %v1191
  %v1790 = vunpack.c.h.b16 %v1191
  %v1791 = vunpack.c.l.b16 %v1192
  %v1792 = vunpack.c.h.b16 %v1192
  %v1793 = vunpack.c.l.b16 %v1193
  %v1794 = vunpack.c.h.b16 %v1193
  %v1795 = vunpack.c.l.b16 %v1194
  %v1796 = vunpack.c.h.b16 %v1194
  %v1797 = vunpack.c.l.b16 %v1195
  %v1798 = vunpack.c.h.b16 %v1195
  %v1799 = vunpack.c.l.b16 %v1196
  %v1800 = vunpack.c.h.b16 %v1196
  %v1801 = vunpack.c.l.b16 %v1197
  %v1802 = vunpack.c.h.b16 %v1197
  %v1803 = vunpack.c.l.b16 %v1198
  %v1804 = vunpack.c.h.b16 %v1198
  %v1805 = vunpack.c.l.b16 %v1199
  %v1806 = vunpack.c.h.b16 %v1199
  %v1807 = vunpack.c.l.b16 %v1200
  %v1808 = vunpack.c.h.b16 %v1200
  %v1809 = vunpack.c.l.b16 %v1201
  %v1810 = vunpack.c.h.b16 %v1201
  %v1811 = vunpack.c.l.b16 %v1202
  %v1812 = vunpack.c.h.b16 %v1202
  %v1813 = vunpack.c.l.b16 %v1203
  %v1814 = vunpack.c.h.b16 %v1203
  %v1815 = vunpack.c.l.b16 %v1204
  %v1816 = vunpack.c.h.b16 %v1204
  %v1817 = vunpack.c.l.b16 %v1205
  %v1818 = vunpack.c.h.b16 %v1205
  %v1819 = vunpack.c.l.b16 %v1206
  %v1820 = vunpack.c.h.b16 %v1206
  %v1821 = vunpack.c.l.b16 %v1207
  %v1822 = vunpack.c.h.b16 %v1207
  %v1823 = vunpack.c.l.b16 %v1208
  %v1824 = vunpack.c.h.b16 %v1208
  %v1825 = vunpack.c.l.b16 %v1209
  %v1826 = vunpack.c.h.b16 %v1209
  %v1827 = vunpack.c.l.b16 %v1210
  %v1828 = vunpack.c.h.b16 %v1210
  %v1829 = vunpack.c.l.b16 %v1211
  %v1830 = vunpack.c.h.b16 %v1211
  %v1831 = vunpack.c.l.b16 %v1212
  %v1832 = vunpack.c.h.b16 %v1212
  %v1833 = vunpack.c.l.b16 %v1213
  %v1834 = vunpack.c.h.b16 %v1213
  %v1835 = vunpack.c.l.b16 %v1214
  %v1836 = vunpack.c.h.b16 %v1214
  %v1837 = vunpack.c.l.b16 %v1215
  %v1838 = vunpack.c.h.b16 %v1215
  %v1839 = vunpack.c.l.b16 %v1216
  %v1840 = vunpack.c.h.b16 %v1216
  %v1841 = vunpack.c.l.b16 %v1217
  %v1842 = vunpack.c.h.b16 %v1217
  %v1843 = vunpack.c.l.b16 %v1218
  %v1844 = vunpack.c.h.b16 %v1218
  %v1845 = vunpack.c.l.b16 %v1219
  %v1846 = vunpack.c.h.b16 %v1219
  %v1847 = vunpack.c.l.b16 %v1220
  %v1848 = vunpack.c.h.b16 %v1220
  %v1849 = vunpack.c.l.b16 %v1221
  %v1850 = vunpack.c.h.b16 %v1221
  %v1851 = vunpack.c.l.b16 %v1222
  %v1852 = vunpack.c.h.b16 %v1222
  %v1853 = vunpack.c.l.b16 %v1223
  %v1854 = vunpack.c.h.b16 %v1223
  %v1855 = vunpack.c.l.b16 %v1224
  %v1856 = vunpack.c.h.b16 %v1224
  %v1857 = vunpack.c.l.b16 %v1225
  %v1858 = vunpack.c.h.b16 %v1225
  %v1859 = vunpack.c.l.b16 %v1226
  %v1860 = vunpack.c.h.b16 %v1226
  %v1861 = vunpack.c.l.b16 %v1227
  %v1862 = vunpack.c.h.b16 %v1227
  %v1863 = vunpack.c.l.b16 %v1228
  %v1864 = vunpack.c.h.b16 %v1228
  %v1865 = vunpack.c.l.b16 %v1229
  %v1866 = vunpack.c.h.b16 %v1229
  %v1867 = vunpack.c.l.b16 %v1230
  %v1868 = vunpack.c.h.b16 %v1230
  %v1869 = vunpack.c.l.b16 %v1231
  %v1870 = vunpack.c.h.b16 %v1231
  %v1871 = vunpack.c.l.b16 %v1232
  %v1872 = vunpack.c.h.b16 %v1232
  %v1873 = vunpack.c.l.b16 %v1233
  %v1874 = vunpack.c.h.b16 %v1233
  %v1875 = vunpack.c.l.b16 %v1234
  %v1876 = vunpack.c.h.b16 %v1234
  %v1877 = vunpack.c.l.b16 %v1235
  %v1878 = vunpack.c.h.b16 %v1235
  %v1879 = vunpack.c.l.b16 %v1236
  %v1880 = vunpack.c.h.b16 %v1236
  %v1881 = vunpack.c.l.b16 %v1237
  %v1882 = vunpack.c.h.b16 %v1237
  %v1883 = vunpack.c.l.b16 %v1238
  %v1884 = vunpack.c.h.b16 %v1238
  %v1885 = vunpack.c.l.b16 %v1239
  %v1886 = vunpack.c.h.b16 %v1239
  %v1887 = vunpack.c.l.b16 %v1240
  %v1888 = vunpack.c.h.b16 %v1240
  %v1889 = vunpack.c.l.b16 %v1241
  %v1890 = vunpack.c.h.b16 %v1241
  %v1891 = vunpack.c.l.b16 %v1242
  %v1892 = vunpack.c.h.b16 %v1242
  %v1893 = vunpack.c.l.b16 %v1243
  %v1894 = vunpack.c.h.b16 %v1243
  %v1895 = vunpack.c.l.b16 %v1244
  %v1896 = vunpack.c.h.b16 %v1244
  %v1897 = vunpack.c.l.b16 %v1245
  %v1898 = vunpack.c.h.b16 %v1245
  %v1899 = vunpack.c.l.b16 %v1246
  %v1900 = vunpack.c.h.b16 %v1246
  %v1901 = vunpack.c.l.b16 %v1247
  %v1902 = vunpack.c.h.b16 %v1247
  %v1903 = vunpack.c.l.b16 %v1248
  %v1904 = vunpack.c.h.b16 %v1248
  %v1905 = vunpack.c.l.b16 %v1249
  %v1906 = vunpack.c.h.b16 %v1249
  %v1907 = vunpack.c.l.b16 %v1250
  %v1908 = vunpack.c.h.b16 %v1250
  %v1909 = vunpack.c.l.b16 %v1251
  %v1910 = vunpack.c.h.b16 %v1251
  %v1911 = vunpack.c.l.b16 %v1252
  %v1912 = vunpack.c.h.b16 %v1252
  %v1913 = vunpack.c.l.b16 %v1253
  %v1914 = vunpack.c.h.b16 %v1253
  %v1915 = vunpack.c.l.b16 %v1254
  %v1916 = vunpack.c.h.b16 %v1254
  %v1917 = vunpack.c.l.b16 %v1255
  %v1918 = vunpack.c.h.b16 %v1255
  %v1919 = vunpack.c.l.b16 %v1256
  %v1920 = vunpack.c.h.b16 %v1256
  %v1921 = vunpack.c.l.b16 %v1257
  %v1922 = vunpack.c.h.b16 %v1257
  %v1923 = vunpack.c.l.b16 %v1258
  %v1924 = vunpack.c.h.b16 %v1258
  %v1925 = vunpack.c.l.b16 %v1259
  %v1926 = vunpack.c.h.b16 %v1259
  %v1927 = vunpack.c.l.b16 %v1260
  %v1928 = vunpack.c.h.b16 %v1260
  %v1929 = vunpack.c.l.b16 %v1261
  %v1930 = vunpack.c.h.b16 %v1261
  %v1931 = vunpack.c.l.b16 %v1262
  %v1932 = vunpack.c.h.b16 %v1262
  %v1933 = vunpack.c.l.b16 %v1263
  %v1934 = vunpack.c.h.b16 %v1263
  %v1935 = vunpack.c.l.b16 %v1264
  %v1936 = vunpack.c.h.b16 %v1264
  %v1937 = vunpack.c.l.b16 %v1265
  %v1938 = vunpack.c.h.b16 %v1265
  %v1939 = vunpack.c.l.b16 %v1266
  %v1940 = vunpack.c.h.b16 %v1266
  %v1941 = vunpack.c.l.b16 %v1267
  %v1942 = vunpack.c.h.b16 %v1267
  %v1943 = vunpack.c.l.b16 %v1268
  %v1944 = vunpack.c.h.b16 %v1268
  %v1945 = vunpack.c.l.b16 %v1269
  %v1946 = vunpack.c.h.b16 %v1269
  %v1947 = vunpack.c.l.b16 %v1270
  %v1948 = vunpack.c.h.b16 %v1270
  %v1949 = vunpack.c.l.b16 %v1271
  %v1950 = vunpack.c.h.b16 %v1271
  %v1951 = vunpack.c.l.b16 %v1272
  %v1952 = vunpack.c.h.b16 %v1272
  %v1953 = vunpack.c.l.b16 %v1273
  %v1954 = vunpack.c.h.b16 %v1273
  %v1955 = vunpack.c.l.b16 %v1274
  %v1956 = vunpack.c.h.b16 %v1274
  %v1957 = vunpack.c.l.b16 %v1275
  %v1958 = vunpack.c.h.b16 %v1275
  %v1959 = vunpack.c.l.b16 %v1276
  %v1960 = vunpack.c.h.b16 %v1276
  %v1961 = vunpack.c.l.b16 %v1277
  %v1962 = vunpack.c.h.b16 %v1277
  %v1963 = vunpack.c.l.b16 %v1278
  %v1964 = vunpack.c.h.b16 %v1278
  %v1965 = vunpack.c.l.b16 %v1279
  %v1966 = vunpack.c.h.b16 %v1279
  %v1967 = vunpack.c.l.b16 %v1280
  %v1968 = vunpack.c.h.b16 %v1280
  %v1969 = vunpack.c.l.b16 %v1281
  %v1970 = vunpack.c.h.b16 %v1281
  %v1971 = vunpack.c.l.b16 %v1282
  %v1972 = vunpack.c.h.b16 %v1282
  %v1973 = vunpack.c.l.b16 %v1283
  %v1974 = vunpack.c.h.b16 %v1283
  %v1975 = vunpack.c.l.b16 %v1284
  %v1976 = vunpack.c.h.b16 %v1284
  %v1977 = vunpack.c.l.b16 %v1285
  %v1978 = vunpack.c.h.b16 %v1285
  %v1979 = vunpack.c.l.b16 %v1286
  %v1980 = vunpack.c.h.b16 %v1286
  %v1981 = vunpack.c.l.b16 %v1287
  %v1982 = vunpack.c.h.b16 %v1287
  %v1983 = vunpack.c.l.b16 %v1288
  %v1984 = vunpack.c.h.b16 %v1288
  %v1985 = vunpack.c.l.b16 %v1289
  %v1986 = vunpack.c.h.b16 %v1289
  %v1987 = vunpack.c.l.b16 %v1290
  %v1988 = vunpack.c.h.b16 %v1290
  %v1989 = vunpack.c.l.b16 %v1291
  %v1990 = vunpack.c.h.b16 %v1291
  %v1991 = vunpack.c.l.b16 %v1292
  %v1992 = vunpack.c.h.b16 %v1292
  %v1993 = vunpack.c.l.b16 %v1293
  %v1994 = vunpack.c.h.b16 %v1293
  %v1995 = vunpack.c.l.b16 %v1294
  %v1996 = vunpack.c.h.b16 %v1294
  %v1997 = vunpack.c.l.b16 %v1295
  %v1998 = vunpack.c.h.b16 %v1295
  %v1999 = vunpack.c.l.b16 %v1296
  %v2000 = vunpack.c.h.b16 %v1296
  %v2001 = vunpack.c.l.b16 %v1297
  %v2002 = vunpack.c.h.b16 %v1297
  %v2003 = vunpack.c.l.b16 %v1298
  %v2004 = vunpack.c.h.b16 %v1298
  %v2005 = vunpack.c.l.b16 %v1299
  %v2006 = vunpack.c.h.b16 %v1299
  %v2007 = vunpack.c.l.b16 %v1300
  %v2008 = vunpack.c.h.b16 %v1300
  %v2009 = vunpack.c.l.b16 %v1301
  %v2010 = vunpack.c.h.b16 %v1301
  %v2011 = vunpack.c.l.b16 %v1302
  %v2012 = vunpack.c.h.b16 %v1302
  %v2013 = vunpack.c.l.b16 %v1303
  %v2014 = vunpack.c.h.b16 %v1303
  %v2015 = vunpack.c.l.b16 %v1304
  %v2016 = vunpack.c.h.b16 %v1304
  %v2017 = vunpack.c.l.b16 %v1305
  %v2018 = vunpack.c.h.b16 %v1305
  %v2019 = vunpack.c.l.b16 %v1306
  %v2020 = vunpack.c.h.b16 %v1306
  %v2021 = vunpack.c.l.b16 %v1307
  %v2022 = vunpack.c.h.b16 %v1307
  %v2023 = vunpack.c.l.b16 %v1308
  %v2024 = vunpack.c.h.b16 %v1308
  %v2025 = vunpack.c.l.b16 %v1309
  %v2026 = vunpack.c.h.b16 %v1309
  %v2027 = vunpack.c.l.b16 %v1310
  %v2028 = vunpack.c.h.b16 %v1310
  %v2029 = vunpack.c.l.b16 %v1311
  %v2030 = vunpack.c.h.b16 %v1311
  %v2031 = vunpack.c.l.b16 %v1312
  %v2032 = vunpack.c.h.b16 %v1312
  %v2033 = vunpack.c.l.b16 %v1313
  %v2034 = vunpack.c.h.b16 %v1313
  %v2035 = vunpack.c.l.b16 %v1314
  %v2036 = vunpack.c.h.b16 %v1314
  %v2037 = vunpack.c.l.b16 %v1315
  %v2038 = vunpack.c.h.b16 %v1315
  %v2039 = vunpack.c.l.b16 %v1316
  %v2040 = vunpack.c.h.b16 %v1316
  %v2041 = vunpack.c.l.b16 %v1317
  %v2042 = vunpack.c.h.b16 %v1317
  %v2043 = vunpack.c.l.b16 %v1318
  %v2044 = vunpack.c.h.b16 %v1318
  %v2045 = vunpack.c.l.b16 %v1319
  %v2046 = vunpack.c.h.b16 %v1319
  %v2047 = vunpack.c.l.b16 %v1320
  %v2048 = vunpack.c.h.b16 %v1320
  %v2049 = vunpack.c.l.b16 %v1321
  %v2050 = vunpack.c.h.b16 %v1321
  %v2051 = vunpack.c.l.b16 %v1322
  %v2052 = vunpack.c.h.b16 %v1322
  %v2053 = vunpack.c.l.b16 %v1323
  %v2054 = vunpack.c.h.b16 %v1323
  %v2055 = vunpack.c.l.b16 %v1324
  %v2056 = vunpack.c.h.b16 %v1324
  %v2057 = vunpack.c.l.b16 %v1325
  %v2058 = vunpack.c.h.b16 %v1325
  %v2059 = vunpack.c.l.b16 %v1326
  %v2060 = vunpack.c.h.b16 %v1326
  %v2061 = vunpack.c.l.b16 %v1327
  %v2062 = vunpack.c.h.b16 %v1327
  %v2063 = vunpack.c.l.b16 %v1328
  %v2064 = vunpack.c.h.b16 %v1328
  %v2065 = vunpack.c.l.b16 %v1329
  %v2066 = vunpack.c.h.b16 %v1329
  %v2067 = vunpack.c.l.b16 %v1330
  %v2068 = vunpack.c.h.b16 %v1330
  %v2069 = vunpack.c.l.b16 %v1331
  %v2070 = vunpack.c.h.b16 %v1331
  %v2071 = vunpack.c.l.b16 %v1332
  %v2072 = vunpack.c.h.b16 %v1332
  %v2073 = vunpack.c.l.b16 %v1333
  %v2074 = vunpack.c.h.b16 %v1333
  %v2075 = vunpack.c.l.b16 %v1334
  %v2076 = vunpack.c.h.b16 %v1334
  %v2077 = vunpack.c.l.b16 %v1335
  %v2078 = vunpack.c.h.b16 %v1335
  %v2079 = vunpack.c.l.b16 %v1336
  %v2080 = vunpack.c.h.b16 %v1336
  %v2081 = vunpack.c.l.b16 %v1337
  %v2082 = vunpack.c.h.b16 %v1337
  %v2083 = vunpack.c.l.b16 %v1338
  %v2084 = vunpack.c.h.b16 %v1338
  %v2085 = vunpack.c.l.b16 %v1339
  %v2086 = vunpack.c.h.b16 %v1339
  %v2087 = vunpack.c.l.b16 %v1340
  %v2088 = vunpack.c.h.b16 %v1340
  %v2089 = vunpack.c.l.b16 %v1341
  %v2090 = vunpack.c.h.b16 %v1341
  %v2091 = vunpack.c.l.b16 %v1342
  %v2092 = vunpack.c.h.b16 %v1342
  %v2093 = vunpack.c.l.b16 %v1343
  %v2094 = vunpack.c.h.b16 %v1343
  %v2095 = vunpack.c.l.b16 %v1344
  %v2096 = vunpack.c.h.b16 %v1344
  %v2097 = vunpack.c.l.b16 %v1345
  %v2098 = vunpack.c.h.b16 %v1345
  %v2099 = vunpack.c.l.b16 %v1346
  %v2100 = vunpack.c.h.b16 %v1346
  %v2101 = vunpack.c.l.b16 %v1347
  %v2102 = vunpack.c.h.b16 %v1347
  %v2103 = vunpack.c.l.b16 %v1348
  %v2104 = vunpack.c.h.b16 %v1348
  %v2105 = vunpack.c.l.b16 %v1349
  %v2106 = vunpack.c.h.b16 %v1349
  %v2107 = vunpack.c.l.b16 %v1350
  %v2108 = vunpack.c.h.b16 %v1350
  %v2109 = vunpack.c.l.b16 %v1351
  %v2110 = vunpack.c.h.b16 %v1351
  %v2111 = vunpack.c.l.b16 %v1352
  %v2112 = vunpack.c.h.b16 %v1352
  %v2113 = vunpack.c.l.b16 %v1353
  %v2114 = vunpack.c.h.b16 %v1353
  %v2115 = vunpack.c.l.b16 %v1354
  %v2116 = vunpack.c.h.b16 %v1354
  %v2117 = vunpack.c.l.b16 %v1355
  %v2118 = vunpack.c.h.b16 %v1355
  %v2119 = vunpack.c.l.b16 %v1356
  %v2120 = vunpack.c.h.b16 %v1356
  %v2121 = vunpack.c.l.b16 %v1357
  %v2122 = vunpack.c.h.b16 %v1357
  %v2123 = vunpack.c.l.b16 %v1358
  %v2124 = vunpack.c.h.b16 %v1358
  %v2125 = vunpack.c.l.b16 %v1359
  %v2126 = vunpack.c.h.b16 %v1359
  %v2127 = vunpack.c.l.b16 %v1360
  %v2128 = vunpack.c.h.b16 %v1360
  %v2129 = vunpack.c.l.b16 %v1361
  %v2130 = vunpack.c.h.b16 %v1361
  %v2131 = vunpack.c.l.b16 %v1362
  %v2132 = vunpack.c.h.b16 %v1362
  %v2133 = vunpack.c.l.b16 %v1363
  %v2134 = vunpack.c.h.b16 %v1363
  %v2135 = vunpack.c.l.b16 %v1364
  %v2136 = vunpack.c.h.b16 %v1364
  %v2137 = vpack.c.b16 %v1633, %v1625
  %v2138 = vpack.c.b16 %v1634, %v1626
  %v2139 = vpack.c.b16 %v1635, %v1627
  %v2140 = vpack.c.b16 %v1636, %v1628
  %v2141 = vpack.c.b16 %v1637, %v1629
  %v2142 = vpack.c.b16 %v1638, %v1630
  %v2143 = vpack.c.b16 %v1639, %v1631
  %v2144 = vpack.c.b16 %v1640, %v1632
  %v2145 = vpack.c.b16 %v1649, %v1641
  %v2146 = vpack.c.b16 %v1650, %v1642
  %v2147 = vpack.c.b16 %v1651, %v1643
  %v2148 = vpack.c.b16 %v1652, %v1644
  %v2149 = vpack.c.b16 %v1653, %v1645
  %v2150 = vpack.c.b16 %v1654, %v1646
  %v2151 = vpack.c.b16 %v1655, %v1647
  %v2152 = vpack.c.b16 %v1656, %v1648
  %v2153 = vpack.c.b16 %v1665, %v1657
  %v2154 = vpack.c.b16 %v1666, %v1658
  %v2155 = vpack.c.b16 %v1667, %v1659
  %v2156 = vpack.c.b16 %v1668, %v1660
  %v2157 = vpack.c.b16 %v1669, %v1661
  %v2158 = vpack.c.b16 %v1670, %v1662
  %v2159 = vpack.c.b16 %v1671, %v1663
  %v2160 = vpack.c.b16 %v1672, %v1664
  %v2161 = vpack.c.b16 %v1681, %v1673
  %v2162 = vpack.c.b16 %v1682, %v1674
  %v2163 = vpack.c.b16 %v1683, %v1675
  %v2164 = vpack.c.b16 %v1684, %v1676
  %v2165 = vpack.c.b16 %v1685, %v1677
  %v2166 = vpack.c.b16 %v1686, %v1678
  %v2167 = vpack.c.b16 %v1687, %v1679
  %v2168 = vpack.c.b16 %v1688, %v1680
  %v2169 = vpack.c.b16 %v1697, %v1689
  %v2170 = vpack.c.b16 %v1698, %v1690
  %v2171 = vpack.c.b16 %v1699, %v1691
  %v2172 = vpack.c.b16 %v1700, %v1692
  %v2173 = vpack.c.b16 %v1701, %v1693
  %v2174 = vpack.c.b16 %v1702, %v1694
  %v2175 = vpack.c.b16 %v1703, %v1695
  %v2176 = vpack.c.b16 %v1704, %v1696
  %v2177 = vpack.c.b16 %v1713, %v1705
  %v2178 = vpack.c.b16 %v1714, %v1706
  %v2179 = vpack.c.b16 %v1715, %v1707
  %v2180 = vpack.c.b16 %v1716, %v1708
  %v2181 = vpack.c.b16 %v1717, %v1709
  %v2182 = vpack.c.b16 %v1718, %v1710
  %v2183 = vpack.c.b16 %v1719, %v1711
  %v2184 = vpack.c.b16 %v1720, %v1712
  %v2185 = vpack.c.b16 %v1729, %v1721
  %v2186 = vpack.c.b16 %v1730, %v1722
  %v2187 = vpack.c.b16 %v1731, %v1723
  %v2188 = vpack.c.b16 %v1732, %v1724
  %v2189 = vpack.c.b16 %v1733, %v1725
  %v2190 = vpack.c.b16 %v1734, %v1726
  %v2191 = vpack.c.b16 %v1735, %v1727
  %v2192 = vpack.c.b16 %v1736, %v1728
  %v2193 = vpack.c.b16 %v1745, %v1737
  %v2194 = vpack.c.b16 %v1746, %v1738
  %v2195 = vpack.c.b16 %v1747, %v1739
  %v2196 = vpack.c.b16 %v1748, %v1740
  %v2197 = vpack.c.b16 %v1749, %v1741
  %v2198 = vpack.c.b16 %v1750, %v1742
  %v2199 = vpack.c.b16 %v1751, %v1743
  %v2200 = vpack.c.b16 %v1752, %v1744
  %v2201 = vpack.c.b16 %v1761, %v1753
  %v2202 = vpack.c.b16 %v1762, %v1754
  %v2203 = vpack.c.b16 %v1763, %v1755
  %v2204 = vpack.c.b16 %v1764, %v1756
  %v2205 = vpack.c.b16 %v1765, %v1757
  %v2206 = vpack.c.b16 %v1766, %v1758
  %v2207 = vpack.c.b16 %v1767, %v1759
  %v2208 = vpack.c.b16 %v1768, %v1760
  %v2209 = vpack.c.b16 %v1777, %v1769
  %v2210 = vpack.c.b16 %v1778, %v1770
  %v2211 = vpack.c.b16 %v1779, %v1771
  %v2212 = vpack.c.b16 %v1780, %v1772
  %v2213 = vpack.c.b16 %v1781, %v1773
  %v2214 = vpack.c.b16 %v1782, %v1774
  %v2215 = vpack.c.b16 %v1783, %v1775
  %v2216 = vpack.c.b16 %v1784, %v1776
  %v2217 = vpack.c.b16 %v1793, %v1785
  %v2218 = vpack.c.b16 %v1794, %v1786
  %v2219 = vpack.c.b16 %v1795, %v1787
  %v2220 = vpack.c.b16 %v1796, %v1788
  %v2221 = vpack.c.b16 %v1797, %v1789
  %v2222 = vpack.c.b16 %v1798, %v1790
  %v2223 = vpack.c.b16 %v1799, %v1791
  %v2224 = vpack.c.b16 %v1800, %v1792
  %v2225 = vpack.c.b16 %v1809, %v1801
  %v2226 = vpack.c.b16 %v1810, %v1802
  %v2227 = vpack.c.b16 %v1811, %v1803
  %v2228 = vpack.c.b16 %v1812, %v1804
  %v2229 = vpack.c.b16 %v1813, %v1805
  %v2230 = vpack.c.b16 %v1814, %v1806
  %v2231 = vpack.c.b16 %v1815, %v1807
  %v2232 = vpack.c.b16 %v1816, %v1808
  %v2233 = vpack.c.b16 %v1825, %v1817
  %v2234 = vpack.c.b16 %v1826, %v1818
  %v2235 = vpack.c.b16 %v1827, %v1819
  %v2236 = vpack.c.b16 %v1828, %v1820
  %v2237 = vpack.c.b16 %v1829, %v1821
  %v2238 = vpack.c.b16 %v1830, %v1822
  %v2239 = vpack.c.b16 %v1831, %v1823
  %v2240 = vpack.c.b16 %v1832, %v1824
  %v2241 = vpack.c.b16 %v1841, %v1833
  %v2242 = vpack.c.b16 %v1842, %v1834
  %v2243 = vpack.c.b16 %v1843, %v1835
  %v2244 = vpack.c.b16 %v1844, %v1836
  %v2245 = vpack.c.b16 %v1845, %v1837
  %v2246 = vpack.c.b16 %v1846, %v1838
  %v2247 = vpack.c.b16 %v1847, %v1839
  %v2248 = vpack.c.b16 %v1848, %v1840
  %v2249 = vpack.c.b16 %v1857, %v1849
  %v2250 = vpack.c.b16 %v1858, %v1850
  %v2251 = vpack.c.b16 %v1859, %v1851
  %v2252 = vpack.c.b16 %v1860, %v1852
  %v2253 = vpack.c.b16 %v1861, %v1853
  %v2254 = vpack.c.b16 %v1862, %v1854
  %v2255 = vpack.c.b16 %v1863, %v1855
  %v2256 = vpack.c.b16 %v1864, %v1856
  %v2257 = vpack.c.b16 %v1873, %v1865
  %v2258 = vpack.c.b16 %v1874, %v1866
  %v2259 = vpack.c.b16 %v1875, %v1867
  %v2260 = vpack.c.b16 %v1876, %v1868
  %v2261 = vpack.c.b16 %v1877, %v1869
  %v2262 = vpack.c.b16 %v1878, %v1870
  %v2263 = vpack.c.b16 %v1879, %v1871
  %v2264 = vpack.c.b16 %v1880, %v1872
  %v2265 = vpack.c.b16 %v1889, %v1881
  %v2266 = vpack.c.b16 %v1890, %v1882
  %v2267 = vpack.c.b16 %v1891, %v1883
  %v2268 = vpack.c.b16 %v1892, %v1884
  %v2269 = vpack.c.b16 %v1893, %v1885
  %v2270 = vpack.c.b16 %v1894, %v1886
  %v2271 = vpack.c.b16 %v1895, %v1887
  %v2272 = vpack.c.b16 %v1896, %v1888
  %v2273 = vpack.c.b16 %v1905, %v1897
  %v2274 = vpack.c.b16 %v1906, %v1898
  %v2275 = vpack.c.b16 %v1907, %v1899
  %v2276 = vpack.c.b16 %v1908, %v1900
  %v2277 = vpack.c.b16 %v1909, %v1901
  %v2278 = vpack.c.b16 %v1910, %v1902
  %v2279 = vpack.c.b16 %v1911, %v1903
  %v2280 = vpack.c.b16 %v1912, %v1904
  %v2281 = vpack.c.b16 %v1921, %v1913
  %v2282 = vpack.c.b16 %v1922, %v1914
  %v2283 = vpack.c.b16 %v1923, %v1915
  %v2284 = vpack.c.b16 %v1924, %v1916
  %v2285 = vpack.c.b16 %v1925, %v1917
  %v2286 = vpack.c.b16 %v1926, %v1918
  %v2287 = vpack.c.b16 %v1927, %v1919
  %v2288 = vpack.c.b16 %v1928, %v1920
  %v2289 = vpack.c.b16 %v1937, %v1929
  %v2290 = vpack.c.b16 %v1938, %v1930
  %v2291 = vpack.c.b16 %v1939, %v1931
  %v2292 = vpack.c.b16 %v1940, %v1932
  %v2293 = vpack.c.b16 %v1941, %v1933
  %v2294 = vpack.c.b16 %v1942, %v1934
  %v2295 = vpack.c.b16 %v1943, %v1935
  %v2296 = vpack.c.b16 %v1944, %v1936
  %v2297 = vpack.c.b16 %v1953, %v1945
  %v2298 = vpack.c.b16 %v1954, %v1946
  %v2299 = vpack.c.b16 %v1955, %v1947
  %v2300 = vpack.c.b16 %v1956, %v1948
  %v2301 = vpack.c.b16 %v1957, %v1949
  %v2302 = vpack.c.b16 %v1958, %v1950
  %v2303 = vpack.c.b16 %v1959, %v1951
  %v2304 = vpack.c.b16 %v1960, %v1952
  %v2305 = vpack.c.b16 %v1969, %v1961
  %v2306 = vpack.c.b16 %v1970, %v1962
  %v2307 = vpack.c.b16 %v1971, %v1963
  %v2308 = vpack.c.b16 %v1972, %v1964
  %v2309 = vpack.c.b16 %v1973, %v1965
  %v2310 = vpack.c.b16 %v1974, %v1966
  %v2311 = vpack.c.b16 %v1975, %v1967
  %v2312 = vpack.c.b16 %v1976, %v1968
  %v2313 = vpack.c.b16 %v1985, %v1977
  %v2314 = vpack.c.b16 %v1986, %v1978
  %v2315 = vpack.c.b16 %v1987, %v1979
  %v2316 = vpack.c.b16 %v1988, %v1980
  %v2317 = vpack.c.b16 %v1989, %v1981
  %v2318 = vpack.c.b16 %v1990, %v1982
  %v2319 = vpack.c.b16 %v1991, %v1983
  %v2320 = vpack.c.b16 %v1992, %v1984
  %v2321 = vpack.c.b16 %v2001, %v1993
  %v2322 = vpack.c.b16 %v2002, %v1994
  %v2323 = vpack.c.b16 %v2003, %v1995
  %v2324 = vpack.c.b16 %v2004, %v1996
  %v2325 = vpack.c.b16 %v2005, %v1997
  %v2326 = vpack.c.b16 %v2006, %v1998
  %v2327 = vpack.c.b16 %v2007, %v1999
  %v2328 = vpack.c.b16 %v2008, %v2000
  %v2329 = vpack.c.b16 %v2017, %v2009
  %v2330 = vpack.c.b16 %v2018, %v2010
  %v2331 = vpack.c.b16 %v2019, %v2011
  %v2332 = vpack.c.b16 %v2020, %v2012
  %v2333 = vpack.c.b16 %v2021, %v2013
  %v2334 = vpack.c.b16 %v2022, %v2014
  %v2335 = vpack.c.b16 %v2023, %v2015
  %v2336 = vpack.c.b16 %v2024, %v2016
  %v2337 = vpack.c.b16 %v2033, %v2025
  %v2338 = vpack.c.b16 %v2034, %v2026
  %v2339 = vpack.c.b16 %v2035, %v2027
  %v2340 = vpack.c.b16 %v2036, %v2028
  %v2341 = vpack.c.b16 %v2037, %v2029
  %v2342 = vpack.c.b16 %v2038, %v2030
  %v2343 = vpack.c.b16 %v2039, %v2031
  %v2344 = vpack.c.b16 %v2040, %v2032
  %v2345 = vpack.c.b16 %v2049, %v2041
  %v2346 = vpack.c.b16 %v2050, %v2042
  %v2347 = vpack.c.b16 %v2051, %v2043
  %v2348 = vpack.c.b16 %v2052, %v2044
  %v2349 = vpack.c.b16 %v2053, %v2045
  %v2350 = vpack.c.b16 %v2054, %v2046
  %v2351 = vpack.c.b16 %v2055, %v2047
  %v2352 = vpack.c.b16 %v2056, %v2048
  %v2353 = vpack.c.b16 %v2065, %v2057
  %v2354 = vpack.c.b16 %v2066, %v2058
  %v2355 = vpack.c.b16 %v2067, %v2059
  %v2356 = vpack.c.b16 %v2068, %v2060
  %v2357 = vpack.c.b16 %v2069, %v2061
  %v2358 = vpack.c.b16 %v2070, %v2062
  %v2359 = vpack.c.b16 %v2071, %v2063
  %v2360 = vpack.c.b16 %v2072, %v2064
  %v2361 = vpack.c.b16 %v2081, %v2073
  %v2362 = vpack.c.b16 %v2082, %v2074
  %v2363 = vpack.c.b16 %v2083, %v2075
  %v2364 = vpack.c.b16 %v2084, %v2076
  %v2365 = vpack.c.b16 %v2085, %v2077
  %v2366 = vpack.c.b16 %v2086, %v2078
  %v2367 = vpack.c.b16 %v2087, %v2079
  %v2368 = vpack.c.b16 %v2088, %v2080
  %v2369 = vpack.c.b16 %v2097, %v2089
  %v2370 = vpack.c.b16 %v2098, %v2090
  %v2371 = vpack.c.b16 %v2099, %v2091
  %v2372 = vpack.c.b16 %v2100, %v2092
  %v2373 = vpack.c.b16 %v2101, %v2093
  %v2374 = vpack.c.b16 %v2102, %v2094
  %v2375 = vpack.c.b16 %v2103, %v2095
  %v2376 = vpack.c.b16 %v2104, %v2096
  %v2377 = vpack.c.b16 %v2113, %v2105
  %v2378 = vpack.c.b16 %v2114, %v2106
  %v2379 = vpack.c.b16 %v2115, %v2107
  %v2380 = vpack.c.b16 %v2116, %v2108
  %v2381 = vpack.c.b16 %v2117, %v2109
  %v2382 = vpack.c.b16 %v2118, %v2110
  %v2383 = vpack.c.b16 %v2119, %v2111
  %v2384 = vpack.c.b16 %v2120, %v2112
  %v2385 = vpack.c.b16 %v2129, %v2121
  %v2386 = vpack.c.b16 %v2130, %v2122
  %v2387 = vpack.c.b16 %v2131, %v2123
  %v2388 = vpack.c.b16 %v2132, %v2124
  %v2389 = vpack.c.b16 %v2133, %v2125
  %v2390 = vpack.c.b16 %v2134, %v2126
  %v2391 = vpack.c.b16 %v2135, %v2127
  %v2392 = vpack.c.b16 %v2136, %v2128
  %2649 = vmatprep.subr.bf16.mxu0 %v2194
  %2650 = vmatpush1.bf16.msra.mxu0 %v2193
  %2651 = vmatprep.subr.bf16.mxu0 %v2186
  %2652 = vmatpush1.bf16.msra.mxu0 %v2185
  %2653 = vmatprep.subr.bf16.mxu0 %v2178
  %2654 = vmatpush1.bf16.msra.mxu0 %v2177
  %2655 = vmatprep.subr.bf16.mxu0 %v2170
  %2656 = vmatpush1.bf16.msra.mxu0 %v2169
  %2657 = vmatprep.subr.bf16.mxu0 %v2162
  %2658 = vmatpush1.bf16.msra.mxu0 %v2161
  %2659 = vmatprep.subr.bf16.mxu0 %v2154
  %2660 = vmatpush1.bf16.msra.mxu0 %v2153
  %2661 = vmatprep.subr.bf16.mxu0 %v2146
  %2662 = vmatpush1.bf16.msra.mxu0 %v2145
  %2663 = vmatprep.subr.bf16.mxu0 %v2138
  %2664 = vmatpush1.bf16.msra.mxu0 %v2137
  %2665 = vmatprep.subr.bf16.mxu0 %v2258
  %2666 = vmatpush2.bf16.msra.mxu0 %v2257
  %2667 = vmatprep.subr.bf16.mxu0 %v2250
  %2668 = vmatpush2.bf16.msra.mxu0 %v2249
  %2669 = vmatprep.subr.bf16.mxu0 %v2242
  %2670 = vmatpush2.bf16.msra.mxu0 %v2241
  %2671 = vmatprep.subr.bf16.mxu0 %v2234
  %2672 = vmatpush2.bf16.msra.mxu0 %v2233
  %2673 = vmatprep.subr.bf16.mxu0 %v2226
  %2674 = vmatpush2.bf16.msra.mxu0 %v2225
  %2675 = vmatprep.subr.bf16.mxu0 %v2218
  %2676 = vmatpush2.bf16.msra.mxu0 %v2217
  %2677 = vmatprep.subr.bf16.mxu0 %v2210
  %2678 = vmatpush2.bf16.msra.mxu0 %v2209
  %2679 = vmatprep.subr.bf16.mxu0 %v2202
  %2680 = vmatpush2.bf16.msra.mxu0 %v2201
  %2681 = vmatprep.mubr.bf16.mxu0 %v1366
  %2682 = vmatmul.mubr.bf16.gmra.mxu0 %v1365
  %v2683 = vpop.f32.mrf.mxu0
  %v2684 = vadd.f32 0.0, %v2683
  %v2685 = vpop.f32.mrf.mxu0
  %v2686 = vadd.f32 0.0, %v2685
  %v2687 = vpop.f32.mrf.mxu0
  %v2688 = vpop.f32.mrf.mxu0
  %2689 = vdwg.mxu0
  %2690 = vmatprep.subr.bf16.mxu0 %v2322
  %2691 = vmatpush1.bf16.msra.mxu0 %v2321
  %2692 = vmatprep.subr.bf16.mxu0 %v2314
  %2693 = vmatpush1.bf16.msra.mxu0 %v2313
  %2694 = vmatprep.subr.bf16.mxu0 %v2306
  %2695 = vmatpush1.bf16.msra.mxu0 %v2305
  %2696 = vmatprep.subr.bf16.mxu0 %v2298
  %2697 = vmatpush1.bf16.msra.mxu0 %v2297
  %2698 = vmatprep.subr.bf16.mxu0 %v2290
  %2699 = vmatpush1.bf16.msra.mxu0 %v2289
  %2700 = vmatprep.subr.bf16.mxu0 %v2282
  %2701 = vmatpush1.bf16.msra.mxu0 %v2281
  %2702 = vmatprep.subr.bf16.mxu0 %v2274
  %2703 = vmatpush1.bf16.msra.mxu0 %v2273
  %2704 = vmatprep.subr.bf16.mxu0 %v2266
  %2705 = vmatpush1.bf16.msra.mxu0 %v2265
  %2706 = vmatprep.subr.bf16.mxu0 %v2386
  %2707 = vmatpush2.bf16.msra.mxu0 %v2385
  %2708 = vmatprep.subr.bf16.mxu0 %v2378
  %2709 = vmatpush2.bf16.msra.mxu0 %v2377
  %2710 = vmatprep.subr.bf16.mxu0 %v2370
  %2711 = vmatpush2.bf16.msra.mxu0 %v2369
  %2712 = vmatprep.subr.bf16.mxu0 %v2362
  %2713 = vmatpush2.bf16.msra.mxu0 %v2361
  %2714 = vmatprep.subr.bf16.mxu0 %v2354
  %2715 = vmatpush2.bf16.msra.mxu0 %v2353
  %2716 = vmatprep.subr.bf16.mxu0 %v2346
  %2717 = vmatpush2.bf16.msra.mxu0 %v2345
  %2718 = vmatprep.subr.bf16.mxu0 %v2338
  %2719 = vmatpush2.bf16.msra.mxu0 %v2337
  %2720 = vmatprep.subr.bf16.mxu0 %v2330
  %2721 = vmatpush2.bf16.msra.mxu0 %v2329
  %2722 = vmatprep.mubr.bf16.mxu0 %v1368
  %2723 = vmatmul.mubr.bf16.gmra.mxu0 %v1367
  %v2724 = vpop.f32.mrf.mxu0
  %v2725 = vadd.f32 %v2684, %v2724
  %v2726 = vpop.f32.mrf.mxu0
  %v2727 = vadd.f32 %v2686, %v2726
  %v2728 = vpop.f32.mrf.mxu0
  %v2729 = vpop.f32.mrf.mxu0
  %2730 = vdwg.mxu0
  %2731 = vmatprep.subr.bf16.mxu0 %v2196
  %2732 = vmatpush1.bf16.msra.mxu0 %v2195
  %2733 = vmatprep.subr.bf16.mxu0 %v2188
  %2734 = vmatpush1.bf16.msra.mxu0 %v2187
  %2735 = vmatprep.subr.bf16.mxu0 %v2180
  %2736 = vmatpush1.bf16.msra.mxu0 %v2179
  %2737 = vmatprep.subr.bf16.mxu0 %v2172
  %2738 = vmatpush1.bf16.msra.mxu0 %v2171
  %2739 = vmatprep.subr.bf16.mxu0 %v2164
  %2740 = vmatpush1.bf16.msra.mxu0 %v2163
  %2741 = vmatprep.subr.bf16.mxu0 %v2156
  %2742 = vmatpush1.bf16.msra.mxu0 %v2155
  %2743 = vmatprep.subr.bf16.mxu0 %v2148
  %2744 = vmatpush1.bf16.msra.mxu0 %v2147
  %2745 = vmatprep.subr.bf16.mxu0 %v2140
  %2746 = vmatpush1.bf16.msra.mxu0 %v2139
  %2747 = vmatprep.subr.bf16.mxu0 %v2260
  %2748 = vmatpush2.bf16.msra.mxu0 %v2259
  %2749 = vmatprep.subr.bf16.mxu0 %v2252
  %2750 = vmatpush2.bf16.msra.mxu0 %v2251
  %2751 = vmatprep.subr.bf16.mxu0 %v2244
  %2752 = vmatpush2.bf16.msra.mxu0 %v2243
  %2753 = vmatprep.subr.bf16.mxu0 %v2236
  %2754 = vmatpush2.bf16.msra.mxu0 %v2235
  %2755 = vmatprep.subr.bf16.mxu0 %v2228
  %2756 = vmatpush2.bf16.msra.mxu0 %v2227
  %2757 = vmatprep.subr.bf16.mxu0 %v2220
  %2758 = vmatpush2.bf16.msra.mxu0 %v2219
  %2759 = vmatprep.subr.bf16.mxu0 %v2212
  %2760 = vmatpush2.bf16.msra.mxu0 %v2211
  %2761 = vmatprep.subr.bf16.mxu0 %v2204
  %2762 = vmatpush2.bf16.msra.mxu0 %v2203
  %2763 = vmatprep.mubr.bf16.mxu0 %v1366
  %2764 = vmatmul.mubr.bf16.gmra.mxu0 %v1365
  %v2765 = vpop.f32.mrf.mxu0
  %v2766 = vadd.f32 0.0, %v2765
  %v2767 = vpop.f32.mrf.mxu0
  %v2768 = vadd.f32 0.0, %v2767
  %v2769 = vpop.f32.mrf.mxu0
  %v2770 = vpop.f32.mrf.mxu0
  %2771 = vdwg.mxu0
  %2772 = vmatprep.subr.bf16.mxu0 %v2324
  %2773 = vmatpush1.bf16.msra.mxu0 %v2323
  %2774 = vmatprep.subr.bf16.mxu0 %v2316
  %2775 = vmatpush1.bf16.msra.mxu0 %v2315
  %2776 = vmatprep.subr.bf16.mxu0 %v2308
  %2777 = vmatpush1.bf16.msra.mxu0 %v2307
  %2778 = vmatprep.subr.bf16.mxu0 %v2300
  %2779 = vmatpush1.bf16.msra.mxu0 %v2299
  %2780 = vmatprep.subr.bf16.mxu0 %v2292
  %2781 = vmatpush1.bf16.msra.mxu0 %v2291
  %2782 = vmatprep.subr.bf16.mxu0 %v2284
  %2783 = vmatpush1.bf16.msra.mxu0 %v2283
  %2784 = vmatprep.subr.bf16.mxu0 %v2276
  %2785 = vmatpush1.bf16.msra.mxu0 %v2275
  %2786 = vmatprep.subr.bf16.mxu0 %v2268
  %2787 = vmatpush1.bf16.msra.mxu0 %v2267
  %2788 = vmatprep.subr.bf16.mxu0 %v2388
  %2789 = vmatpush2.bf16.msra.mxu0 %v2387
  %2790 = vmatprep.subr.bf16.mxu0 %v2380
  %2791 = vmatpush2.bf16.msra.mxu0 %v2379
  %2792 = vmatprep.subr.bf16.mxu0 %v2372
  %2793 = vmatpush2.bf16.msra.mxu0 %v2371
  %2794 = vmatprep.subr.bf16.mxu0 %v2364
  %2795 = vmatpush2.bf16.msra.mxu0 %v2363
  %2796 = vmatprep.subr.bf16.mxu0 %v2356
  %2797 = vmatpush2.bf16.msra.mxu0 %v2355
  %2798 = vmatprep.subr.bf16.mxu0 %v2348
  %2799 = vmatpush2.bf16.msra.mxu0 %v2347
  %2800 = vmatprep.subr.bf16.mxu0 %v2340
  %2801 = vmatpush2.bf16.msra.mxu0 %v2339
  %2802 = vmatprep.subr.bf16.mxu0 %v2332
  %2803 = vmatpush2.bf16.msra.mxu0 %v2331
  %2804 = vmatprep.mubr.bf16.mxu0 %v1368
  %2805 = vmatmul.mubr.bf16.gmra.mxu0 %v1367
  %v2806 = vpop.f32.mrf.mxu0
  %v2807 = vadd.f32 %v2766, %v2806
  %v2808 = vpop.f32.mrf.mxu0
  %v2809 = vadd.f32 %v2768, %v2808
  %v2810 = vpop.f32.mrf.mxu0
  %v2811 = vpop.f32.mrf.mxu0
  %2812 = vdwg.mxu0
  %2813 = vmatprep.subr.bf16.mxu0 %v2198
  %2814 = vmatpush1.bf16.msra.mxu0 %v2197
  %2815 = vmatprep.subr.bf16.mxu0 %v2190
  %2816 = vmatpush1.bf16.msra.mxu0 %v2189
  %2817 = vmatprep.subr.bf16.mxu0 %v2182
  %2818 = vmatpush1.bf16.msra.mxu0 %v2181
  %2819 = vmatprep.subr.bf16.mxu0 %v2174
  %2820 = vmatpush1.bf16.msra.mxu0 %v2173
  %2821 = vmatprep.subr.bf16.mxu0 %v2166
  %2822 = vmatpush1.bf16.msra.mxu0 %v2165
  %2823 = vmatprep.subr.bf16.mxu0 %v2158
  %2824 = vmatpush1.bf16.msra.mxu0 %v2157
  %2825 = vmatprep.subr.bf16.mxu0 %v2150
  %2826 = vmatpush1.bf16.msra.mxu0 %v2149
  %2827 = vmatprep.subr.bf16.mxu0 %v2142
  %2828 = vmatpush1.bf16.msra.mxu0 %v2141
  %2829 = vmatprep.subr.bf16.mxu0 %v2262
  %2830 = vmatpush2.bf16.msra.mxu0 %v2261
  %2831 = vmatprep.subr.bf16.mxu0 %v2254
  %2832 = vmatpush2.bf16.msra.mxu0 %v2253
  %2833 = vmatprep.subr.bf16.mxu0 %v2246
  %2834 = vmatpush2.bf16.msra.mxu0 %v2245
  %2835 = vmatprep.subr.bf16.mxu0 %v2238
  %2836 = vmatpush2.bf16.msra.mxu0 %v2237
  %2837 = vmatprep.subr.bf16.mxu0 %v2230
  %2838 = vmatpush2.bf16.msra.mxu0 %v2229
  %2839 = vmatprep.subr.bf16.mxu0 %v2222
  %2840 = vmatpush2.bf16.msra.mxu0 %v2221
  %2841 = vmatprep.subr.bf16.mxu0 %v2214
  %2842 = vmatpush2.bf16.msra.mxu0 %v2213
  %2843 = vmatprep.subr.bf16.mxu0 %v2206
  %2844 = vmatpush2.bf16.msra.mxu0 %v2205
  %2845 = vmatprep.mubr.bf16.mxu0 %v1366
  %2846 = vmatmul.mubr.bf16.gmra.mxu0 %v1365
  %v2847 = vpop.f32.mrf.mxu0
  %v2848 = vadd.f32 0.0, %v2847
  %v2849 = vpop.f32.mrf.mxu0
  %v2850 = vadd.f32 0.0, %v2849
  %v2851 = vpop.f32.mrf.mxu0
  %v2852 = vpop.f32.mrf.mxu0
  %2853 = vdwg.mxu0
  %2854 = vmatprep.subr.bf16.mxu0 %v2326
  %2855 = vmatpush1.bf16.msra.mxu0 %v2325
  %2856 = vmatprep.subr.bf16.mxu0 %v2318
  %2857 = vmatpush1.bf16.msra.mxu0 %v2317
  %2858 = vmatprep.subr.bf16.mxu0 %v2310
  %2859 = vmatpush1.bf16.msra.mxu0 %v2309
  %2860 = vmatprep.subr.bf16.mxu0 %v2302
  %2861 = vmatpush1.bf16.msra.mxu0 %v2301
  %2862 = vmatprep.subr.bf16.mxu0 %v2294
  %2863 = vmatpush1.bf16.msra.mxu0 %v2293
  %2864 = vmatprep.subr.bf16.mxu0 %v2286
  %2865 = vmatpush1.bf16.msra.mxu0 %v2285
  %2866 = vmatprep.subr.bf16.mxu0 %v2278
  %2867 = vmatpush1.bf16.msra.mxu0 %v2277
  %2868 = vmatprep.subr.bf16.mxu0 %v2270
  %2869 = vmatpush1.bf16.msra.mxu0 %v2269
  %2870 = vmatprep.subr.bf16.mxu0 %v2390
  %2871 = vmatpush2.bf16.msra.mxu0 %v2389
  %2872 = vmatprep.subr.bf16.mxu0 %v2382
  %2873 = vmatpush2.bf16.msra.mxu0 %v2381
  %2874 = vmatprep.subr.bf16.mxu0 %v2374
  %2875 = vmatpush2.bf16.msra.mxu0 %v2373
  %2876 = vmatprep.subr.bf16.mxu0 %v2366
  %2877 = vmatpush2.bf16.msra.mxu0 %v2365
  %2878 = vmatprep.subr.bf16.mxu0 %v2358
  %2879 = vmatpush2.bf16.msra.mxu0 %v2357
  %2880 = vmatprep.subr.bf16.mxu0 %v2350
  %2881 = vmatpush2.bf16.msra.mxu0 %v2349
  %2882 = vmatprep.subr.bf16.mxu0 %v2342
  %2883 = vmatpush2.bf16.msra.mxu0 %v2341
  %2884 = vmatprep.subr.bf16.mxu0 %v2334
  %2885 = vmatpush2.bf16.msra.mxu0 %v2333
  %2886 = vmatprep.mubr.bf16.mxu0 %v1368
  %2887 = vmatmul.mubr.bf16.gmra.mxu0 %v1367
  %v2888 = vpop.f32.mrf.mxu0
  %v2889 = vadd.f32 %v2848, %v2888
  %v2890 = vpop.f32.mrf.mxu0
  %v2891 = vadd.f32 %v2850, %v2890
  %v2892 = vpop.f32.mrf.mxu0
  %v2893 = vpop.f32.mrf.mxu0
  %2894 = vdwg.mxu0
  %2895 = vmatprep.subr.bf16.mxu0 %v2200
  %2896 = vmatpush1.bf16.msra.mxu0 %v2199
  %2897 = vmatprep.subr.bf16.mxu0 %v2192
  %2898 = vmatpush1.bf16.msra.mxu0 %v2191
  %2899 = vmatprep.subr.bf16.mxu0 %v2184
  %2900 = vmatpush1.bf16.msra.mxu0 %v2183
  %2901 = vmatprep.subr.bf16.mxu0 %v2176
  %2902 = vmatpush1.bf16.msra.mxu0 %v2175
  %2903 = vmatprep.subr.bf16.mxu0 %v2168
  %2904 = vmatpush1.bf16.msra.mxu0 %v2167
  %2905 = vmatprep.subr.bf16.mxu0 %v2160
  %2906 = vmatpush1.bf16.msra.mxu0 %v2159
  %2907 = vmatprep.subr.bf16.mxu0 %v2152
  %2908 = vmatpush1.bf16.msra.mxu0 %v2151
  %2909 = vmatprep.subr.bf16.mxu0 %v2144
  %2910 = vmatpush1.bf16.msra.mxu0 %v2143
  %2911 = vmatprep.subr.bf16.mxu0 %v2264
  %2912 = vmatpush2.bf16.msra.mxu0 %v2263
  %2913 = vmatprep.subr.bf16.mxu0 %v2256
  %2914 = vmatpush2.bf16.msra.mxu0 %v2255
  %2915 = vmatprep.subr.bf16.mxu0 %v2248
  %2916 = vmatpush2.bf16.msra.mxu0 %v2247
  %2917 = vmatprep.subr.bf16.mxu0 %v2240
  %2918 = vmatpush2.bf16.msra.mxu0 %v2239
  %2919 = vmatprep.subr.bf16.mxu0 %v2232
  %2920 = vmatpush2.bf16.msra.mxu0 %v2231
  %2921 = vmatprep.subr.bf16.mxu0 %v2224
  %2922 = vmatpush2.bf16.msra.mxu0 %v2223
  %2923 = vmatprep.subr.bf16.mxu0 %v2216
  %2924 = vmatpush2.bf16.msra.mxu0 %v2215
  %2925 = vmatprep.subr.bf16.mxu0 %v2208
  %2926 = vmatpush2.bf16.msra.mxu0 %v2207
  %2927 = vmatprep.mubr.bf16.mxu0 %v1366
  %2928 = vmatmul.mubr.bf16.gmra.mxu0 %v1365
  %v2929 = vpop.f32.mrf.mxu0
  %v2930 = vadd.f32 0.0, %v2929
  %v2931 = vpop.f32.mrf.mxu0
  %v2932 = vadd.f32 0.0, %v2931
  %v2933 = vpop.f32.mrf.mxu0
  %v2934 = vpop.f32.mrf.mxu0
  %2935 = vdwg.mxu0
  %2936 = vmatprep.subr.bf16.mxu0 %v2328
  %2937 = vmatpush1.bf16.msra.mxu0 %v2327
  %2938 = vmatprep.subr.bf16.mxu0 %v2320
  %2939 = vmatpush1.bf16.msra.mxu0 %v2319
  %2940 = vmatprep.subr.bf16.mxu0 %v2312
  %2941 = vmatpush1.bf16.msra.mxu0 %v2311
  %2942 = vmatprep.subr.bf16.mxu0 %v2304
  %2943 = vmatpush1.bf16.msra.mxu0 %v2303
  %2944 = vmatprep.subr.bf16.mxu0 %v2296
  %2945 = vmatpush1.bf16.msra.mxu0 %v2295
  %2946 = vmatprep.subr.bf16.mxu0 %v2288
  %2947 = vmatpush1.bf16.msra.mxu0 %v2287
  %2948 = vmatprep.subr.bf16.mxu0 %v2280
  %2949 = vmatpush1.bf16.msra.mxu0 %v2279
  %2950 = vmatprep.subr.bf16.mxu0 %v2272
  %2951 = vmatpush1.bf16.msra.mxu0 %v2271
  %2952 = vmatprep.subr.bf16.mxu0 %v2392
  %2953 = vmatpush2.bf16.msra.mxu0 %v2391
  %2954 = vmatprep.subr.bf16.mxu0 %v2384
  %2955 = vmatpush2.bf16.msra.mxu0 %v2383
  %2956 = vmatprep.subr.bf16.mxu0 %v2376
  %2957 = vmatpush2.bf16.msra.mxu0 %v2375
  %2958 = vmatprep.subr.bf16.mxu0 %v2368
  %2959 = vmatpush2.bf16.msra.mxu0 %v2367
  %2960 = vmatprep.subr.bf16.mxu0 %v2360
  %2961 = vmatpush2.bf16.msra.mxu0 %v2359
  %2962 = vmatprep.subr.bf16.mxu0 %v2352
  %2963 = vmatpush2.bf16.msra.mxu0 %v2351
  %2964 = vmatprep.subr.bf16.mxu0 %v2344
  %2965 = vmatpush2.bf16.msra.mxu0 %v2343
  %2966 = vmatprep.subr.bf16.mxu0 %v2336
  %2967 = vmatpush2.bf16.msra.mxu0 %v2335
  %2968 = vmatprep.mubr.bf16.mxu0 %v1368
  %2969 = vmatmul.mubr.bf16.gmra.mxu0 %v1367
  %v2970 = vpop.f32.mrf.mxu0
  %v2971 = vadd.f32 %v2930, %v2970
  %v2972 = vpop.f32.mrf.mxu0
  %v2973 = vadd.f32 %v2932, %v2972
  %v2974 = vpop.f32.mrf.mxu0
  %v2975 = vpop.f32.mrf.mxu0
  %2976 = vdwg.mxu0
  %v2977 = vrot.slane %v2725, 4
  %v2978 = vadd.f32 %v2725, %v2977
  %v2979 = vrot.slane %v2978, 2
  %v2980 = vadd.f32 %v2978, %v2979
  %v2981 = vrot.slane %v2980, 1
  %v2982 = vadd.f32 %v2980, %v2981
  %v2983 = vrot.slane %v2727, 4
  %v2984 = vadd.f32 %v2727, %v2983
  %v2985 = vrot.slane %v2984, 2
  %v2986 = vadd.f32 %v2984, %v2985
  %v2987 = vrot.slane %v2986, 1
  %v2988 = vadd.f32 %v2986, %v2987
  %v2989 = vrot.slane %v2807, 4
  %v2990 = vadd.f32 %v2807, %v2989
  %v2991 = vrot.slane %v2990, 2
  %v2992 = vadd.f32 %v2990, %v2991
  %v2993 = vrot.slane %v2992, 1
  %v2994 = vadd.f32 %v2992, %v2993
  %v2995 = vrot.slane %v2809, 4
  %v2996 = vadd.f32 %v2809, %v2995
  %v2997 = vrot.slane %v2996, 2
  %v2998 = vadd.f32 %v2996, %v2997
  %v2999 = vrot.slane %v2998, 1
  %v3000 = vadd.f32 %v2998, %v2999
  %v3001 = vrot.slane %v2889, 4
  %v3002 = vadd.f32 %v2889, %v3001
  %v3003 = vrot.slane %v3002, 2
  %v3004 = vadd.f32 %v3002, %v3003
  %v3005 = vrot.slane %v3004, 1
  %v3006 = vadd.f32 %v3004, %v3005
  %v3007 = vrot.slane %v2891, 4
  %v3008 = vadd.f32 %v2891, %v3007
  %v3009 = vrot.slane %v3008, 2
  %v3010 = vadd.f32 %v3008, %v3009
  %v3011 = vrot.slane %v3010, 1
  %v3012 = vadd.f32 %v3010, %v3011
  %v3013 = vrot.slane %v2971, 4
  %v3014 = vadd.f32 %v2971, %v3013
  %v3015 = vrot.slane %v3014, 2
  %v3016 = vadd.f32 %v3014, %v3015
  %v3017 = vrot.slane %v3016, 1
  %v3018 = vadd.f32 %v3016, %v3017
  %v3019 = vrot.slane %v2973, 4
  %v3020 = vadd.f32 %v2973, %v3019
  %v3021 = vrot.slane %v3020, 2
  %v3022 = vadd.f32 %v3020, %v3021
  %v3023 = vrot.slane %v3022, 1
  %v3024 = vadd.f32 %v3022, %v3023
  %v3025 = vmul.f32 %v2982, %v441
  %v3026 = vmul.f32 %v2988, %v441
  %v3027 = vmul.f32 %v2994, %v441
  %v3028 = vmul.f32 %v3000, %v441
  %v3029 = vmul.f32 %v3006, %v441
  %v3030 = vmul.f32 %v3012, %v441
  %v3031 = vmul.f32 %v3018, %v441
  %v3032 = vmul.f32 %v3024, %v441
  %v3033 = vsub.f32 %v2725, %v3025
  %v3034 = vsub.f32 %v2727, %v3026
  %v3035 = vsub.f32 %v2807, %v3027
  %v3036 = vsub.f32 %v2809, %v3028
  %v3037 = vsub.f32 %v2889, %v3029
  %v3038 = vsub.f32 %v2891, %v3030
  %v3039 = vsub.f32 %v2971, %v3031
  %v3040 = vsub.f32 %v2973, %v3032
  %v3041 = vmul.f32 %v3033, %v3033
  %v3042 = vmul.f32 %v3034, %v3034
  %v3043 = vmul.f32 %v3035, %v3035
  %v3044 = vmul.f32 %v3036, %v3036
  %v3045 = vmul.f32 %v3037, %v3037
  %v3046 = vmul.f32 %v3038, %v3038
  %v3047 = vmul.f32 %v3039, %v3039
  %v3048 = vmul.f32 %v3040, %v3040
  %v3049 = vrot.slane %v3041, 4
  %v3050 = vadd.f32 %v3041, %v3049
  %v3051 = vrot.slane %v3050, 2
  %v3052 = vadd.f32 %v3050, %v3051
  %v3053 = vrot.slane %v3052, 1
  %v3054 = vadd.f32 %v3052, %v3053
  %v3055 = vrot.slane %v3042, 4
  %v3056 = vadd.f32 %v3042, %v3055
  %v3057 = vrot.slane %v3056, 2
  %v3058 = vadd.f32 %v3056, %v3057
  %v3059 = vrot.slane %v3058, 1
  %v3060 = vadd.f32 %v3058, %v3059
  %v3061 = vrot.slane %v3043, 4
  %v3062 = vadd.f32 %v3043, %v3061
  %v3063 = vrot.slane %v3062, 2
  %v3064 = vadd.f32 %v3062, %v3063
  %v3065 = vrot.slane %v3064, 1
  %v3066 = vadd.f32 %v3064, %v3065
  %v3067 = vrot.slane %v3044, 4
  %v3068 = vadd.f32 %v3044, %v3067
  %v3069 = vrot.slane %v3068, 2
  %v3070 = vadd.f32 %v3068, %v3069
  %v3071 = vrot.slane %v3070, 1
  %v3072 = vadd.f32 %v3070, %v3071
  %v3073 = vrot.slane %v3045, 4
  %v3074 = vadd.f32 %v3045, %v3073
  %v3075 = vrot.slane %v3074, 2
  %v3076 = vadd.f32 %v3074, %v3075
  %v3077 = vrot.slane %v3076, 1
  %v3078 = vadd.f32 %v3076, %v3077
  %v3079 = vrot.slane %v3046, 4
  %v3080 = vadd.f32 %v3046, %v3079
  %v3081 = vrot.slane %v3080, 2
  %v3082 = vadd.f32 %v3080, %v3081
  %v3083 = vrot.slane %v3082, 1
  %v3084 = vadd.f32 %v3082, %v3083
  %v3085 = vrot.slane %v3047, 4
  %v3086 = vadd.f32 %v3047, %v3085
  %v3087 = vrot.slane %v3086, 2
  %v3088 = vadd.f32 %v3086, %v3087
  %v3089 = vrot.slane %v3088, 1
  %v3090 = vadd.f32 %v3088, %v3089
  %v3091 = vrot.slane %v3048, 4
  %v3092 = vadd.f32 %v3048, %v3091
  %v3093 = vrot.slane %v3092, 2
  %v3094 = vadd.f32 %v3092, %v3093
  %v3095 = vrot.slane %v3094, 1
  %v3096 = vadd.f32 %v3094, %v3095
  %v3097 = vmul.f32 %v3054, %v441
  %v3098 = vmul.f32 %v3060, %v441
  %v3099 = vmul.f32 %v3066, %v441
  %v3100 = vmul.f32 %v3072, %v441
  %v3101 = vmul.f32 %v3078, %v441
  %v3102 = vmul.f32 %v3084, %v441
  %v3103 = vmul.f32 %v3090, %v441
  %v3104 = vmul.f32 %v3096, %v441
  %s3105 = scalar_lea.vmem %s1, 4
  %v3106 = vld [vmem:[%s3105] ss:$8 sm:$0xf]
  %v3107 = vld [vmem:[%s3105] ss:$8 sm:$0xf0]
  %v3108 = vor.u32 %v3106, %v3107
  %s3109 = scalar_lea.vmem %s1, 5
  %v3110 = vld [vmem:[%s3109] ss:$8 sm:$0xf]
  %v3111 = vld [vmem:[%s3109] ss:$8 sm:$0xf0]
  %v3112 = vor.u32 %v3110, %v3111
  %v3113 = vadd.f32 %v3097, 1e-05
  %v3114 = vadd.f32 %v3098, 1e-05
  %v3115 = vadd.f32 %v3099, 1e-05
  %v3116 = vadd.f32 %v3100, 1e-05
  %v3117 = vadd.f32 %v3101, 1e-05
  %v3118 = vadd.f32 %v3102, 1e-05
  %v3119 = vadd.f32 %v3103, 1e-05
  %v3120 = vadd.f32 %v3104, 1e-05
  %v3121 = vrsqrt.pop %v3113
  %v3122 = vrsqrt.pop %v3114
  %v3123 = vrsqrt.pop %v3115
  %v3124 = vrsqrt.pop %v3116
  %v3125 = vrsqrt.pop %v3117
  %v3126 = vrsqrt.pop %v3118
  %v3127 = vrsqrt.pop %v3119
  %v3128 = vrsqrt.pop %v3120
  %v3129 = vmul.f32 %v3033, %v3121
  %v3130 = vmul.f32 %v3034, %v3122
  %v3131 = vmul.f32 %v3035, %v3123
  %v3132 = vmul.f32 %v3036, %v3124
  %v3133 = vmul.f32 %v3037, %v3125
  %v3134 = vmul.f32 %v3038, %v3126
  %v3135 = vmul.f32 %v3039, %v3127
  %v3136 = vmul.f32 %v3040, %v3128
  %v3138 = vlaneseq
  %v3139 = vshrl.u32 %v3138, 7
  %v3140 = vsub.s32 0, %v3139
  %v3141 = vrot.slane %v3108, %v3140
  %v3142 = vlaneseq
  %v3143 = vshrl.u32 %v3142, 7
  %v3144 = vsub.s32 1, %v3143
  %v3145 = vrot.slane %v3108, %v3144
  %v3146 = vlaneseq
  %v3147 = vshrl.u32 %v3146, 7
  %v3148 = vsub.s32 2, %v3147
  %v3149 = vrot.slane %v3108, %v3148
  %v3150 = vlaneseq
  %v3151 = vshrl.u32 %v3150, 7
  %v3152 = vsub.s32 3, %v3151
  %v3153 = vrot.slane %v3108, %v3152
  %v3154 = vlaneseq
  %v3155 = vshrl.u32 %v3154, 7
  %v3156 = vsub.s32 4, %v3155
  %v3157 = vrot.slane %v3108, %v3156
  %v3158 = vlaneseq
  %v3159 = vshrl.u32 %v3158, 7
  %v3160 = vsub.s32 5, %v3159
  %v3161 = vrot.slane %v3108, %v3160
  %v3162 = vlaneseq
  %v3163 = vshrl.u32 %v3162, 7
  %v3164 = vsub.s32 6, %v3163
  %v3165 = vrot.slane %v3108, %v3164
  %v3166 = vlaneseq
  %v3167 = vshrl.u32 %v3166, 7
  %v3168 = vsub.s32 7, %v3167
  %v3169 = vrot.slane %v3108, %v3168
  %v3178 = vmul.f32 %v3129, %v3141
  %v3179 = vmul.f32 %v3130, %v3145
  %v3180 = vmul.f32 %v3131, %v3149
  %v3181 = vmul.f32 %v3132, %v3153
  %v3182 = vmul.f32 %v3133, %v3157
  %v3183 = vmul.f32 %v3134, %v3161
  %v3184 = vmul.f32 %v3135, %v3165
  %v3185 = vmul.f32 %v3136, %v3169
  %v3187 = vlaneseq
  %v3188 = vshrl.u32 %v3187, 7
  %v3189 = vsub.s32 0, %v3188
  %v3190 = vrot.slane %v3112, %v3189
  %v3191 = vlaneseq
  %v3192 = vshrl.u32 %v3191, 7
  %v3193 = vsub.s32 1, %v3192
  %v3194 = vrot.slane %v3112, %v3193
  %v3195 = vlaneseq
  %v3196 = vshrl.u32 %v3195, 7
  %v3197 = vsub.s32 2, %v3196
  %v3198 = vrot.slane %v3112, %v3197
  %v3199 = vlaneseq
  %v3200 = vshrl.u32 %v3199, 7
  %v3201 = vsub.s32 3, %v3200
  %v3202 = vrot.slane %v3112, %v3201
  %v3203 = vlaneseq
  %v3204 = vshrl.u32 %v3203, 7
  %v3205 = vsub.s32 4, %v3204
  %v3206 = vrot.slane %v3112, %v3205
  %v3207 = vlaneseq
  %v3208 = vshrl.u32 %v3207, 7
  %v3209 = vsub.s32 5, %v3208
  %v3210 = vrot.slane %v3112, %v3209
  %v3211 = vlaneseq
  %v3212 = vshrl.u32 %v3211, 7
  %v3213 = vsub.s32 6, %v3212
  %v3214 = vrot.slane %v3112, %v3213
  %v3215 = vlaneseq
  %v3216 = vshrl.u32 %v3215, 7
  %v3217 = vsub.s32 7, %v3216
  %v3218 = vrot.slane %v3112, %v3217
  %v3227 = vadd.f32 %v3178, %v3190
  %v3228 = vadd.f32 %v3179, %v3194
  %v3229 = vadd.f32 %v3180, %v3198
  %v3230 = vadd.f32 %v3181, %v3202
  %v3231 = vadd.f32 %v3182, %v3206
  %v3232 = vadd.f32 %v3183, %v3210
  %v3233 = vadd.f32 %v3184, %v3214
  %v3234 = vadd.f32 %v3185, %v3218
  %v3235 = vmax.f32 %v3227, 0.0
  %v3236 = vmax.f32 %v3228, 0.0
  %v3237 = vmax.f32 %v3229, 0.0
  %v3238 = vmax.f32 %v3230, 0.0
  %v3239 = vmax.f32 %v3231, 0.0
  %v3240 = vmax.f32 %v3232, 0.0
  %v3241 = vmax.f32 %v3233, 0.0
  %v3242 = vmax.f32 %v3234, 0.0
  %s3243 = smul.u32 4, 128
  %s3244 = smul.u32 %s3243, 4
  %s3245 = sshll.u32 %s3244, 4
  %3246 = dma.done %s114, %s3245
  %v3247 = vld [vmem:[#allocation5] sm:$0xff]
  %v3248 = vld [vmem:[#allocation5 + $0x8] sm:$0xff]
  %v3249 = vld [vmem:[#allocation5 + $0x10] sm:$0xff]
  %v3250 = vld [vmem:[#allocation5 + $0x18] sm:$0xff]
  %v3251 = vld [vmem:[#allocation5 + $0x20] sm:$0xff]
  %v3252 = vld [vmem:[#allocation5 + $0x28] sm:$0xff]
  %v3253 = vld [vmem:[#allocation5 + $0x30] sm:$0xff]
  %v3254 = vld [vmem:[#allocation5 + $0x38] sm:$0xff]
  %v3255 = vld [vmem:[#allocation5 + $0x40] sm:$0xff]
  %v3256 = vld [vmem:[#allocation5 + $0x48] sm:$0xff]
  %v3257 = vld [vmem:[#allocation5 + $0x50] sm:$0xff]
  %v3258 = vld [vmem:[#allocation5 + $0x58] sm:$0xff]
  %v3259 = vld [vmem:[#allocation5 + $0x60] sm:$0xff]
  %v3260 = vld [vmem:[#allocation5 + $0x68] sm:$0xff]
  %v3261 = vld [vmem:[#allocation5 + $0x70] sm:$0xff]
  %v3262 = vld [vmem:[#allocation5 + $0x78] sm:$0xff]
  %v3263 = vld [vmem:[#allocation5 + $0x80] sm:$0xff]
  %v3264 = vld [vmem:[#allocation5 + $0x88] sm:$0xff]
  %v3265 = vld [vmem:[#allocation5 + $0x90] sm:$0xff]
  %v3266 = vld [vmem:[#allocation5 + $0x98] sm:$0xff]
  %v3267 = vld [vmem:[#allocation5 + $0xa0] sm:$0xff]
  %v3268 = vld [vmem:[#allocation5 + $0xa8] sm:$0xff]
  %v3269 = vld [vmem:[#allocation5 + $0xb0] sm:$0xff]
  %v3270 = vld [vmem:[#allocation5 + $0xb8] sm:$0xff]
  %v3271 = vld [vmem:[#allocation5 + $0xc0] sm:$0xff]
  %v3272 = vld [vmem:[#allocation5 + $0xc8] sm:$0xff]
  %v3273 = vld [vmem:[#allocation5 + $0xd0] sm:$0xff]
  %v3274 = vld [vmem:[#allocation5 + $0xd8] sm:$0xff]
  %v3275 = vld [vmem:[#allocation5 + $0xe0] sm:$0xff]
  %v3276 = vld [vmem:[#allocation5 + $0xe8] sm:$0xff]
  %v3277 = vld [vmem:[#allocation5 + $0xf0] sm:$0xff]
  %v3278 = vld [vmem:[#allocation5 + $0xf8] sm:$0xff]
  %v3279 = vld [vmem:[#allocation5 + $0x100] sm:$0xff]
  %v3280 = vld [vmem:[#allocation5 + $0x108] sm:$0xff]
  %v3281 = vld [vmem:[#allocation5 + $0x110] sm:$0xff]
  %v3282 = vld [vmem:[#allocation5 + $0x118] sm:$0xff]
  %v3283 = vld [vmem:[#allocation5 + $0x120] sm:$0xff]
  %v3284 = vld [vmem:[#allocation5 + $0x128] sm:$0xff]
  %v3285 = vld [vmem:[#allocation5 + $0x130] sm:$0xff]
  %v3286 = vld [vmem:[#allocation5 + $0x138] sm:$0xff]
  %v3287 = vld [vmem:[#allocation5 + $0x140] sm:$0xff]
  %v3288 = vld [vmem:[#allocation5 + $0x148] sm:$0xff]
  %v3289 = vld [vmem:[#allocation5 + $0x150] sm:$0xff]
  %v3290 = vld [vmem:[#allocation5 + $0x158] sm:$0xff]
  %v3291 = vld [vmem:[#allocation5 + $0x160] sm:$0xff]
  %v3292 = vld [vmem:[#allocation5 + $0x168] sm:$0xff]
  %v3293 = vld [vmem:[#allocation5 + $0x170] sm:$0xff]
  %v3294 = vld [vmem:[#allocation5 + $0x178] sm:$0xff]
  %v3295 = vld [vmem:[#allocation5 + $0x180] sm:$0xff]
  %v3296 = vld [vmem:[#allocation5 + $0x188] sm:$0xff]
  %v3297 = vld [vmem:[#allocation5 + $0x190] sm:$0xff]
  %v3298 = vld [vmem:[#allocation5 + $0x198] sm:$0xff]
  %v3299 = vld [vmem:[#allocation5 + $0x1a0] sm:$0xff]
  %v3300 = vld [vmem:[#allocation5 + $0x1a8] sm:$0xff]
  %v3301 = vld [vmem:[#allocation5 + $0x1b0] sm:$0xff]
  %v3302 = vld [vmem:[#allocation5 + $0x1b8] sm:$0xff]
  %v3303 = vld [vmem:[#allocation5 + $0x1c0] sm:$0xff]
  %v3304 = vld [vmem:[#allocation5 + $0x1c8] sm:$0xff]
  %v3305 = vld [vmem:[#allocation5 + $0x1d0] sm:$0xff]
  %v3306 = vld [vmem:[#allocation5 + $0x1d8] sm:$0xff]
  %v3307 = vld [vmem:[#allocation5 + $0x1e0] sm:$0xff]
  %v3308 = vld [vmem:[#allocation5 + $0x1e8] sm:$0xff]
  %v3309 = vld [vmem:[#allocation5 + $0x1f0] sm:$0xff]
  %v3310 = vld [vmem:[#allocation5 + $0x1f8] sm:$0xff]
  %v3311 = vld [vmem:[#allocation5 + $0x200] sm:$0xff]
  %v3312 = vld [vmem:[#allocation5 + $0x208] sm:$0xff]
  %v3313 = vld [vmem:[#allocation5 + $0x210] sm:$0xff]
  %v3314 = vld [vmem:[#allocation5 + $0x218] sm:$0xff]
  %v3315 = vld [vmem:[#allocation5 + $0x220] sm:$0xff]
  %v3316 = vld [vmem:[#allocation5 + $0x228] sm:$0xff]
  %v3317 = vld [vmem:[#allocation5 + $0x230] sm:$0xff]
  %v3318 = vld [vmem:[#allocation5 + $0x238] sm:$0xff]
  %v3319 = vld [vmem:[#allocation5 + $0x240] sm:$0xff]
  %v3320 = vld [vmem:[#allocation5 + $0x248] sm:$0xff]
  %v3321 = vld [vmem:[#allocation5 + $0x250] sm:$0xff]
  %v3322 = vld [vmem:[#allocation5 + $0x258] sm:$0xff]
  %v3323 = vld [vmem:[#allocation5 + $0x260] sm:$0xff]
  %v3324 = vld [vmem:[#allocation5 + $0x268] sm:$0xff]
  %v3325 = vld [vmem:[#allocation5 + $0x270] sm:$0xff]
  %v3326 = vld [vmem:[#allocation5 + $0x278] sm:$0xff]
  %v3327 = vld [vmem:[#allocation5 + $0x280] sm:$0xff]
  %v3328 = vld [vmem:[#allocation5 + $0x288] sm:$0xff]
  %v3329 = vld [vmem:[#allocation5 + $0x290] sm:$0xff]
  %v3330 = vld [vmem:[#allocation5 + $0x298] sm:$0xff]
  %v3331 = vld [vmem:[#allocation5 + $0x2a0] sm:$0xff]
  %v3332 = vld [vmem:[#allocation5 + $0x2a8] sm:$0xff]
  %v3333 = vld [vmem:[#allocation5 + $0x2b0] sm:$0xff]
  %v3334 = vld [vmem:[#allocation5 + $0x2b8] sm:$0xff]
  %v3335 = vld [vmem:[#allocation5 + $0x2c0] sm:$0xff]
  %v3336 = vld [vmem:[#allocation5 + $0x2c8] sm:$0xff]
  %v3337 = vld [vmem:[#allocation5 + $0x2d0] sm:$0xff]
  %v3338 = vld [vmem:[#allocation5 + $0x2d8] sm:$0xff]
  %v3339 = vld [vmem:[#allocation5 + $0x2e0] sm:$0xff]
  %v3340 = vld [vmem:[#allocation5 + $0x2e8] sm:$0xff]
  %v3341 = vld [vmem:[#allocation5 + $0x2f0] sm:$0xff]
  %v3342 = vld [vmem:[#allocation5 + $0x2f8] sm:$0xff]
  %v3343 = vld [vmem:[#allocation5 + $0x300] sm:$0xff]
  %v3344 = vld [vmem:[#allocation5 + $0x308] sm:$0xff]
  %v3345 = vld [vmem:[#allocation5 + $0x310] sm:$0xff]
  %v3346 = vld [vmem:[#allocation5 + $0x318] sm:$0xff]
  %v3347 = vld [vmem:[#allocation5 + $0x320] sm:$0xff]
  %v3348 = vld [vmem:[#allocation5 + $0x328] sm:$0xff]
  %v3349 = vld [vmem:[#allocation5 + $0x330] sm:$0xff]
  %v3350 = vld [vmem:[#allocation5 + $0x338] sm:$0xff]
  %v3351 = vld [vmem:[#allocation5 + $0x340] sm:$0xff]
  %v3352 = vld [vmem:[#allocation5 + $0x348] sm:$0xff]
  %v3353 = vld [vmem:[#allocation5 + $0x350] sm:$0xff]
  %v3354 = vld [vmem:[#allocation5 + $0x358] sm:$0xff]
  %v3355 = vld [vmem:[#allocation5 + $0x360] sm:$0xff]
  %v3356 = vld [vmem:[#allocation5 + $0x368] sm:$0xff]
  %v3357 = vld [vmem:[#allocation5 + $0x370] sm:$0xff]
  %v3358 = vld [vmem:[#allocation5 + $0x378] sm:$0xff]
  %v3359 = vld [vmem:[#allocation5 + $0x380] sm:$0xff]
  %v3360 = vld [vmem:[#allocation5 + $0x388] sm:$0xff]
  %v3361 = vld [vmem:[#allocation5 + $0x390] sm:$0xff]
  %v3362 = vld [vmem:[#allocation5 + $0x398] sm:$0xff]
  %v3363 = vld [vmem:[#allocation5 + $0x3a0] sm:$0xff]
  %v3364 = vld [vmem:[#allocation5 + $0x3a8] sm:$0xff]
  %v3365 = vld [vmem:[#allocation5 + $0x3b0] sm:$0xff]
  %v3366 = vld [vmem:[#allocation5 + $0x3b8] sm:$0xff]
  %v3367 = vld [vmem:[#allocation5 + $0x3c0] sm:$0xff]
  %v3368 = vld [vmem:[#allocation5 + $0x3c8] sm:$0xff]
  %v3369 = vld [vmem:[#allocation5 + $0x3d0] sm:$0xff]
  %v3370 = vld [vmem:[#allocation5 + $0x3d8] sm:$0xff]
  %v3371 = vld [vmem:[#allocation5 + $0x3e0] sm:$0xff]
  %v3372 = vld [vmem:[#allocation5 + $0x3e8] sm:$0xff]
  %v3373 = vld [vmem:[#allocation5 + $0x3f0] sm:$0xff]
  %v3374 = vld [vmem:[#allocation5 + $0x3f8] sm:$0xff]
  %v3375 = vld [vmem:[#allocation5 + $0x400] sm:$0xff]
  %v3376 = vld [vmem:[#allocation5 + $0x408] sm:$0xff]
  %v3377 = vld [vmem:[#allocation5 + $0x410] sm:$0xff]
  %v3378 = vld [vmem:[#allocation5 + $0x418] sm:$0xff]
  %v3379 = vld [vmem:[#allocation5 + $0x420] sm:$0xff]
  %v3380 = vld [vmem:[#allocation5 + $0x428] sm:$0xff]
  %v3381 = vld [vmem:[#allocation5 + $0x430] sm:$0xff]
  %v3382 = vld [vmem:[#allocation5 + $0x438] sm:$0xff]
  %v3383 = vld [vmem:[#allocation5 + $0x440] sm:$0xff]
  %v3384 = vld [vmem:[#allocation5 + $0x448] sm:$0xff]
  %v3385 = vld [vmem:[#allocation5 + $0x450] sm:$0xff]
  %v3386 = vld [vmem:[#allocation5 + $0x458] sm:$0xff]
  %v3387 = vld [vmem:[#allocation5 + $0x460] sm:$0xff]
  %v3388 = vld [vmem:[#allocation5 + $0x468] sm:$0xff]
  %v3389 = vld [vmem:[#allocation5 + $0x470] sm:$0xff]
  %v3390 = vld [vmem:[#allocation5 + $0x478] sm:$0xff]
  %v3391 = vld [vmem:[#allocation5 + $0x480] sm:$0xff]
  %v3392 = vld [vmem:[#allocation5 + $0x488] sm:$0xff]
  %v3393 = vld [vmem:[#allocation5 + $0x490] sm:$0xff]
  %v3394 = vld [vmem:[#allocation5 + $0x498] sm:$0xff]
  %v3395 = vld [vmem:[#allocation5 + $0x4a0] sm:$0xff]
  %v3396 = vld [vmem:[#allocation5 + $0x4a8] sm:$0xff]
  %v3397 = vld [vmem:[#allocation5 + $0x4b0] sm:$0xff]
  %v3398 = vld [vmem:[#allocation5 + $0x4b8] sm:$0xff]
  %v3399 = vld [vmem:[#allocation5 + $0x4c0] sm:$0xff]
  %v3400 = vld [vmem:[#allocation5 + $0x4c8] sm:$0xff]
  %v3401 = vld [vmem:[#allocation5 + $0x4d0] sm:$0xff]
  %v3402 = vld [vmem:[#allocation5 + $0x4d8] sm:$0xff]
  %v3403 = vld [vmem:[#allocation5 + $0x4e0] sm:$0xff]
  %v3404 = vld [vmem:[#allocation5 + $0x4e8] sm:$0xff]
  %v3405 = vld [vmem:[#allocation5 + $0x4f0] sm:$0xff]
  %v3406 = vld [vmem:[#allocation5 + $0x4f8] sm:$0xff]
  %v3407 = vld [vmem:[#allocation5 + $0x500] sm:$0xff]
  %v3408 = vld [vmem:[#allocation5 + $0x508] sm:$0xff]
  %v3409 = vld [vmem:[#allocation5 + $0x510] sm:$0xff]
  %v3410 = vld [vmem:[#allocation5 + $0x518] sm:$0xff]
  %v3411 = vld [vmem:[#allocation5 + $0x520] sm:$0xff]
  %v3412 = vld [vmem:[#allocation5 + $0x528] sm:$0xff]
  %v3413 = vld [vmem:[#allocation5 + $0x530] sm:$0xff]
  %v3414 = vld [vmem:[#allocation5 + $0x538] sm:$0xff]
  %v3415 = vld [vmem:[#allocation5 + $0x540] sm:$0xff]
  %v3416 = vld [vmem:[#allocation5 + $0x548] sm:$0xff]
  %v3417 = vld [vmem:[#allocation5 + $0x550] sm:$0xff]
  %v3418 = vld [vmem:[#allocation5 + $0x558] sm:$0xff]
  %v3419 = vld [vmem:[#allocation5 + $0x560] sm:$0xff]
  %v3420 = vld [vmem:[#allocation5 + $0x568] sm:$0xff]
  %v3421 = vld [vmem:[#allocation5 + $0x570] sm:$0xff]
  %v3422 = vld [vmem:[#allocation5 + $0x578] sm:$0xff]
  %v3423 = vld [vmem:[#allocation5 + $0x580] sm:$0xff]
  %v3424 = vld [vmem:[#allocation5 + $0x588] sm:$0xff]
  %v3425 = vld [vmem:[#allocation5 + $0x590] sm:$0xff]
  %v3426 = vld [vmem:[#allocation5 + $0x598] sm:$0xff]
  %v3427 = vld [vmem:[#allocation5 + $0x5a0] sm:$0xff]
  %v3428 = vld [vmem:[#allocation5 + $0x5a8] sm:$0xff]
  %v3429 = vld [vmem:[#allocation5 + $0x5b0] sm:$0xff]
  %v3430 = vld [vmem:[#allocation5 + $0x5b8] sm:$0xff]
  %v3431 = vld [vmem:[#allocation5 + $0x5c0] sm:$0xff]
  %v3432 = vld [vmem:[#allocation5 + $0x5c8] sm:$0xff]
  %v3433 = vld [vmem:[#allocation5 + $0x5d0] sm:$0xff]
  %v3434 = vld [vmem:[#allocation5 + $0x5d8] sm:$0xff]
  %v3435 = vld [vmem:[#allocation5 + $0x5e0] sm:$0xff]
  %v3436 = vld [vmem:[#allocation5 + $0x5e8] sm:$0xff]
  %v3437 = vld [vmem:[#allocation5 + $0x5f0] sm:$0xff]
  %v3438 = vld [vmem:[#allocation5 + $0x5f8] sm:$0xff]
  %v3439 = vld [vmem:[#allocation5 + $0x600] sm:$0xff]
  %v3440 = vld [vmem:[#allocation5 + $0x608] sm:$0xff]
  %v3441 = vld [vmem:[#allocation5 + $0x610] sm:$0xff]
  %v3442 = vld [vmem:[#allocation5 + $0x618] sm:$0xff]
  %v3443 = vld [vmem:[#allocation5 + $0x620] sm:$0xff]
  %v3444 = vld [vmem:[#allocation5 + $0x628] sm:$0xff]
  %v3445 = vld [vmem:[#allocation5 + $0x630] sm:$0xff]
  %v3446 = vld [vmem:[#allocation5 + $0x638] sm:$0xff]
  %v3447 = vld [vmem:[#allocation5 + $0x640] sm:$0xff]
  %v3448 = vld [vmem:[#allocation5 + $0x648] sm:$0xff]
  %v3449 = vld [vmem:[#allocation5 + $0x650] sm:$0xff]
  %v3450 = vld [vmem:[#allocation5 + $0x658] sm:$0xff]
  %v3451 = vld [vmem:[#allocation5 + $0x660] sm:$0xff]
  %v3452 = vld [vmem:[#allocation5 + $0x668] sm:$0xff]
  %v3453 = vld [vmem:[#allocation5 + $0x670] sm:$0xff]
  %v3454 = vld [vmem:[#allocation5 + $0x678] sm:$0xff]
  %v3455 = vld [vmem:[#allocation5 + $0x680] sm:$0xff]
  %v3456 = vld [vmem:[#allocation5 + $0x688] sm:$0xff]
  %v3457 = vld [vmem:[#allocation5 + $0x690] sm:$0xff]
  %v3458 = vld [vmem:[#allocation5 + $0x698] sm:$0xff]
  %v3459 = vld [vmem:[#allocation5 + $0x6a0] sm:$0xff]
  %v3460 = vld [vmem:[#allocation5 + $0x6a8] sm:$0xff]
  %v3461 = vld [vmem:[#allocation5 + $0x6b0] sm:$0xff]
  %v3462 = vld [vmem:[#allocation5 + $0x6b8] sm:$0xff]
  %v3463 = vld [vmem:[#allocation5 + $0x6c0] sm:$0xff]
  %v3464 = vld [vmem:[#allocation5 + $0x6c8] sm:$0xff]
  %v3465 = vld [vmem:[#allocation5 + $0x6d0] sm:$0xff]
  %v3466 = vld [vmem:[#allocation5 + $0x6d8] sm:$0xff]
  %v3467 = vld [vmem:[#allocation5 + $0x6e0] sm:$0xff]
  %v3468 = vld [vmem:[#allocation5 + $0x6e8] sm:$0xff]
  %v3469 = vld [vmem:[#allocation5 + $0x6f0] sm:$0xff]
  %v3470 = vld [vmem:[#allocation5 + $0x6f8] sm:$0xff]
  %v3471 = vld [vmem:[#allocation5 + $0x700] sm:$0xff]
  %v3472 = vld [vmem:[#allocation5 + $0x708] sm:$0xff]
  %v3473 = vld [vmem:[#allocation5 + $0x710] sm:$0xff]
  %v3474 = vld [vmem:[#allocation5 + $0x718] sm:$0xff]
  %v3475 = vld [vmem:[#allocation5 + $0x720] sm:$0xff]
  %v3476 = vld [vmem:[#allocation5 + $0x728] sm:$0xff]
  %v3477 = vld [vmem:[#allocation5 + $0x730] sm:$0xff]
  %v3478 = vld [vmem:[#allocation5 + $0x738] sm:$0xff]
  %v3479 = vld [vmem:[#allocation5 + $0x740] sm:$0xff]
  %v3480 = vld [vmem:[#allocation5 + $0x748] sm:$0xff]
  %v3481 = vld [vmem:[#allocation5 + $0x750] sm:$0xff]
  %v3482 = vld [vmem:[#allocation5 + $0x758] sm:$0xff]
  %v3483 = vld [vmem:[#allocation5 + $0x760] sm:$0xff]
  %v3484 = vld [vmem:[#allocation5 + $0x768] sm:$0xff]
  %v3485 = vld [vmem:[#allocation5 + $0x770] sm:$0xff]
  %v3486 = vld [vmem:[#allocation5 + $0x778] sm:$0xff]
  %v3487 = vld [vmem:[#allocation5 + $0x780] sm:$0xff]
  %v3488 = vld [vmem:[#allocation5 + $0x788] sm:$0xff]
  %v3489 = vld [vmem:[#allocation5 + $0x790] sm:$0xff]
  %v3490 = vld [vmem:[#allocation5 + $0x798] sm:$0xff]
  %v3491 = vld [vmem:[#allocation5 + $0x7a0] sm:$0xff]
  %v3492 = vld [vmem:[#allocation5 + $0x7a8] sm:$0xff]
  %v3493 = vld [vmem:[#allocation5 + $0x7b0] sm:$0xff]
  %v3494 = vld [vmem:[#allocation5 + $0x7b8] sm:$0xff]
  %v3495 = vld [vmem:[#allocation5 + $0x7c0] sm:$0xff]
  %v3496 = vld [vmem:[#allocation5 + $0x7c8] sm:$0xff]
  %v3497 = vld [vmem:[#allocation5 + $0x7d0] sm:$0xff]
  %v3498 = vld [vmem:[#allocation5 + $0x7d8] sm:$0xff]
  %v3499 = vld [vmem:[#allocation5 + $0x7e0] sm:$0xff]
  %v3500 = vld [vmem:[#allocation5 + $0x7e8] sm:$0xff]
  %v3501 = vld [vmem:[#allocation5 + $0x7f0] sm:$0xff]
  %v3502 = vld [vmem:[#allocation5 + $0x7f8] sm:$0xff]
  %v3503 = vpack.c.bf16 %v3235, %v3235
  %v3504 = vpack.c.bf16 %v3236, %v3236
  %v3505 = vpack.c.bf16 %v3237, %v3237
  %v3506 = vpack.c.bf16 %v3238, %v3238
  %v3507 = vpack.c.bf16 %v3239, %v3239
  %v3508 = vpack.c.bf16 %v3240, %v3240
  %v3509 = vpack.c.bf16 %v3241, %v3241
  %v3510 = vpack.c.bf16 %v3242, %v3242
  %v3767 = vunpack.c.l.b16 %v3247
  %v3768 = vunpack.c.h.b16 %v3247
  %v3769 = vunpack.c.l.b16 %v3248
  %v3770 = vunpack.c.h.b16 %v3248
  %v3771 = vunpack.c.l.b16 %v3249
  %v3772 = vunpack.c.h.b16 %v3249
  %v3773 = vunpack.c.l.b16 %v3250
  %v3774 = vunpack.c.h.b16 %v3250
  %v3775 = vunpack.c.l.b16 %v3251
  %v3776 = vunpack.c.h.b16 %v3251
  %v3777 = vunpack.c.l.b16 %v3252
  %v3778 = vunpack.c.h.b16 %v3252
  %v3779 = vunpack.c.l.b16 %v3253
  %v3780 = vunpack.c.h.b16 %v3253
  %v3781 = vunpack.c.l.b16 %v3254
  %v3782 = vunpack.c.h.b16 %v3254
  %v3783 = vunpack.c.l.b16 %v3255
  %v3784 = vunpack.c.h.b16 %v3255
  %v3785 = vunpack.c.l.b16 %v3256
  %v3786 = vunpack.c.h.b16 %v3256
  %v3787 = vunpack.c.l.b16 %v3257
  %v3788 = vunpack.c.h.b16 %v3257
  %v3789 = vunpack.c.l.b16 %v3258
  %v3790 = vunpack.c.h.b16 %v3258
  %v3791 = vunpack.c.l.b16 %v3259
  %v3792 = vunpack.c.h.b16 %v3259
  %v3793 = vunpack.c.l.b16 %v3260
  %v3794 = vunpack.c.h.b16 %v3260
  %v3795 = vunpack.c.l.b16 %v3261
  %v3796 = vunpack.c.h.b16 %v3261
  %v3797 = vunpack.c.l.b16 %v3262
  %v3798 = vunpack.c.h.b16 %v3262
  %v3799 = vunpack.c.l.b16 %v3263
  %v3800 = vunpack.c.h.b16 %v3263
  %v3801 = vunpack.c.l.b16 %v3264
  %v3802 = vunpack.c.h.b16 %v3264
  %v3803 = vunpack.c.l.b16 %v3265
  %v3804 = vunpack.c.h.b16 %v3265
  %v3805 = vunpack.c.l.b16 %v3266
  %v3806 = vunpack.c.h.b16 %v3266
  %v3807 = vunpack.c.l.b16 %v3267
  %v3808 = vunpack.c.h.b16 %v3267
  %v3809 = vunpack.c.l.b16 %v3268
  %v3810 = vunpack.c.h.b16 %v3268
  %v3811 = vunpack.c.l.b16 %v3269
  %v3812 = vunpack.c.h.b16 %v3269
  %v3813 = vunpack.c.l.b16 %v3270
  %v3814 = vunpack.c.h.b16 %v3270
  %v3815 = vunpack.c.l.b16 %v3271
  %v3816 = vunpack.c.h.b16 %v3271
  %v3817 = vunpack.c.l.b16 %v3272
  %v3818 = vunpack.c.h.b16 %v3272
  %v3819 = vunpack.c.l.b16 %v3273
  %v3820 = vunpack.c.h.b16 %v3273
  %v3821 = vunpack.c.l.b16 %v3274
  %v3822 = vunpack.c.h.b16 %v3274
  %v3823 = vunpack.c.l.b16 %v3275
  %v3824 = vunpack.c.h.b16 %v3275
  %v3825 = vunpack.c.l.b16 %v3276
  %v3826 = vunpack.c.h.b16 %v3276
  %v3827 = vunpack.c.l.b16 %v3277
  %v3828 = vunpack.c.h.b16 %v3277
  %v3829 = vunpack.c.l.b16 %v3278
  %v3830 = vunpack.c.h.b16 %v3278
  %v3831 = vunpack.c.l.b16 %v3279
  %v3832 = vunpack.c.h.b16 %v3279
  %v3833 = vunpack.c.l.b16 %v3280
  %v3834 = vunpack.c.h.b16 %v3280
  %v3835 = vunpack.c.l.b16 %v3281
  %v3836 = vunpack.c.h.b16 %v3281
  %v3837 = vunpack.c.l.b16 %v3282
  %v3838 = vunpack.c.h.b16 %v3282
  %v3839 = vunpack.c.l.b16 %v3283
  %v3840 = vunpack.c.h.b16 %v3283
  %v3841 = vunpack.c.l.b16 %v3284
  %v3842 = vunpack.c.h.b16 %v3284
  %v3843 = vunpack.c.l.b16 %v3285
  %v3844 = vunpack.c.h.b16 %v3285
  %v3845 = vunpack.c.l.b16 %v3286
  %v3846 = vunpack.c.h.b16 %v3286
  %v3847 = vunpack.c.l.b16 %v3287
  %v3848 = vunpack.c.h.b16 %v3287
  %v3849 = vunpack.c.l.b16 %v3288
  %v3850 = vunpack.c.h.b16 %v3288
  %v3851 = vunpack.c.l.b16 %v3289
  %v3852 = vunpack.c.h.b16 %v3289
  %v3853 = vunpack.c.l.b16 %v3290
  %v3854 = vunpack.c.h.b16 %v3290
  %v3855 = vunpack.c.l.b16 %v3291
  %v3856 = vunpack.c.h.b16 %v3291
  %v3857 = vunpack.c.l.b16 %v3292
  %v3858 = vunpack.c.h.b16 %v3292
  %v3859 = vunpack.c.l.b16 %v3293
  %v3860 = vunpack.c.h.b16 %v3293
  %v3861 = vunpack.c.l.b16 %v3294
  %v3862 = vunpack.c.h.b16 %v3294
  %v3863 = vunpack.c.l.b16 %v3295
  %v3864 = vunpack.c.h.b16 %v3295
  %v3865 = vunpack.c.l.b16 %v3296
  %v3866 = vunpack.c.h.b16 %v3296
  %v3867 = vunpack.c.l.b16 %v3297
  %v3868 = vunpack.c.h.b16 %v3297
  %v3869 = vunpack.c.l.b16 %v3298
  %v3870 = vunpack.c.h.b16 %v3298
  %v3871 = vunpack.c.l.b16 %v3299
  %v3872 = vunpack.c.h.b16 %v3299
  %v3873 = vunpack.c.l.b16 %v3300
  %v3874 = vunpack.c.h.b16 %v3300
  %v3875 = vunpack.c.l.b16 %v3301
  %v3876 = vunpack.c.h.b16 %v3301
  %v3877 = vunpack.c.l.b16 %v3302
  %v3878 = vunpack.c.h.b16 %v3302
  %v3879 = vunpack.c.l.b16 %v3303
  %v3880 = vunpack.c.h.b16 %v3303
  %v3881 = vunpack.c.l.b16 %v3304
  %v3882 = vunpack.c.h.b16 %v3304
  %v3883 = vunpack.c.l.b16 %v3305
  %v3884 = vunpack.c.h.b16 %v3305
  %v3885 = vunpack.c.l.b16 %v3306
  %v3886 = vunpack.c.h.b16 %v3306
  %v3887 = vunpack.c.l.b16 %v3307
  %v3888 = vunpack.c.h.b16 %v3307
  %v3889 = vunpack.c.l.b16 %v3308
  %v3890 = vunpack.c.h.b16 %v3308
  %v3891 = vunpack.c.l.b16 %v3309
  %v3892 = vunpack.c.h.b16 %v3309
  %v3893 = vunpack.c.l.b16 %v3310
  %v3894 = vunpack.c.h.b16 %v3310
  %v3895 = vunpack.c.l.b16 %v3311
  %v3896 = vunpack.c.h.b16 %v3311
  %v3897 = vunpack.c.l.b16 %v3312
  %v3898 = vunpack.c.h.b16 %v3312
  %v3899 = vunpack.c.l.b16 %v3313
  %v3900 = vunpack.c.h.b16 %v3313
  %v3901 = vunpack.c.l.b16 %v3314
  %v3902 = vunpack.c.h.b16 %v3314
  %v3903 = vunpack.c.l.b16 %v3315
  %v3904 = vunpack.c.h.b16 %v3315
  %v3905 = vunpack.c.l.b16 %v3316
  %v3906 = vunpack.c.h.b16 %v3316
  %v3907 = vunpack.c.l.b16 %v3317
  %v3908 = vunpack.c.h.b16 %v3317
  %v3909 = vunpack.c.l.b16 %v3318
  %v3910 = vunpack.c.h.b16 %v3318
  %v3911 = vunpack.c.l.b16 %v3319
  %v3912 = vunpack.c.h.b16 %v3319
  %v3913 = vunpack.c.l.b16 %v3320
  %v3914 = vunpack.c.h.b16 %v3320
  %v3915 = vunpack.c.l.b16 %v3321
  %v3916 = vunpack.c.h.b16 %v3321
  %v3917 = vunpack.c.l.b16 %v3322
  %v3918 = vunpack.c.h.b16 %v3322
  %v3919 = vunpack.c.l.b16 %v3323
  %v3920 = vunpack.c.h.b16 %v3323
  %v3921 = vunpack.c.l.b16 %v3324
  %v3922 = vunpack.c.h.b16 %v3324
  %v3923 = vunpack.c.l.b16 %v3325
  %v3924 = vunpack.c.h.b16 %v3325
  %v3925 = vunpack.c.l.b16 %v3326
  %v3926 = vunpack.c.h.b16 %v3326
  %v3927 = vunpack.c.l.b16 %v3327
  %v3928 = vunpack.c.h.b16 %v3327
  %v3929 = vunpack.c.l.b16 %v3328
  %v3930 = vunpack.c.h.b16 %v3328
  %v3931 = vunpack.c.l.b16 %v3329
  %v3932 = vunpack.c.h.b16 %v3329
  %v3933 = vunpack.c.l.b16 %v3330
  %v3934 = vunpack.c.h.b16 %v3330
  %v3935 = vunpack.c.l.b16 %v3331
  %v3936 = vunpack.c.h.b16 %v3331
  %v3937 = vunpack.c.l.b16 %v3332
  %v3938 = vunpack.c.h.b16 %v3332
  %v3939 = vunpack.c.l.b16 %v3333
  %v3940 = vunpack.c.h.b16 %v3333
  %v3941 = vunpack.c.l.b16 %v3334
  %v3942 = vunpack.c.h.b16 %v3334
  %v3943 = vunpack.c.l.b16 %v3335
  %v3944 = vunpack.c.h.b16 %v3335
  %v3945 = vunpack.c.l.b16 %v3336
  %v3946 = vunpack.c.h.b16 %v3336
  %v3947 = vunpack.c.l.b16 %v3337
  %v3948 = vunpack.c.h.b16 %v3337
  %v3949 = vunpack.c.l.b16 %v3338
  %v3950 = vunpack.c.h.b16 %v3338
  %v3951 = vunpack.c.l.b16 %v3339
  %v3952 = vunpack.c.h.b16 %v3339
  %v3953 = vunpack.c.l.b16 %v3340
  %v3954 = vunpack.c.h.b16 %v3340
  %v3955 = vunpack.c.l.b16 %v3341
  %v3956 = vunpack.c.h.b16 %v3341
  %v3957 = vunpack.c.l.b16 %v3342
  %v3958 = vunpack.c.h.b16 %v3342
  %v3959 = vunpack.c.l.b16 %v3343
  %v3960 = vunpack.c.h.b16 %v3343
  %v3961 = vunpack.c.l.b16 %v3344
  %v3962 = vunpack.c.h.b16 %v3344
  %v3963 = vunpack.c.l.b16 %v3345
  %v3964 = vunpack.c.h.b16 %v3345
  %v3965 = vunpack.c.l.b16 %v3346
  %v3966 = vunpack.c.h.b16 %v3346
  %v3967 = vunpack.c.l.b16 %v3347
  %v3968 = vunpack.c.h.b16 %v3347
  %v3969 = vunpack.c.l.b16 %v3348
  %v3970 = vunpack.c.h.b16 %v3348
  %v3971 = vunpack.c.l.b16 %v3349
  %v3972 = vunpack.c.h.b16 %v3349
  %v3973 = vunpack.c.l.b16 %v3350
  %v3974 = vunpack.c.h.b16 %v3350
  %v3975 = vunpack.c.l.b16 %v3351
  %v3976 = vunpack.c.h.b16 %v3351
  %v3977 = vunpack.c.l.b16 %v3352
  %v3978 = vunpack.c.h.b16 %v3352
  %v3979 = vunpack.c.l.b16 %v3353
  %v3980 = vunpack.c.h.b16 %v3353
  %v3981 = vunpack.c.l.b16 %v3354
  %v3982 = vunpack.c.h.b16 %v3354
  %v3983 = vunpack.c.l.b16 %v3355
  %v3984 = vunpack.c.h.b16 %v3355
  %v3985 = vunpack.c.l.b16 %v3356
  %v3986 = vunpack.c.h.b16 %v3356
  %v3987 = vunpack.c.l.b16 %v3357
  %v3988 = vunpack.c.h.b16 %v3357
  %v3989 = vunpack.c.l.b16 %v3358
  %v3990 = vunpack.c.h.b16 %v3358
  %v3991 = vunpack.c.l.b16 %v3359
  %v3992 = vunpack.c.h.b16 %v3359
  %v3993 = vunpack.c.l.b16 %v3360
  %v3994 = vunpack.c.h.b16 %v3360
  %v3995 = vunpack.c.l.b16 %v3361
  %v3996 = vunpack.c.h.b16 %v3361
  %v3997 = vunpack.c.l.b16 %v3362
  %v3998 = vunpack.c.h.b16 %v3362
  %v3999 = vunpack.c.l.b16 %v3363
  %v4000 = vunpack.c.h.b16 %v3363
  %v4001 = vunpack.c.l.b16 %v3364
  %v4002 = vunpack.c.h.b16 %v3364
  %v4003 = vunpack.c.l.b16 %v3365
  %v4004 = vunpack.c.h.b16 %v3365
  %v4005 = vunpack.c.l.b16 %v3366
  %v4006 = vunpack.c.h.b16 %v3366
  %v4007 = vunpack.c.l.b16 %v3367
  %v4008 = vunpack.c.h.b16 %v3367
  %v4009 = vunpack.c.l.b16 %v3368
  %v4010 = vunpack.c.h.b16 %v3368
  %v4011 = vunpack.c.l.b16 %v3369
  %v4012 = vunpack.c.h.b16 %v3369
  %v4013 = vunpack.c.l.b16 %v3370
  %v4014 = vunpack.c.h.b16 %v3370
  %v4015 = vunpack.c.l.b16 %v3371
  %v4016 = vunpack.c.h.b16 %v3371
  %v4017 = vunpack.c.l.b16 %v3372
  %v4018 = vunpack.c.h.b16 %v3372
  %v4019 = vunpack.c.l.b16 %v3373
  %v4020 = vunpack.c.h.b16 %v3373
  %v4021 = vunpack.c.l.b16 %v3374
  %v4022 = vunpack.c.h.b16 %v3374
  %v4023 = vunpack.c.l.b16 %v3375
  %v4024 = vunpack.c.h.b16 %v3375
  %v4025 = vunpack.c.l.b16 %v3376
  %v4026 = vunpack.c.h.b16 %v3376
  %v4027 = vunpack.c.l.b16 %v3377
  %v4028 = vunpack.c.h.b16 %v3377
  %v4029 = vunpack.c.l.b16 %v3378
  %v4030 = vunpack.c.h.b16 %v3378
  %v4031 = vunpack.c.l.b16 %v3379
  %v4032 = vunpack.c.h.b16 %v3379
  %v4033 = vunpack.c.l.b16 %v3380
  %v4034 = vunpack.c.h.b16 %v3380
  %v4035 = vunpack.c.l.b16 %v3381
  %v4036 = vunpack.c.h.b16 %v3381
  %v4037 = vunpack.c.l.b16 %v3382
  %v4038 = vunpack.c.h.b16 %v3382
  %v4039 = vunpack.c.l.b16 %v3383
  %v4040 = vunpack.c.h.b16 %v3383
  %v4041 = vunpack.c.l.b16 %v3384
  %v4042 = vunpack.c.h.b16 %v3384
  %v4043 = vunpack.c.l.b16 %v3385
  %v4044 = vunpack.c.h.b16 %v3385
  %v4045 = vunpack.c.l.b16 %v3386
  %v4046 = vunpack.c.h.b16 %v3386
  %v4047 = vunpack.c.l.b16 %v3387
  %v4048 = vunpack.c.h.b16 %v3387
  %v4049 = vunpack.c.l.b16 %v3388
  %v4050 = vunpack.c.h.b16 %v3388
  %v4051 = vunpack.c.l.b16 %v3389
  %v4052 = vunpack.c.h.b16 %v3389
  %v4053 = vunpack.c.l.b16 %v3390
  %v4054 = vunpack.c.h.b16 %v3390
  %v4055 = vunpack.c.l.b16 %v3391
  %v4056 = vunpack.c.h.b16 %v3391
  %v4057 = vunpack.c.l.b16 %v3392
  %v4058 = vunpack.c.h.b16 %v3392
  %v4059 = vunpack.c.l.b16 %v3393
  %v4060 = vunpack.c.h.b16 %v3393
  %v4061 = vunpack.c.l.b16 %v3394
  %v4062 = vunpack.c.h.b16 %v3394
  %v4063 = vunpack.c.l.b16 %v3395
  %v4064 = vunpack.c.h.b16 %v3395
  %v4065 = vunpack.c.l.b16 %v3396
  %v4066 = vunpack.c.h.b16 %v3396
  %v4067 = vunpack.c.l.b16 %v3397
  %v4068 = vunpack.c.h.b16 %v3397
  %v4069 = vunpack.c.l.b16 %v3398
  %v4070 = vunpack.c.h.b16 %v3398
  %v4071 = vunpack.c.l.b16 %v3399
  %v4072 = vunpack.c.h.b16 %v3399
  %v4073 = vunpack.c.l.b16 %v3400
  %v4074 = vunpack.c.h.b16 %v3400
  %v4075 = vunpack.c.l.b16 %v3401
  %v4076 = vunpack.c.h.b16 %v3401
  %v4077 = vunpack.c.l.b16 %v3402
  %v4078 = vunpack.c.h.b16 %v3402
  %v4079 = vunpack.c.l.b16 %v3403
  %v4080 = vunpack.c.h.b16 %v3403
  %v4081 = vunpack.c.l.b16 %v3404
  %v4082 = vunpack.c.h.b16 %v3404
  %v4083 = vunpack.c.l.b16 %v3405
  %v4084 = vunpack.c.h.b16 %v3405
  %v4085 = vunpack.c.l.b16 %v3406
  %v4086 = vunpack.c.h.b16 %v3406
  %v4087 = vunpack.c.l.b16 %v3407
  %v4088 = vunpack.c.h.b16 %v3407
  %v4089 = vunpack.c.l.b16 %v3408
  %v4090 = vunpack.c.h.b16 %v3408
  %v4091 = vunpack.c.l.b16 %v3409
  %v4092 = vunpack.c.h.b16 %v3409
  %v4093 = vunpack.c.l.b16 %v3410
  %v4094 = vunpack.c.h.b16 %v3410
  %v4095 = vunpack.c.l.b16 %v3411
  %v4096 = vunpack.c.h.b16 %v3411
  %v4097 = vunpack.c.l.b16 %v3412
  %v4098 = vunpack.c.h.b16 %v3412
  %v4099 = vunpack.c.l.b16 %v3413
  %v4100 = vunpack.c.h.b16 %v3413
  %v4101 = vunpack.c.l.b16 %v3414
  %v4102 = vunpack.c.h.b16 %v3414
  %v4103 = vunpack.c.l.b16 %v3415
  %v4104 = vunpack.c.h.b16 %v3415
  %v4105 = vunpack.c.l.b16 %v3416
  %v4106 = vunpack.c.h.b16 %v3416
  %v4107 = vunpack.c.l.b16 %v3417
  %v4108 = vunpack.c.h.b16 %v3417
  %v4109 = vunpack.c.l.b16 %v3418
  %v4110 = vunpack.c.h.b16 %v3418
  %v4111 = vunpack.c.l.b16 %v3419
  %v4112 = vunpack.c.h.b16 %v3419
  %v4113 = vunpack.c.l.b16 %v3420
  %v4114 = vunpack.c.h.b16 %v3420
  %v4115 = vunpack.c.l.b16 %v3421
  %v4116 = vunpack.c.h.b16 %v3421
  %v4117 = vunpack.c.l.b16 %v3422
  %v4118 = vunpack.c.h.b16 %v3422
  %v4119 = vunpack.c.l.b16 %v3423
  %v4120 = vunpack.c.h.b16 %v3423
  %v4121 = vunpack.c.l.b16 %v3424
  %v4122 = vunpack.c.h.b16 %v3424
  %v4123 = vunpack.c.l.b16 %v3425
  %v4124 = vunpack.c.h.b16 %v3425
  %v4125 = vunpack.c.l.b16 %v3426
  %v4126 = vunpack.c.h.b16 %v3426
  %v4127 = vunpack.c.l.b16 %v3427
  %v4128 = vunpack.c.h.b16 %v3427
  %v4129 = vunpack.c.l.b16 %v3428
  %v4130 = vunpack.c.h.b16 %v3428
  %v4131 = vunpack.c.l.b16 %v3429
  %v4132 = vunpack.c.h.b16 %v3429
  %v4133 = vunpack.c.l.b16 %v3430
  %v4134 = vunpack.c.h.b16 %v3430
  %v4135 = vunpack.c.l.b16 %v3431
  %v4136 = vunpack.c.h.b16 %v3431
  %v4137 = vunpack.c.l.b16 %v3432
  %v4138 = vunpack.c.h.b16 %v3432
  %v4139 = vunpack.c.l.b16 %v3433
  %v4140 = vunpack.c.h.b16 %v3433
  %v4141 = vunpack.c.l.b16 %v3434
  %v4142 = vunpack.c.h.b16 %v3434
  %v4143 = vunpack.c.l.b16 %v3435
  %v4144 = vunpack.c.h.b16 %v3435
  %v4145 = vunpack.c.l.b16 %v3436
  %v4146 = vunpack.c.h.b16 %v3436
  %v4147 = vunpack.c.l.b16 %v3437
  %v4148 = vunpack.c.h.b16 %v3437
  %v4149 = vunpack.c.l.b16 %v3438
  %v4150 = vunpack.c.h.b16 %v3438
  %v4151 = vunpack.c.l.b16 %v3439
  %v4152 = vunpack.c.h.b16 %v3439
  %v4153 = vunpack.c.l.b16 %v3440
  %v4154 = vunpack.c.h.b16 %v3440
  %v4155 = vunpack.c.l.b16 %v3441
  %v4156 = vunpack.c.h.b16 %v3441
  %v4157 = vunpack.c.l.b16 %v3442
  %v4158 = vunpack.c.h.b16 %v3442
  %v4159 = vunpack.c.l.b16 %v3443
  %v4160 = vunpack.c.h.b16 %v3443
  %v4161 = vunpack.c.l.b16 %v3444
  %v4162 = vunpack.c.h.b16 %v3444
  %v4163 = vunpack.c.l.b16 %v3445
  %v4164 = vunpack.c.h.b16 %v3445
  %v4165 = vunpack.c.l.b16 %v3446
  %v4166 = vunpack.c.h.b16 %v3446
  %v4167 = vunpack.c.l.b16 %v3447
  %v4168 = vunpack.c.h.b16 %v3447
  %v4169 = vunpack.c.l.b16 %v3448
  %v4170 = vunpack.c.h.b16 %v3448
  %v4171 = vunpack.c.l.b16 %v3449
  %v4172 = vunpack.c.h.b16 %v3449
  %v4173 = vunpack.c.l.b16 %v3450
  %v4174 = vunpack.c.h.b16 %v3450
  %v4175 = vunpack.c.l.b16 %v3451
  %v4176 = vunpack.c.h.b16 %v3451
  %v4177 = vunpack.c.l.b16 %v3452
  %v4178 = vunpack.c.h.b16 %v3452
  %v4179 = vunpack.c.l.b16 %v3453
  %v4180 = vunpack.c.h.b16 %v3453
  %v4181 = vunpack.c.l.b16 %v3454
  %v4182 = vunpack.c.h.b16 %v3454
  %v4183 = vunpack.c.l.b16 %v3455
  %v4184 = vunpack.c.h.b16 %v3455
  %v4185 = vunpack.c.l.b16 %v3456
  %v4186 = vunpack.c.h.b16 %v3456
  %v4187 = vunpack.c.l.b16 %v3457
  %v4188 = vunpack.c.h.b16 %v3457
  %v4189 = vunpack.c.l.b16 %v3458
  %v4190 = vunpack.c.h.b16 %v3458
  %v4191 = vunpack.c.l.b16 %v3459
  %v4192 = vunpack.c.h.b16 %v3459
  %v4193 = vunpack.c.l.b16 %v3460
  %v4194 = vunpack.c.h.b16 %v3460
  %v4195 = vunpack.c.l.b16 %v3461
  %v4196 = vunpack.c.h.b16 %v3461
  %v4197 = vunpack.c.l.b16 %v3462
  %v4198 = vunpack.c.h.b16 %v3462
  %v4199 = vunpack.c.l.b16 %v3463
  %v4200 = vunpack.c.h.b16 %v3463
  %v4201 = vunpack.c.l.b16 %v3464
  %v4202 = vunpack.c.h.b16 %v3464
  %v4203 = vunpack.c.l.b16 %v3465
  %v4204 = vunpack.c.h.b16 %v3465
  %v4205 = vunpack.c.l.b16 %v3466
  %v4206 = vunpack.c.h.b16 %v3466
  %v4207 = vunpack.c.l.b16 %v3467
  %v4208 = vunpack.c.h.b16 %v3467
  %v4209 = vunpack.c.l.b16 %v3468
  %v4210 = vunpack.c.h.b16 %v3468
  %v4211 = vunpack.c.l.b16 %v3469
  %v4212 = vunpack.c.h.b16 %v3469
  %v4213 = vunpack.c.l.b16 %v3470
  %v4214 = vunpack.c.h.b16 %v3470
  %v4215 = vunpack.c.l.b16 %v3471
  %v4216 = vunpack.c.h.b16 %v3471
  %v4217 = vunpack.c.l.b16 %v3472
  %v4218 = vunpack.c.h.b16 %v3472
  %v4219 = vunpack.c.l.b16 %v3473
  %v4220 = vunpack.c.h.b16 %v3473
  %v4221 = vunpack.c.l.b16 %v3474
  %v4222 = vunpack.c.h.b16 %v3474
  %v4223 = vunpack.c.l.b16 %v3475
  %v4224 = vunpack.c.h.b16 %v3475
  %v4225 = vunpack.c.l.b16 %v3476
  %v4226 = vunpack.c.h.b16 %v3476
  %v4227 = vunpack.c.l.b16 %v3477
  %v4228 = vunpack.c.h.b16 %v3477
  %v4229 = vunpack.c.l.b16 %v3478
  %v4230 = vunpack.c.h.b16 %v3478
  %v4231 = vunpack.c.l.b16 %v3479
  %v4232 = vunpack.c.h.b16 %v3479
  %v4233 = vunpack.c.l.b16 %v3480
  %v4234 = vunpack.c.h.b16 %v3480
  %v4235 = vunpack.c.l.b16 %v3481
  %v4236 = vunpack.c.h.b16 %v3481
  %v4237 = vunpack.c.l.b16 %v3482
  %v4238 = vunpack.c.h.b16 %v3482
  %v4239 = vunpack.c.l.b16 %v3483
  %v4240 = vunpack.c.h.b16 %v3483
  %v4241 = vunpack.c.l.b16 %v3484
  %v4242 = vunpack.c.h.b16 %v3484
  %v4243 = vunpack.c.l.b16 %v3485
  %v4244 = vunpack.c.h.b16 %v3485
  %v4245 = vunpack.c.l.b16 %v3486
  %v4246 = vunpack.c.h.b16 %v3486
  %v4247 = vunpack.c.l.b16 %v3487
  %v4248 = vunpack.c.h.b16 %v3487
  %v4249 = vunpack.c.l.b16 %v3488
  %v4250 = vunpack.c.h.b16 %v3488
  %v4251 = vunpack.c.l.b16 %v3489
  %v4252 = vunpack.c.h.b16 %v3489
  %v4253 = vunpack.c.l.b16 %v3490
  %v4254 = vunpack.c.h.b16 %v3490
  %v4255 = vunpack.c.l.b16 %v3491
  %v4256 = vunpack.c.h.b16 %v3491
  %v4257 = vunpack.c.l.b16 %v3492
  %v4258 = vunpack.c.h.b16 %v3492
  %v4259 = vunpack.c.l.b16 %v3493
  %v4260 = vunpack.c.h.b16 %v3493
  %v4261 = vunpack.c.l.b16 %v3494
  %v4262 = vunpack.c.h.b16 %v3494
  %v4263 = vunpack.c.l.b16 %v3495
  %v4264 = vunpack.c.h.b16 %v3495
  %v4265 = vunpack.c.l.b16 %v3496
  %v4266 = vunpack.c.h.b16 %v3496
  %v4267 = vunpack.c.l.b16 %v3497
  %v4268 = vunpack.c.h.b16 %v3497
  %v4269 = vunpack.c.l.b16 %v3498
  %v4270 = vunpack.c.h.b16 %v3498
  %v4271 = vunpack.c.l.b16 %v3499
  %v4272 = vunpack.c.h.b16 %v3499
  %v4273 = vunpack.c.l.b16 %v3500
  %v4274 = vunpack.c.h.b16 %v3500
  %v4275 = vunpack.c.l.b16 %v3501
  %v4276 = vunpack.c.h.b16 %v3501
  %v4277 = vunpack.c.l.b16 %v3502
  %v4278 = vunpack.c.h.b16 %v3502
  %v4279 = vpack.c.b16 %v3771, %v3767
  %v4280 = vpack.c.b16 %v3772, %v3768
  %v4281 = vpack.c.b16 %v3773, %v3769
  %v4282 = vpack.c.b16 %v3774, %v3770
  %v4283 = vpack.c.b16 %v3779, %v3775
  %v4284 = vpack.c.b16 %v3780, %v3776
  %v4285 = vpack.c.b16 %v3781, %v3777
  %v4286 = vpack.c.b16 %v3782, %v3778
  %v4287 = vpack.c.b16 %v3787, %v3783
  %v4288 = vpack.c.b16 %v3788, %v3784
  %v4289 = vpack.c.b16 %v3789, %v3785
  %v4290 = vpack.c.b16 %v3790, %v3786
  %v4291 = vpack.c.b16 %v3795, %v3791
  %v4292 = vpack.c.b16 %v3796, %v3792
  %v4293 = vpack.c.b16 %v3797, %v3793
  %v4294 = vpack.c.b16 %v3798, %v3794
  %v4295 = vpack.c.b16 %v3803, %v3799
  %v4296 = vpack.c.b16 %v3804, %v3800
  %v4297 = vpack.c.b16 %v3805, %v3801
  %v4298 = vpack.c.b16 %v3806, %v3802
  %v4299 = vpack.c.b16 %v3811, %v3807
  %v4300 = vpack.c.b16 %v3812, %v3808
  %v4301 = vpack.c.b16 %v3813, %v3809
  %v4302 = vpack.c.b16 %v3814, %v3810
  %v4303 = vpack.c.b16 %v3819, %v3815
  %v4304 = vpack.c.b16 %v3820, %v3816
  %v4305 = vpack.c.b16 %v3821, %v3817
  %v4306 = vpack.c.b16 %v3822, %v3818
  %v4307 = vpack.c.b16 %v3827, %v3823
  %v4308 = vpack.c.b16 %v3828, %v3824
  %v4309 = vpack.c.b16 %v3829, %v3825
  %v4310 = vpack.c.b16 %v3830, %v3826
  %v4311 = vpack.c.b16 %v3835, %v3831
  %v4312 = vpack.c.b16 %v3836, %v3832
  %v4313 = vpack.c.b16 %v3837, %v3833
  %v4314 = vpack.c.b16 %v3838, %v3834
  %v4315 = vpack.c.b16 %v3843, %v3839
  %v4316 = vpack.c.b16 %v3844, %v3840
  %v4317 = vpack.c.b16 %v3845, %v3841
  %v4318 = vpack.c.b16 %v3846, %v3842
  %v4319 = vpack.c.b16 %v3851, %v3847
  %v4320 = vpack.c.b16 %v3852, %v3848
  %v4321 = vpack.c.b16 %v3853, %v3849
  %v4322 = vpack.c.b16 %v3854, %v3850
  %v4323 = vpack.c.b16 %v3859, %v3855
  %v4324 = vpack.c.b16 %v3860, %v3856
  %v4325 = vpack.c.b16 %v3861, %v3857
  %v4326 = vpack.c.b16 %v3862, %v3858
  %v4327 = vpack.c.b16 %v3867, %v3863
  %v4328 = vpack.c.b16 %v3868, %v3864
  %v4329 = vpack.c.b16 %v3869, %v3865
  %v4330 = vpack.c.b16 %v3870, %v3866
  %v4331 = vpack.c.b16 %v3875, %v3871
  %v4332 = vpack.c.b16 %v3876, %v3872
  %v4333 = vpack.c.b16 %v3877, %v3873
  %v4334 = vpack.c.b16 %v3878, %v3874
  %v4335 = vpack.c.b16 %v3883, %v3879
  %v4336 = vpack.c.b16 %v3884, %v3880
  %v4337 = vpack.c.b16 %v3885, %v3881
  %v4338 = vpack.c.b16 %v3886, %v3882
  %v4339 = vpack.c.b16 %v3891, %v3887
  %v4340 = vpack.c.b16 %v3892, %v3888
  %v4341 = vpack.c.b16 %v3893, %v3889
  %v4342 = vpack.c.b16 %v3894, %v3890
  %v4343 = vpack.c.b16 %v3899, %v3895
  %v4344 = vpack.c.b16 %v3900, %v3896
  %v4345 = vpack.c.b16 %v3901, %v3897
  %v4346 = vpack.c.b16 %v3902, %v3898
  %v4347 = vpack.c.b16 %v3907, %v3903
  %v4348 = vpack.c.b16 %v3908, %v3904
  %v4349 = vpack.c.b16 %v3909, %v3905
  %v4350 = vpack.c.b16 %v3910, %v3906
  %v4351 = vpack.c.b16 %v3915, %v3911
  %v4352 = vpack.c.b16 %v3916, %v3912
  %v4353 = vpack.c.b16 %v3917, %v3913
  %v4354 = vpack.c.b16 %v3918, %v3914
  %v4355 = vpack.c.b16 %v3923, %v3919
  %v4356 = vpack.c.b16 %v3924, %v3920
  %v4357 = vpack.c.b16 %v3925, %v3921
  %v4358 = vpack.c.b16 %v3926, %v3922
  %v4359 = vpack.c.b16 %v3931, %v3927
  %v4360 = vpack.c.b16 %v3932, %v3928
  %v4361 = vpack.c.b16 %v3933, %v3929
  %v4362 = vpack.c.b16 %v3934, %v3930
  %v4363 = vpack.c.b16 %v3939, %v3935
  %v4364 = vpack.c.b16 %v3940, %v3936
  %v4365 = vpack.c.b16 %v3941, %v3937
  %v4366 = vpack.c.b16 %v3942, %v3938
  %v4367 = vpack.c.b16 %v3947, %v3943
  %v4368 = vpack.c.b16 %v3948, %v3944
  %v4369 = vpack.c.b16 %v3949, %v3945
  %v4370 = vpack.c.b16 %v3950, %v3946
  %v4371 = vpack.c.b16 %v3955, %v3951
  %v4372 = vpack.c.b16 %v3956, %v3952
  %v4373 = vpack.c.b16 %v3957, %v3953
  %v4374 = vpack.c.b16 %v3958, %v3954
  %v4375 = vpack.c.b16 %v3963, %v3959
  %v4376 = vpack.c.b16 %v3964, %v3960
  %v4377 = vpack.c.b16 %v3965, %v3961
  %v4378 = vpack.c.b16 %v3966, %v3962
  %v4379 = vpack.c.b16 %v3971, %v3967
  %v4380 = vpack.c.b16 %v3972, %v3968
  %v4381 = vpack.c.b16 %v3973, %v3969
  %v4382 = vpack.c.b16 %v3974, %v3970
  %v4383 = vpack.c.b16 %v3979, %v3975
  %v4384 = vpack.c.b16 %v3980, %v3976
  %v4385 = vpack.c.b16 %v3981, %v3977
  %v4386 = vpack.c.b16 %v3982, %v3978
  %v4387 = vpack.c.b16 %v3987, %v3983
  %v4388 = vpack.c.b16 %v3988, %v3984
  %v4389 = vpack.c.b16 %v3989, %v3985
  %v4390 = vpack.c.b16 %v3990, %v3986
  %v4391 = vpack.c.b16 %v3995, %v3991
  %v4392 = vpack.c.b16 %v3996, %v3992
  %v4393 = vpack.c.b16 %v3997, %v3993
  %v4394 = vpack.c.b16 %v3998, %v3994
  %v4395 = vpack.c.b16 %v4003, %v3999
  %v4396 = vpack.c.b16 %v4004, %v4000
  %v4397 = vpack.c.b16 %v4005, %v4001
  %v4398 = vpack.c.b16 %v4006, %v4002
  %v4399 = vpack.c.b16 %v4011, %v4007
  %v4400 = vpack.c.b16 %v4012, %v4008
  %v4401 = vpack.c.b16 %v4013, %v4009
  %v4402 = vpack.c.b16 %v4014, %v4010
  %v4403 = vpack.c.b16 %v4019, %v4015
  %v4404 = vpack.c.b16 %v4020, %v4016
  %v4405 = vpack.c.b16 %v4021, %v4017
  %v4406 = vpack.c.b16 %v4022, %v4018
  %v4407 = vpack.c.b16 %v4027, %v4023
  %v4408 = vpack.c.b16 %v4028, %v4024
  %v4409 = vpack.c.b16 %v4029, %v4025
  %v4410 = vpack.c.b16 %v4030, %v4026
  %v4411 = vpack.c.b16 %v4035, %v4031
  %v4412 = vpack.c.b16 %v4036, %v4032
  %v4413 = vpack.c.b16 %v4037, %v4033
  %v4414 = vpack.c.b16 %v4038, %v4034
  %v4415 = vpack.c.b16 %v4043, %v4039
  %v4416 = vpack.c.b16 %v4044, %v4040
  %v4417 = vpack.c.b16 %v4045, %v4041
  %v4418 = vpack.c.b16 %v4046, %v4042
  %v4419 = vpack.c.b16 %v4051, %v4047
  %v4420 = vpack.c.b16 %v4052, %v4048
  %v4421 = vpack.c.b16 %v4053, %v4049
  %v4422 = vpack.c.b16 %v4054, %v4050
  %v4423 = vpack.c.b16 %v4059, %v4055
  %v4424 = vpack.c.b16 %v4060, %v4056
  %v4425 = vpack.c.b16 %v4061, %v4057
  %v4426 = vpack.c.b16 %v4062, %v4058
  %v4427 = vpack.c.b16 %v4067, %v4063
  %v4428 = vpack.c.b16 %v4068, %v4064
  %v4429 = vpack.c.b16 %v4069, %v4065
  %v4430 = vpack.c.b16 %v4070, %v4066
  %v4431 = vpack.c.b16 %v4075, %v4071
  %v4432 = vpack.c.b16 %v4076, %v4072
  %v4433 = vpack.c.b16 %v4077, %v4073
  %v4434 = vpack.c.b16 %v4078, %v4074
  %v4435 = vpack.c.b16 %v4083, %v4079
  %v4436 = vpack.c.b16 %v4084, %v4080
  %v4437 = vpack.c.b16 %v4085, %v4081
  %v4438 = vpack.c.b16 %v4086, %v4082
  %v4439 = vpack.c.b16 %v4091, %v4087
  %v4440 = vpack.c.b16 %v4092, %v4088
  %v4441 = vpack.c.b16 %v4093, %v4089
  %v4442 = vpack.c.b16 %v4094, %v4090
  %v4443 = vpack.c.b16 %v4099, %v4095
  %v4444 = vpack.c.b16 %v4100, %v4096
  %v4445 = vpack.c.b16 %v4101, %v4097
  %v4446 = vpack.c.b16 %v4102, %v4098
  %v4447 = vpack.c.b16 %v4107, %v4103
  %v4448 = vpack.c.b16 %v4108, %v4104
  %v4449 = vpack.c.b16 %v4109, %v4105
  %v4450 = vpack.c.b16 %v4110, %v4106
  %v4451 = vpack.c.b16 %v4115, %v4111
  %v4452 = vpack.c.b16 %v4116, %v4112
  %v4453 = vpack.c.b16 %v4117, %v4113
  %v4454 = vpack.c.b16 %v4118, %v4114
  %v4455 = vpack.c.b16 %v4123, %v4119
  %v4456 = vpack.c.b16 %v4124, %v4120
  %v4457 = vpack.c.b16 %v4125, %v4121
  %v4458 = vpack.c.b16 %v4126, %v4122
  %v4459 = vpack.c.b16 %v4131, %v4127
  %v4460 = vpack.c.b16 %v4132, %v4128
  %v4461 = vpack.c.b16 %v4133, %v4129
  %v4462 = vpack.c.b16 %v4134, %v4130
  %v4463 = vpack.c.b16 %v4139, %v4135
  %v4464 = vpack.c.b16 %v4140, %v4136
  %v4465 = vpack.c.b16 %v4141, %v4137
  %v4466 = vpack.c.b16 %v4142, %v4138
  %v4467 = vpack.c.b16 %v4147, %v4143
  %v4468 = vpack.c.b16 %v4148, %v4144
  %v4469 = vpack.c.b16 %v4149, %v4145
  %v4470 = vpack.c.b16 %v4150, %v4146
  %v4471 = vpack.c.b16 %v4155, %v4151
  %v4472 = vpack.c.b16 %v4156, %v4152
  %v4473 = vpack.c.b16 %v4157, %v4153
  %v4474 = vpack.c.b16 %v4158, %v4154
  %v4475 = vpack.c.b16 %v4163, %v4159
  %v4476 = vpack.c.b16 %v4164, %v4160
  %v4477 = vpack.c.b16 %v4165, %v4161
  %v4478 = vpack.c.b16 %v4166, %v4162
  %v4479 = vpack.c.b16 %v4171, %v4167
  %v4480 = vpack.c.b16 %v4172, %v4168
  %v4481 = vpack.c.b16 %v4173, %v4169
  %v4482 = vpack.c.b16 %v4174, %v4170
  %v4483 = vpack.c.b16 %v4179, %v4175
  %v4484 = vpack.c.b16 %v4180, %v4176
  %v4485 = vpack.c.b16 %v4181, %v4177
  %v4486 = vpack.c.b16 %v4182, %v4178
  %v4487 = vpack.c.b16 %v4187, %v4183
  %v4488 = vpack.c.b16 %v4188, %v4184
  %v4489 = vpack.c.b16 %v4189, %v4185
  %v4490 = vpack.c.b16 %v4190, %v4186
  %v4491 = vpack.c.b16 %v4195, %v4191
  %v4492 = vpack.c.b16 %v4196, %v4192
  %v4493 = vpack.c.b16 %v4197, %v4193
  %v4494 = vpack.c.b16 %v4198, %v4194
  %v4495 = vpack.c.b16 %v4203, %v4199
  %v4496 = vpack.c.b16 %v4204, %v4200
  %v4497 = vpack.c.b16 %v4205, %v4201
  %v4498 = vpack.c.b16 %v4206, %v4202
  %v4499 = vpack.c.b16 %v4211, %v4207
  %v4500 = vpack.c.b16 %v4212, %v4208
  %v4501 = vpack.c.b16 %v4213, %v4209
  %v4502 = vpack.c.b16 %v4214, %v4210
  %v4503 = vpack.c.b16 %v4219, %v4215
  %v4504 = vpack.c.b16 %v4220, %v4216
  %v4505 = vpack.c.b16 %v4221, %v4217
  %v4506 = vpack.c.b16 %v4222, %v4218
  %v4507 = vpack.c.b16 %v4227, %v4223
  %v4508 = vpack.c.b16 %v4228, %v4224
  %v4509 = vpack.c.b16 %v4229, %v4225
  %v4510 = vpack.c.b16 %v4230, %v4226
  %v4511 = vpack.c.b16 %v4235, %v4231
  %v4512 = vpack.c.b16 %v4236, %v4232
  %v4513 = vpack.c.b16 %v4237, %v4233
  %v4514 = vpack.c.b16 %v4238, %v4234
  %v4515 = vpack.c.b16 %v4243, %v4239
  %v4516 = vpack.c.b16 %v4244, %v4240
  %v4517 = vpack.c.b16 %v4245, %v4241
  %v4518 = vpack.c.b16 %v4246, %v4242
  %v4519 = vpack.c.b16 %v4251, %v4247
  %v4520 = vpack.c.b16 %v4252, %v4248
  %v4521 = vpack.c.b16 %v4253, %v4249
  %v4522 = vpack.c.b16 %v4254, %v4250
  %v4523 = vpack.c.b16 %v4259, %v4255
  %v4524 = vpack.c.b16 %v4260, %v4256
  %v4525 = vpack.c.b16 %v4261, %v4257
  %v4526 = vpack.c.b16 %v4262, %v4258
  %v4527 = vpack.c.b16 %v4267, %v4263
  %v4528 = vpack.c.b16 %v4268, %v4264
  %v4529 = vpack.c.b16 %v4269, %v4265
  %v4530 = vpack.c.b16 %v4270, %v4266
  %v4531 = vpack.c.b16 %v4275, %v4271
  %v4532 = vpack.c.b16 %v4276, %v4272
  %v4533 = vpack.c.b16 %v4277, %v4273
  %v4534 = vpack.c.b16 %v4278, %v4274
  %4791 = vmatprep.subr.bf16.mxu0 %v4308
  %4792 = vmatpush1.bf16.msra.mxu0 %v4307
  %4793 = vmatprep.subr.bf16.mxu0 %v4304
  %4794 = vmatpush1.bf16.msra.mxu0 %v4303
  %4795 = vmatprep.subr.bf16.mxu0 %v4300
  %4796 = vmatpush1.bf16.msra.mxu0 %v4299
  %4797 = vmatprep.subr.bf16.mxu0 %v4296
  %4798 = vmatpush1.bf16.msra.mxu0 %v4295
  %4799 = vmatprep.subr.bf16.mxu0 %v4292
  %4800 = vmatpush1.bf16.msra.mxu0 %v4291
  %4801 = vmatprep.subr.bf16.mxu0 %v4288
  %4802 = vmatpush1.bf16.msra.mxu0 %v4287
  %4803 = vmatprep.subr.bf16.mxu0 %v4284
  %4804 = vmatpush1.bf16.msra.mxu0 %v4283
  %4805 = vmatprep.subr.bf16.mxu0 %v4280
  %4806 = vmatpush1.bf16.msra.mxu0 %v4279
  %4807 = vmatprep.subr.bf16.mxu0 %v4340
  %4808 = vmatpush2.bf16.msra.mxu0 %v4339
  %4809 = vmatprep.subr.bf16.mxu0 %v4336
  %4810 = vmatpush2.bf16.msra.mxu0 %v4335
  %4811 = vmatprep.subr.bf16.mxu0 %v4332
  %4812 = vmatpush2.bf16.msra.mxu0 %v4331
  %4813 = vmatprep.subr.bf16.mxu0 %v4328
  %4814 = vmatpush2.bf16.msra.mxu0 %v4327
  %4815 = vmatprep.subr.bf16.mxu0 %v4324
  %4816 = vmatpush2.bf16.msra.mxu0 %v4323
  %4817 = vmatprep.subr.bf16.mxu0 %v4320
  %4818 = vmatpush2.bf16.msra.mxu0 %v4319
  %4819 = vmatprep.subr.bf16.mxu0 %v4316
  %4820 = vmatpush2.bf16.msra.mxu0 %v4315
  %4821 = vmatprep.subr.bf16.mxu0 %v4312
  %4822 = vmatpush2.bf16.msra.mxu0 %v4311
  %4823 = vmatprep.mubr.bf16.mxu0 %v3504
  %4824 = vmatmul.mubr.bf16.gmra.mxu0 %v3503
  %v4825 = vpop.f32.mrf.mxu0
  %v4826 = vadd.f32 0.0, %v4825
  %v4827 = vpop.f32.mrf.mxu0
  %v4828 = vadd.f32 0.0, %v4827
  %v4829 = vpop.f32.mrf.mxu0
  %v4830 = vpop.f32.mrf.mxu0
  %4831 = vdwg.mxu0
  %4832 = vmatprep.subr.bf16.mxu0 %v4372
  %4833 = vmatpush1.bf16.msra.mxu0 %v4371
  %4834 = vmatprep.subr.bf16.mxu0 %v4368
  %4835 = vmatpush1.bf16.msra.mxu0 %v4367
  %4836 = vmatprep.subr.bf16.mxu0 %v4364
  %4837 = vmatpush1.bf16.msra.mxu0 %v4363
  %4838 = vmatprep.subr.bf16.mxu0 %v4360
  %4839 = vmatpush1.bf16.msra.mxu0 %v4359
  %4840 = vmatprep.subr.bf16.mxu0 %v4356
  %4841 = vmatpush1.bf16.msra.mxu0 %v4355
  %4842 = vmatprep.subr.bf16.mxu0 %v4352
  %4843 = vmatpush1.bf16.msra.mxu0 %v4351
  %4844 = vmatprep.subr.bf16.mxu0 %v4348
  %4845 = vmatpush1.bf16.msra.mxu0 %v4347
  %4846 = vmatprep.subr.bf16.mxu0 %v4344
  %4847 = vmatpush1.bf16.msra.mxu0 %v4343
  %4848 = vmatprep.subr.bf16.mxu0 %v4404
  %4849 = vmatpush2.bf16.msra.mxu0 %v4403
  %4850 = vmatprep.subr.bf16.mxu0 %v4400
  %4851 = vmatpush2.bf16.msra.mxu0 %v4399
  %4852 = vmatprep.subr.bf16.mxu0 %v4396
  %4853 = vmatpush2.bf16.msra.mxu0 %v4395
  %4854 = vmatprep.subr.bf16.mxu0 %v4392
  %4855 = vmatpush2.bf16.msra.mxu0 %v4391
  %4856 = vmatprep.subr.bf16.mxu0 %v4388
  %4857 = vmatpush2.bf16.msra.mxu0 %v4387
  %4858 = vmatprep.subr.bf16.mxu0 %v4384
  %4859 = vmatpush2.bf16.msra.mxu0 %v4383
  %4860 = vmatprep.subr.bf16.mxu0 %v4380
  %4861 = vmatpush2.bf16.msra.mxu0 %v4379
  %4862 = vmatprep.subr.bf16.mxu0 %v4376
  %4863 = vmatpush2.bf16.msra.mxu0 %v4375
  %4864 = vmatprep.mubr.bf16.mxu0 %v3506
  %4865 = vmatmul.mubr.bf16.gmra.mxu0 %v3505
  %v4866 = vpop.f32.mrf.mxu0
  %v4867 = vadd.f32 %v4826, %v4866
  %v4868 = vpop.f32.mrf.mxu0
  %v4869 = vadd.f32 %v4828, %v4868
  %v4870 = vpop.f32.mrf.mxu0
  %v4871 = vpop.f32.mrf.mxu0
  %4872 = vdwg.mxu0
  %4873 = vmatprep.subr.bf16.mxu0 %v4436
  %4874 = vmatpush1.bf16.msra.mxu0 %v4435
  %4875 = vmatprep.subr.bf16.mxu0 %v4432
  %4876 = vmatpush1.bf16.msra.mxu0 %v4431
  %4877 = vmatprep.subr.bf16.mxu0 %v4428
  %4878 = vmatpush1.bf16.msra.mxu0 %v4427
  %4879 = vmatprep.subr.bf16.mxu0 %v4424
  %4880 = vmatpush1.bf16.msra.mxu0 %v4423
  %4881 = vmatprep.subr.bf16.mxu0 %v4420
  %4882 = vmatpush1.bf16.msra.mxu0 %v4419
  %4883 = vmatprep.subr.bf16.mxu0 %v4416
  %4884 = vmatpush1.bf16.msra.mxu0 %v4415
  %4885 = vmatprep.subr.bf16.mxu0 %v4412
  %4886 = vmatpush1.bf16.msra.mxu0 %v4411
  %4887 = vmatprep.subr.bf16.mxu0 %v4408
  %4888 = vmatpush1.bf16.msra.mxu0 %v4407
  %4889 = vmatprep.subr.bf16.mxu0 %v4468
  %4890 = vmatpush2.bf16.msra.mxu0 %v4467
  %4891 = vmatprep.subr.bf16.mxu0 %v4464
  %4892 = vmatpush2.bf16.msra.mxu0 %v4463
  %4893 = vmatprep.subr.bf16.mxu0 %v4460
  %4894 = vmatpush2.bf16.msra.mxu0 %v4459
  %4895 = vmatprep.subr.bf16.mxu0 %v4456
  %4896 = vmatpush2.bf16.msra.mxu0 %v4455
  %4897 = vmatprep.subr.bf16.mxu0 %v4452
  %4898 = vmatpush2.bf16.msra.mxu0 %v4451
  %4899 = vmatprep.subr.bf16.mxu0 %v4448
  %4900 = vmatpush2.bf16.msra.mxu0 %v4447
  %4901 = vmatprep.subr.bf16.mxu0 %v4444
  %4902 = vmatpush2.bf16.msra.mxu0 %v4443
  %4903 = vmatprep.subr.bf16.mxu0 %v4440
  %4904 = vmatpush2.bf16.msra.mxu0 %v4439
  %4905 = vmatprep.mubr.bf16.mxu0 %v3508
  %4906 = vmatmul.mubr.bf16.gmra.mxu0 %v3507
  %v4907 = vpop.f32.mrf.mxu0
  %v4908 = vadd.f32 %v4867, %v4907
  %v4909 = vpop.f32.mrf.mxu0
  %v4910 = vadd.f32 %v4869, %v4909
  %v4911 = vpop.f32.mrf.mxu0
  %v4912 = vpop.f32.mrf.mxu0
  %4913 = vdwg.mxu0
  %4914 = vmatprep.subr.bf16.mxu0 %v4500
  %4915 = vmatpush1.bf16.msra.mxu0 %v4499
  %4916 = vmatprep.subr.bf16.mxu0 %v4496
  %4917 = vmatpush1.bf16.msra.mxu0 %v4495
  %4918 = vmatprep.subr.bf16.mxu0 %v4492
  %4919 = vmatpush1.bf16.msra.mxu0 %v4491
  %4920 = vmatprep.subr.bf16.mxu0 %v4488
  %4921 = vmatpush1.bf16.msra.mxu0 %v4487
  %4922 = vmatprep.subr.bf16.mxu0 %v4484
  %4923 = vmatpush1.bf16.msra.mxu0 %v4483
  %4924 = vmatprep.subr.bf16.mxu0 %v4480
  %4925 = vmatpush1.bf16.msra.mxu0 %v4479
  %4926 = vmatprep.subr.bf16.mxu0 %v4476
  %4927 = vmatpush1.bf16.msra.mxu0 %v4475
  %4928 = vmatprep.subr.bf16.mxu0 %v4472
  %4929 = vmatpush1.bf16.msra.mxu0 %v4471
  %4930 = vmatprep.subr.bf16.mxu0 %v4532
  %4931 = vmatpush2.bf16.msra.mxu0 %v4531
  %4932 = vmatprep.subr.bf16.mxu0 %v4528
  %4933 = vmatpush2.bf16.msra.mxu0 %v4527
  %4934 = vmatprep.subr.bf16.mxu0 %v4524
  %4935 = vmatpush2.bf16.msra.mxu0 %v4523
  %4936 = vmatprep.subr.bf16.mxu0 %v4520
  %4937 = vmatpush2.bf16.msra.mxu0 %v4519
  %4938 = vmatprep.subr.bf16.mxu0 %v4516
  %4939 = vmatpush2.bf16.msra.mxu0 %v4515
  %4940 = vmatprep.subr.bf16.mxu0 %v4512
  %4941 = vmatpush2.bf16.msra.mxu0 %v4511
  %4942 = vmatprep.subr.bf16.mxu0 %v4508
  %4943 = vmatpush2.bf16.msra.mxu0 %v4507
  %4944 = vmatprep.subr.bf16.mxu0 %v4504
  %4945 = vmatpush2.bf16.msra.mxu0 %v4503
  %4946 = vmatprep.mubr.bf16.mxu0 %v3510
  %4947 = vmatmul.mubr.bf16.gmra.mxu0 %v3509
  %v4948 = vpop.f32.mrf.mxu0
  %v4949 = vadd.f32 %v4908, %v4948
  %v4950 = vpop.f32.mrf.mxu0
  %v4951 = vadd.f32 %v4910, %v4950
  %v4952 = vpop.f32.mrf.mxu0
  %v4953 = vpop.f32.mrf.mxu0
  %4954 = vdwg.mxu0
  %4955 = vmatprep.subr.bf16.mxu0 %v4310
  %4956 = vmatpush1.bf16.msra.mxu0 %v4309
  %4957 = vmatprep.subr.bf16.mxu0 %v4306
  %4958 = vmatpush1.bf16.msra.mxu0 %v4305
  %4959 = vmatprep.subr.bf16.mxu0 %v4302
  %4960 = vmatpush1.bf16.msra.mxu0 %v4301
  %4961 = vmatprep.subr.bf16.mxu0 %v4298
  %4962 = vmatpush1.bf16.msra.mxu0 %v4297
  %4963 = vmatprep.subr.bf16.mxu0 %v4294
  %4964 = vmatpush1.bf16.msra.mxu0 %v4293
  %4965 = vmatprep.subr.bf16.mxu0 %v4290
  %4966 = vmatpush1.bf16.msra.mxu0 %v4289
  %4967 = vmatprep.subr.bf16.mxu0 %v4286
  %4968 = vmatpush1.bf16.msra.mxu0 %v4285
  %4969 = vmatprep.subr.bf16.mxu0 %v4282
  %4970 = vmatpush1.bf16.msra.mxu0 %v4281
  %4971 = vmatprep.subr.bf16.mxu0 %v4342
  %4972 = vmatpush2.bf16.msra.mxu0 %v4341
  %4973 = vmatprep.subr.bf16.mxu0 %v4338
  %4974 = vmatpush2.bf16.msra.mxu0 %v4337
  %4975 = vmatprep.subr.bf16.mxu0 %v4334
  %4976 = vmatpush2.bf16.msra.mxu0 %v4333
  %4977 = vmatprep.subr.bf16.mxu0 %v4330
  %4978 = vmatpush2.bf16.msra.mxu0 %v4329
  %4979 = vmatprep.subr.bf16.mxu0 %v4326
  %4980 = vmatpush2.bf16.msra.mxu0 %v4325
  %4981 = vmatprep.subr.bf16.mxu0 %v4322
  %4982 = vmatpush2.bf16.msra.mxu0 %v4321
  %4983 = vmatprep.subr.bf16.mxu0 %v4318
  %4984 = vmatpush2.bf16.msra.mxu0 %v4317
  %4985 = vmatprep.subr.bf16.mxu0 %v4314
  %4986 = vmatpush2.bf16.msra.mxu0 %v4313
  %4987 = vmatprep.mubr.bf16.mxu0 %v3504
  %4988 = vmatmul.mubr.bf16.gmra.mxu0 %v3503
  %v4989 = vpop.f32.mrf.mxu0
  %v4990 = vadd.f32 0.0, %v4989
  %v4991 = vpop.f32.mrf.mxu0
  %v4992 = vadd.f32 0.0, %v4991
  %v4993 = vpop.f32.mrf.mxu0
  %v4994 = vpop.f32.mrf.mxu0
  %4995 = vdwg.mxu0
  %4996 = vmatprep.subr.bf16.mxu0 %v4374
  %4997 = vmatpush1.bf16.msra.mxu0 %v4373
  %4998 = vmatprep.subr.bf16.mxu0 %v4370
  %4999 = vmatpush1.bf16.msra.mxu0 %v4369
  %5000 = vmatprep.subr.bf16.mxu0 %v4366
  %5001 = vmatpush1.bf16.msra.mxu0 %v4365
  %5002 = vmatprep.subr.bf16.mxu0 %v4362
  %5003 = vmatpush1.bf16.msra.mxu0 %v4361
  %5004 = vmatprep.subr.bf16.mxu0 %v4358
  %5005 = vmatpush1.bf16.msra.mxu0 %v4357
  %5006 = vmatprep.subr.bf16.mxu0 %v4354
  %5007 = vmatpush1.bf16.msra.mxu0 %v4353
  %5008 = vmatprep.subr.bf16.mxu0 %v4350
  %5009 = vmatpush1.bf16.msra.mxu0 %v4349
  %5010 = vmatprep.subr.bf16.mxu0 %v4346
  %5011 = vmatpush1.bf16.msra.mxu0 %v4345
  %5012 = vmatprep.subr.bf16.mxu0 %v4406
  %5013 = vmatpush2.bf16.msra.mxu0 %v4405
  %5014 = vmatprep.subr.bf16.mxu0 %v4402
  %5015 = vmatpush2.bf16.msra.mxu0 %v4401
  %5016 = vmatprep.subr.bf16.mxu0 %v4398
  %5017 = vmatpush2.bf16.msra.mxu0 %v4397
  %5018 = vmatprep.subr.bf16.mxu0 %v4394
  %5019 = vmatpush2.bf16.msra.mxu0 %v4393
  %5020 = vmatprep.subr.bf16.mxu0 %v4390
  %5021 = vmatpush2.bf16.msra.mxu0 %v4389
  %5022 = vmatprep.subr.bf16.mxu0 %v4386
  %5023 = vmatpush2.bf16.msra.mxu0 %v4385
  %5024 = vmatprep.subr.bf16.mxu0 %v4382
  %5025 = vmatpush2.bf16.msra.mxu0 %v4381
  %5026 = vmatprep.subr.bf16.mxu0 %v4378
  %5027 = vmatpush2.bf16.msra.mxu0 %v4377
  %5028 = vmatprep.mubr.bf16.mxu0 %v3506
  %5029 = vmatmul.mubr.bf16.gmra.mxu0 %v3505
  %v5030 = vpop.f32.mrf.mxu0
  %v5031 = vadd.f32 %v4990, %v5030
  %v5032 = vpop.f32.mrf.mxu0
  %v5033 = vadd.f32 %v4992, %v5032
  %v5034 = vpop.f32.mrf.mxu0
  %v5035 = vpop.f32.mrf.mxu0
  %5036 = vdwg.mxu0
  %5037 = vmatprep.subr.bf16.mxu0 %v4438
  %5038 = vmatpush1.bf16.msra.mxu0 %v4437
  %5039 = vmatprep.subr.bf16.mxu0 %v4434
  %5040 = vmatpush1.bf16.msra.mxu0 %v4433
  %5041 = vmatprep.subr.bf16.mxu0 %v4430
  %5042 = vmatpush1.bf16.msra.mxu0 %v4429
  %5043 = vmatprep.subr.bf16.mxu0 %v4426
  %5044 = vmatpush1.bf16.msra.mxu0 %v4425
  %5045 = vmatprep.subr.bf16.mxu0 %v4422
  %5046 = vmatpush1.bf16.msra.mxu0 %v4421
  %5047 = vmatprep.subr.bf16.mxu0 %v4418
  %5048 = vmatpush1.bf16.msra.mxu0 %v4417
  %5049 = vmatprep.subr.bf16.mxu0 %v4414
  %5050 = vmatpush1.bf16.msra.mxu0 %v4413
  %5051 = vmatprep.subr.bf16.mxu0 %v4410
  %5052 = vmatpush1.bf16.msra.mxu0 %v4409
  %5053 = vmatprep.subr.bf16.mxu0 %v4470
  %5054 = vmatpush2.bf16.msra.mxu0 %v4469
  %5055 = vmatprep.subr.bf16.mxu0 %v4466
  %5056 = vmatpush2.bf16.msra.mxu0 %v4465
  %5057 = vmatprep.subr.bf16.mxu0 %v4462
  %5058 = vmatpush2.bf16.msra.mxu0 %v4461
  %5059 = vmatprep.subr.bf16.mxu0 %v4458
  %5060 = vmatpush2.bf16.msra.mxu0 %v4457
  %5061 = vmatprep.subr.bf16.mxu0 %v4454
  %5062 = vmatpush2.bf16.msra.mxu0 %v4453
  %5063 = vmatprep.subr.bf16.mxu0 %v4450
  %5064 = vmatpush2.bf16.msra.mxu0 %v4449
  %5065 = vmatprep.subr.bf16.mxu0 %v4446
  %5066 = vmatpush2.bf16.msra.mxu0 %v4445
  %5067 = vmatprep.subr.bf16.mxu0 %v4442
  %5068 = vmatpush2.bf16.msra.mxu0 %v4441
  %5069 = vmatprep.mubr.bf16.mxu0 %v3508
  %5070 = vmatmul.mubr.bf16.gmra.mxu0 %v3507
  %v5071 = vpop.f32.mrf.mxu0
  %v5072 = vadd.f32 %v5031, %v5071
  %v5073 = vpop.f32.mrf.mxu0
  %v5074 = vadd.f32 %v5033, %v5073
  %v5075 = vpop.f32.mrf.mxu0
  %v5076 = vpop.f32.mrf.mxu0
  %5077 = vdwg.mxu0
  %5078 = vmatprep.subr.bf16.mxu0 %v4502
  %5079 = vmatpush1.bf16.msra.mxu0 %v4501
  %5080 = vmatprep.subr.bf16.mxu0 %v4498
  %5081 = vmatpush1.bf16.msra.mxu0 %v4497
  %5082 = vmatprep.subr.bf16.mxu0 %v4494
  %5083 = vmatpush1.bf16.msra.mxu0 %v4493
  %5084 = vmatprep.subr.bf16.mxu0 %v4490
  %5085 = vmatpush1.bf16.msra.mxu0 %v4489
  %5086 = vmatprep.subr.bf16.mxu0 %v4486
  %5087 = vmatpush1.bf16.msra.mxu0 %v4485
  %5088 = vmatprep.subr.bf16.mxu0 %v4482
  %5089 = vmatpush1.bf16.msra.mxu0 %v4481
  %5090 = vmatprep.subr.bf16.mxu0 %v4478
  %5091 = vmatpush1.bf16.msra.mxu0 %v4477
  %5092 = vmatprep.subr.bf16.mxu0 %v4474
  %5093 = vmatpush1.bf16.msra.mxu0 %v4473
  %5094 = vmatprep.subr.bf16.mxu0 %v4534
  %5095 = vmatpush2.bf16.msra.mxu0 %v4533
  %5096 = vmatprep.subr.bf16.mxu0 %v4530
  %5097 = vmatpush2.bf16.msra.mxu0 %v4529
  %5098 = vmatprep.subr.bf16.mxu0 %v4526
  %5099 = vmatpush2.bf16.msra.mxu0 %v4525
  %5100 = vmatprep.subr.bf16.mxu0 %v4522
  %5101 = vmatpush2.bf16.msra.mxu0 %v4521
  %5102 = vmatprep.subr.bf16.mxu0 %v4518
  %5103 = vmatpush2.bf16.msra.mxu0 %v4517
  %5104 = vmatprep.subr.bf16.mxu0 %v4514
  %5105 = vmatpush2.bf16.msra.mxu0 %v4513
  %5106 = vmatprep.subr.bf16.mxu0 %v4510
  %5107 = vmatpush2.bf16.msra.mxu0 %v4509
  %5108 = vmatprep.subr.bf16.mxu0 %v4506
  %5109 = vmatpush2.bf16.msra.mxu0 %v4505
  %5110 = vmatprep.mubr.bf16.mxu0 %v3510
  %5111 = vmatmul.mubr.bf16.gmra.mxu0 %v3509
  %v5112 = vpop.f32.mrf.mxu0
  %v5113 = vadd.f32 %v5072, %v5112
  %v5114 = vpop.f32.mrf.mxu0
  %v5115 = vadd.f32 %v5074, %v5114
  %v5116 = vpop.f32.mrf.mxu0
  %v5117 = vpop.f32.mrf.mxu0
  %5118 = vdwg.mxu0
  %v5119 = vrot.slane %v4949, 4
  %v5120 = vadd.f32 %v4949, %v5119
  %v5121 = vrot.slane %v5120, 2
  %v5122 = vadd.f32 %v5120, %v5121
  %v5123 = vrot.slane %v5122, 1
  %v5124 = vadd.f32 %v5122, %v5123
  %v5125 = vrot.slane %v4951, 4
  %v5126 = vadd.f32 %v4951, %v5125
  %v5127 = vrot.slane %v5126, 2
  %v5128 = vadd.f32 %v5126, %v5127
  %v5129 = vrot.slane %v5128, 1
  %v5130 = vadd.f32 %v5128, %v5129
  %v5131 = vrot.slane %v5113, 4
  %v5132 = vadd.f32 %v5113, %v5131
  %v5133 = vrot.slane %v5132, 2
  %v5134 = vadd.f32 %v5132, %v5133
  %v5135 = vrot.slane %v5134, 1
  %v5136 = vadd.f32 %v5134, %v5135
  %v5137 = vrot.slane %v5115, 4
  %v5138 = vadd.f32 %v5115, %v5137
  %v5139 = vrot.slane %v5138, 2
  %v5140 = vadd.f32 %v5138, %v5139
  %v5141 = vrot.slane %v5140, 1
  %v5142 = vadd.f32 %v5140, %v5141
  %v5143 = vmul.f32 %v5124, %v441
  %v5144 = vmul.f32 %v5130, %v441
  %v5145 = vmul.f32 %v5136, %v441
  %v5146 = vmul.f32 %v5142, %v441
  %v5147 = vsub.f32 %v4949, %v5143
  %v5148 = vsub.f32 %v4951, %v5144
  %v5149 = vsub.f32 %v5113, %v5145
  %v5150 = vsub.f32 %v5115, %v5146
  %v5151 = vmul.f32 %v5147, %v5147
  %v5152 = vmul.f32 %v5148, %v5148
  %v5153 = vmul.f32 %v5149, %v5149
  %v5154 = vmul.f32 %v5150, %v5150
  %v5155 = vrot.slane %v5151, 4
  %v5156 = vadd.f32 %v5151, %v5155
  %v5157 = vrot.slane %v5156, 2
  %v5158 = vadd.f32 %v5156, %v5157
  %v5159 = vrot.slane %v5158, 1
  %v5160 = vadd.f32 %v5158, %v5159
  %v5161 = vrot.slane %v5152, 4
  %v5162 = vadd.f32 %v5152, %v5161
  %v5163 = vrot.slane %v5162, 2
  %v5164 = vadd.f32 %v5162, %v5163
  %v5165 = vrot.slane %v5164, 1
  %v5166 = vadd.f32 %v5164, %v5165
  %v5167 = vrot.slane %v5153, 4
  %v5168 = vadd.f32 %v5153, %v5167
  %v5169 = vrot.slane %v5168, 2
  %v5170 = vadd.f32 %v5168, %v5169
  %v5171 = vrot.slane %v5170, 1
  %v5172 = vadd.f32 %v5170, %v5171
  %v5173 = vrot.slane %v5154, 4
  %v5174 = vadd.f32 %v5154, %v5173
  %v5175 = vrot.slane %v5174, 2
  %v5176 = vadd.f32 %v5174, %v5175
  %v5177 = vrot.slane %v5176, 1
  %v5178 = vadd.f32 %v5176, %v5177
  %v5179 = vmul.f32 %v5160, %v441
  %v5180 = vmul.f32 %v5166, %v441
  %v5181 = vmul.f32 %v5172, %v441
  %v5182 = vmul.f32 %v5178, %v441
  %s5183 = scalar_lea.vmem %s1, 6
  %v5184 = vld [vmem:[%s5183] ss:$8 sm:$0xf]
  %s5185 = scalar_lea.vmem %s1, 7
  %v5186 = vld [vmem:[%s5185] ss:$8 sm:$0xf]
  %v5187 = vadd.f32 %v5179, 1e-05
  %v5188 = vadd.f32 %v5180, 1e-05
  %v5189 = vadd.f32 %v5181, 1e-05
  %v5190 = vadd.f32 %v5182, 1e-05
  %v5191 = vrsqrt.pop %v5187
  %v5192 = vrsqrt.pop %v5188
  %v5193 = vrsqrt.pop %v5189
  %v5194 = vrsqrt.pop %v5190
  %v5195 = vmul.f32 %v5147, %v5191
  %v5196 = vmul.f32 %v5148, %v5192
  %v5197 = vmul.f32 %v5149, %v5193
  %v5198 = vmul.f32 %v5150, %v5194
  %v5200 = vlaneseq
  %v5201 = vshrl.u32 %v5200, 7
  %v5202 = vsub.s32 0, %v5201
  %v5203 = vrot.slane %v5184, %v5202
  %v5204 = vlaneseq
  %v5205 = vshrl.u32 %v5204, 7
  %v5206 = vsub.s32 1, %v5205
  %v5207 = vrot.slane %v5184, %v5206
  %v5208 = vlaneseq
  %v5209 = vshrl.u32 %v5208, 7
  %v5210 = vsub.s32 2, %v5209
  %v5211 = vrot.slane %v5184, %v5210
  %v5212 = vlaneseq
  %v5213 = vshrl.u32 %v5212, 7
  %v5214 = vsub.s32 3, %v5213
  %v5215 = vrot.slane %v5184, %v5214
  %v5220 = vmul.f32 %v5195, %v5203
  %v5221 = vmul.f32 %v5196, %v5207
  %v5222 = vmul.f32 %v5197, %v5211
  %v5223 = vmul.f32 %v5198, %v5215
  %v5225 = vlaneseq
  %v5226 = vshrl.u32 %v5225, 7
  %v5227 = vsub.s32 0, %v5226
  %v5228 = vrot.slane %v5186, %v5227
  %v5229 = vlaneseq
  %v5230 = vshrl.u32 %v5229, 7
  %v5231 = vsub.s32 1, %v5230
  %v5232 = vrot.slane %v5186, %v5231
  %v5233 = vlaneseq
  %v5234 = vshrl.u32 %v5233, 7
  %v5235 = vsub.s32 2, %v5234
  %v5236 = vrot.slane %v5186, %v5235
  %v5237 = vlaneseq
  %v5238 = vshrl.u32 %v5237, 7
  %v5239 = vsub.s32 3, %v5238
  %v5240 = vrot.slane %v5186, %v5239
  %v5245 = vadd.f32 %v5220, %v5228
  %v5246 = vadd.f32 %v5221, %v5232
  %v5247 = vadd.f32 %v5222, %v5236
  %v5248 = vadd.f32 %v5223, %v5240
  %v5249 = vmax.f32 %v5245, 0.0
  %v5250 = vmax.f32 %v5246, 0.0
  %v5251 = vmax.f32 %v5247, 0.0
  %v5252 = vmax.f32 %v5248, 0.0
  %s5253 = smul.u32 %s1105, 2
  %s5254 = sshll.u32 %s5253, 4
  %5255 = dma.done %s126, %s5254
  %v5256 = vld [vmem:[#allocation6] sm:$0xff]
  %v5257 = vld [vmem:[#allocation6 + $0x8] sm:$0xff]
  %v5258 = vld [vmem:[#allocation6 + $0x10] sm:$0xff]
  %v5259 = vld [vmem:[#allocation6 + $0x18] sm:$0xff]
  %v5260 = vld [vmem:[#allocation6 + $0x20] sm:$0xff]
  %v5261 = vld [vmem:[#allocation6 + $0x28] sm:$0xff]
  %v5262 = vld [vmem:[#allocation6 + $0x30] sm:$0xff]
  %v5263 = vld [vmem:[#allocation6 + $0x38] sm:$0xff]
  %v5264 = vld [vmem:[#allocation6 + $0x40] sm:$0xff]
  %v5265 = vld [vmem:[#allocation6 + $0x48] sm:$0xff]
  %v5266 = vld [vmem:[#allocation6 + $0x50] sm:$0xff]
  %v5267 = vld [vmem:[#allocation6 + $0x58] sm:$0xff]
  %v5268 = vld [vmem:[#allocation6 + $0x60] sm:$0xff]
  %v5269 = vld [vmem:[#allocation6 + $0x68] sm:$0xff]
  %v5270 = vld [vmem:[#allocation6 + $0x70] sm:$0xff]
  %v5271 = vld [vmem:[#allocation6 + $0x78] sm:$0xff]
  %v5272 = vld [vmem:[#allocation6 + $0x80] sm:$0xff]
  %v5273 = vld [vmem:[#allocation6 + $0x88] sm:$0xff]
  %v5274 = vld [vmem:[#allocation6 + $0x90] sm:$0xff]
  %v5275 = vld [vmem:[#allocation6 + $0x98] sm:$0xff]
  %v5276 = vld [vmem:[#allocation6 + $0xa0] sm:$0xff]
  %v5277 = vld [vmem:[#allocation6 + $0xa8] sm:$0xff]
  %v5278 = vld [vmem:[#allocation6 + $0xb0] sm:$0xff]
  %v5279 = vld [vmem:[#allocation6 + $0xb8] sm:$0xff]
  %v5280 = vld [vmem:[#allocation6 + $0xc0] sm:$0xff]
  %v5281 = vld [vmem:[#allocation6 + $0xc8] sm:$0xff]
  %v5282 = vld [vmem:[#allocation6 + $0xd0] sm:$0xff]
  %v5283 = vld [vmem:[#allocation6 + $0xd8] sm:$0xff]
  %v5284 = vld [vmem:[#allocation6 + $0xe0] sm:$0xff]
  %v5285 = vld [vmem:[#allocation6 + $0xe8] sm:$0xff]
  %v5286 = vld [vmem:[#allocation6 + $0xf0] sm:$0xff]
  %v5287 = vld [vmem:[#allocation6 + $0xf8] sm:$0xff]
  %v5288 = vld [vmem:[#allocation6 + $0x100] sm:$0xff]
  %v5289 = vld [vmem:[#allocation6 + $0x108] sm:$0xff]
  %v5290 = vld [vmem:[#allocation6 + $0x110] sm:$0xff]
  %v5291 = vld [vmem:[#allocation6 + $0x118] sm:$0xff]
  %v5292 = vld [vmem:[#allocation6 + $0x120] sm:$0xff]
  %v5293 = vld [vmem:[#allocation6 + $0x128] sm:$0xff]
  %v5294 = vld [vmem:[#allocation6 + $0x130] sm:$0xff]
  %v5295 = vld [vmem:[#allocation6 + $0x138] sm:$0xff]
  %v5296 = vld [vmem:[#allocation6 + $0x140] sm:$0xff]
  %v5297 = vld [vmem:[#allocation6 + $0x148] sm:$0xff]
  %v5298 = vld [vmem:[#allocation6 + $0x150] sm:$0xff]
  %v5299 = vld [vmem:[#allocation6 + $0x158] sm:$0xff]
  %v5300 = vld [vmem:[#allocation6 + $0x160] sm:$0xff]
  %v5301 = vld [vmem:[#allocation6 + $0x168] sm:$0xff]
  %v5302 = vld [vmem:[#allocation6 + $0x170] sm:$0xff]
  %v5303 = vld [vmem:[#allocation6 + $0x178] sm:$0xff]
  %v5304 = vld [vmem:[#allocation6 + $0x180] sm:$0xff]
  %v5305 = vld [vmem:[#allocation6 + $0x188] sm:$0xff]
  %v5306 = vld [vmem:[#allocation6 + $0x190] sm:$0xff]
  %v5307 = vld [vmem:[#allocation6 + $0x198] sm:$0xff]
  %v5308 = vld [vmem:[#allocation6 + $0x1a0] sm:$0xff]
  %v5309 = vld [vmem:[#allocation6 + $0x1a8] sm:$0xff]
  %v5310 = vld [vmem:[#allocation6 + $0x1b0] sm:$0xff]
  %v5311 = vld [vmem:[#allocation6 + $0x1b8] sm:$0xff]
  %v5312 = vld [vmem:[#allocation6 + $0x1c0] sm:$0xff]
  %v5313 = vld [vmem:[#allocation6 + $0x1c8] sm:$0xff]
  %v5314 = vld [vmem:[#allocation6 + $0x1d0] sm:$0xff]
  %v5315 = vld [vmem:[#allocation6 + $0x1d8] sm:$0xff]
  %v5316 = vld [vmem:[#allocation6 + $0x1e0] sm:$0xff]
  %v5317 = vld [vmem:[#allocation6 + $0x1e8] sm:$0xff]
  %v5318 = vld [vmem:[#allocation6 + $0x1f0] sm:$0xff]
  %v5319 = vld [vmem:[#allocation6 + $0x1f8] sm:$0xff]
  %v5320 = vpack.c.bf16 %v5249, %v5249
  %v5321 = vpack.c.bf16 %v5250, %v5250
  %v5322 = vpack.c.bf16 %v5251, %v5251
  %v5323 = vpack.c.bf16 %v5252, %v5252
  %v5388 = vunpack.c.l.b16 %v5256
  %v5389 = vunpack.c.h.b16 %v5256
  %v5390 = vunpack.c.l.b16 %v5257
  %v5391 = vunpack.c.h.b16 %v5257
  %v5392 = vunpack.c.l.b16 %v5258
  %v5393 = vunpack.c.h.b16 %v5258
  %v5394 = vunpack.c.l.b16 %v5259
  %v5395 = vunpack.c.h.b16 %v5259
  %v5396 = vunpack.c.l.b16 %v5260
  %v5397 = vunpack.c.h.b16 %v5260
  %v5398 = vunpack.c.l.b16 %v5261
  %v5399 = vunpack.c.h.b16 %v5261
  %v5400 = vunpack.c.l.b16 %v5262
  %v5401 = vunpack.c.h.b16 %v5262
  %v5402 = vunpack.c.l.b16 %v5263
  %v5403 = vunpack.c.h.b16 %v5263
  %v5404 = vunpack.c.l.b16 %v5264
  %v5405 = vunpack.c.h.b16 %v5264
  %v5406 = vunpack.c.l.b16 %v5265
  %v5407 = vunpack.c.h.b16 %v5265
  %v5408 = vunpack.c.l.b16 %v5266
  %v5409 = vunpack.c.h.b16 %v5266
  %v5410 = vunpack.c.l.b16 %v5267
  %v5411 = vunpack.c.h.b16 %v5267
  %v5412 = vunpack.c.l.b16 %v5268
  %v5413 = vunpack.c.h.b16 %v5268
  %v5414 = vunpack.c.l.b16 %v5269
  %v5415 = vunpack.c.h.b16 %v5269
  %v5416 = vunpack.c.l.b16 %v5270
  %v5417 = vunpack.c.h.b16 %v5270
  %v5418 = vunpack.c.l.b16 %v5271
  %v5419 = vunpack.c.h.b16 %v5271
  %v5420 = vunpack.c.l.b16 %v5272
  %v5421 = vunpack.c.h.b16 %v5272
  %v5422 = vunpack.c.l.b16 %v5273
  %v5423 = vunpack.c.h.b16 %v5273
  %v5424 = vunpack.c.l.b16 %v5274
  %v5425 = vunpack.c.h.b16 %v5274
  %v5426 = vunpack.c.l.b16 %v5275
  %v5427 = vunpack.c.h.b16 %v5275
  %v5428 = vunpack.c.l.b16 %v5276
  %v5429 = vunpack.c.h.b16 %v5276
  %v5430 = vunpack.c.l.b16 %v5277
  %v5431 = vunpack.c.h.b16 %v5277
  %v5432 = vunpack.c.l.b16 %v5278
  %v5433 = vunpack.c.h.b16 %v5278
  %v5434 = vunpack.c.l.b16 %v5279
  %v5435 = vunpack.c.h.b16 %v5279
  %v5436 = vunpack.c.l.b16 %v5280
  %v5437 = vunpack.c.h.b16 %v5280
  %v5438 = vunpack.c.l.b16 %v5281
  %v5439 = vunpack.c.h.b16 %v5281
  %v5440 = vunpack.c.l.b16 %v5282
  %v5441 = vunpack.c.h.b16 %v5282
  %v5442 = vunpack.c.l.b16 %v5283
  %v5443 = vunpack.c.h.b16 %v5283
  %v5444 = vunpack.c.l.b16 %v5284
  %v5445 = vunpack.c.h.b16 %v5284
  %v5446 = vunpack.c.l.b16 %v5285
  %v5447 = vunpack.c.h.b16 %v5285
  %v5448 = vunpack.c.l.b16 %v5286
  %v5449 = vunpack.c.h.b16 %v5286
  %v5450 = vunpack.c.l.b16 %v5287
  %v5451 = vunpack.c.h.b16 %v5287
  %v5452 = vunpack.c.l.b16 %v5288
  %v5453 = vunpack.c.h.b16 %v5288
  %v5454 = vunpack.c.l.b16 %v5289
  %v5455 = vunpack.c.h.b16 %v5289
  %v5456 = vunpack.c.l.b16 %v5290
  %v5457 = vunpack.c.h.b16 %v5290
  %v5458 = vunpack.c.l.b16 %v5291
  %v5459 = vunpack.c.h.b16 %v5291
  %v5460 = vunpack.c.l.b16 %v5292
  %v5461 = vunpack.c.h.b16 %v5292
  %v5462 = vunpack.c.l.b16 %v5293
  %v5463 = vunpack.c.h.b16 %v5293
  %v5464 = vunpack.c.l.b16 %v5294
  %v5465 = vunpack.c.h.b16 %v5294
  %v5466 = vunpack.c.l.b16 %v5295
  %v5467 = vunpack.c.h.b16 %v5295
  %v5468 = vunpack.c.l.b16 %v5296
  %v5469 = vunpack.c.h.b16 %v5296
  %v5470 = vunpack.c.l.b16 %v5297
  %v5471 = vunpack.c.h.b16 %v5297
  %v5472 = vunpack.c.l.b16 %v5298
  %v5473 = vunpack.c.h.b16 %v5298
  %v5474 = vunpack.c.l.b16 %v5299
  %v5475 = vunpack.c.h.b16 %v5299
  %v5476 = vunpack.c.l.b16 %v5300
  %v5477 = vunpack.c.h.b16 %v5300
  %v5478 = vunpack.c.l.b16 %v5301
  %v5479 = vunpack.c.h.b16 %v5301
  %v5480 = vunpack.c.l.b16 %v5302
  %v5481 = vunpack.c.h.b16 %v5302
  %v5482 = vunpack.c.l.b16 %v5303
  %v5483 = vunpack.c.h.b16 %v5303
  %v5484 = vunpack.c.l.b16 %v5304
  %v5485 = vunpack.c.h.b16 %v5304
  %v5486 = vunpack.c.l.b16 %v5305
  %v5487 = vunpack.c.h.b16 %v5305
  %v5488 = vunpack.c.l.b16 %v5306
  %v5489 = vunpack.c.h.b16 %v5306
  %v5490 = vunpack.c.l.b16 %v5307
  %v5491 = vunpack.c.h.b16 %v5307
  %v5492 = vunpack.c.l.b16 %v5308
  %v5493 = vunpack.c.h.b16 %v5308
  %v5494 = vunpack.c.l.b16 %v5309
  %v5495 = vunpack.c.h.b16 %v5309
  %v5496 = vunpack.c.l.b16 %v5310
  %v5497 = vunpack.c.h.b16 %v5310
  %v5498 = vunpack.c.l.b16 %v5311
  %v5499 = vunpack.c.h.b16 %v5311
  %v5500 = vunpack.c.l.b16 %v5312
  %v5501 = vunpack.c.h.b16 %v5312
  %v5502 = vunpack.c.l.b16 %v5313
  %v5503 = vunpack.c.h.b16 %v5313
  %v5504 = vunpack.c.l.b16 %v5314
  %v5505 = vunpack.c.h.b16 %v5314
  %v5506 = vunpack.c.l.b16 %v5315
  %v5507 = vunpack.c.h.b16 %v5315
  %v5508 = vunpack.c.l.b16 %v5316
  %v5509 = vunpack.c.h.b16 %v5316
  %v5510 = vunpack.c.l.b16 %v5317
  %v5511 = vunpack.c.h.b16 %v5317
  %v5512 = vunpack.c.l.b16 %v5318
  %v5513 = vunpack.c.h.b16 %v5318
  %v5514 = vunpack.c.l.b16 %v5319
  %v5515 = vunpack.c.h.b16 %v5319
  %v5516 = vpack.c.b16 %v5390, %v5388
  %v5517 = vpack.c.b16 %v5391, %v5389
  %v5518 = vpack.c.b16 %v5394, %v5392
  %v5519 = vpack.c.b16 %v5395, %v5393
  %v5520 = vpack.c.b16 %v5398, %v5396
  %v5521 = vpack.c.b16 %v5399, %v5397
  %v5522 = vpack.c.b16 %v5402, %v5400
  %v5523 = vpack.c.b16 %v5403, %v5401
  %v5524 = vpack.c.b16 %v5406, %v5404
  %v5525 = vpack.c.b16 %v5407, %v5405
  %v5526 = vpack.c.b16 %v5410, %v5408
  %v5527 = vpack.c.b16 %v5411, %v5409
  %v5528 = vpack.c.b16 %v5414, %v5412
  %v5529 = vpack.c.b16 %v5415, %v5413
  %v5530 = vpack.c.b16 %v5418, %v5416
  %v5531 = vpack.c.b16 %v5419, %v5417
  %v5532 = vpack.c.b16 %v5422, %v5420
  %v5533 = vpack.c.b16 %v5423, %v5421
  %v5534 = vpack.c.b16 %v5426, %v5424
  %v5535 = vpack.c.b16 %v5427, %v5425
  %v5536 = vpack.c.b16 %v5430, %v5428
  %v5537 = vpack.c.b16 %v5431, %v5429
  %v5538 = vpack.c.b16 %v5434, %v5432
  %v5539 = vpack.c.b16 %v5435, %v5433
  %v5540 = vpack.c.b16 %v5438, %v5436
  %v5541 = vpack.c.b16 %v5439, %v5437
  %v5542 = vpack.c.b16 %v5442, %v5440
  %v5543 = vpack.c.b16 %v5443, %v5441
  %v5544 = vpack.c.b16 %v5446, %v5444
  %v5545 = vpack.c.b16 %v5447, %v5445
  %v5546 = vpack.c.b16 %v5450, %v5448
  %v5547 = vpack.c.b16 %v5451, %v5449
  %v5548 = vpack.c.b16 %v5454, %v5452
  %v5549 = vpack.c.b16 %v5455, %v5453
  %v5550 = vpack.c.b16 %v5458, %v5456
  %v5551 = vpack.c.b16 %v5459, %v5457
  %v5552 = vpack.c.b16 %v5462, %v5460
  %v5553 = vpack.c.b16 %v5463, %v5461
  %v5554 = vpack.c.b16 %v5466, %v5464
  %v5555 = vpack.c.b16 %v5467, %v5465
  %v5556 = vpack.c.b16 %v5470, %v5468
  %v5557 = vpack.c.b16 %v5471, %v5469
  %v5558 = vpack.c.b16 %v5474, %v5472
  %v5559 = vpack.c.b16 %v5475, %v5473
  %v5560 = vpack.c.b16 %v5478, %v5476
  %v5561 = vpack.c.b16 %v5479, %v5477
  %v5562 = vpack.c.b16 %v5482, %v5480
  %v5563 = vpack.c.b16 %v5483, %v5481
  %v5564 = vpack.c.b16 %v5486, %v5484
  %v5565 = vpack.c.b16 %v5487, %v5485
  %v5566 = vpack.c.b16 %v5490, %v5488
  %v5567 = vpack.c.b16 %v5491, %v5489
  %v5568 = vpack.c.b16 %v5494, %v5492
  %v5569 = vpack.c.b16 %v5495, %v5493
  %v5570 = vpack.c.b16 %v5498, %v5496
  %v5571 = vpack.c.b16 %v5499, %v5497
  %v5572 = vpack.c.b16 %v5502, %v5500
  %v5573 = vpack.c.b16 %v5503, %v5501
  %v5574 = vpack.c.b16 %v5506, %v5504
  %v5575 = vpack.c.b16 %v5507, %v5505
  %v5576 = vpack.c.b16 %v5510, %v5508
  %v5577 = vpack.c.b16 %v5511, %v5509
  %v5578 = vpack.c.b16 %v5514, %v5512
  %v5579 = vpack.c.b16 %v5515, %v5513
  %5644 = vmatprep.subr.bf16.mxu0 %v5531
  %5645 = vmatpush1.bf16.msra.mxu0 %v5530
  %5646 = vmatprep.subr.bf16.mxu0 %v5529
  %5647 = vmatpush1.bf16.msra.mxu0 %v5528
  %5648 = vmatprep.subr.bf16.mxu0 %v5527
  %5649 = vmatpush1.bf16.msra.mxu0 %v5526
  %5650 = vmatprep.subr.bf16.mxu0 %v5525
  %5651 = vmatpush1.bf16.msra.mxu0 %v5524
  %5652 = vmatprep.subr.bf16.mxu0 %v5523
  %5653 = vmatpush1.bf16.msra.mxu0 %v5522
  %5654 = vmatprep.subr.bf16.mxu0 %v5521
  %5655 = vmatpush1.bf16.msra.mxu0 %v5520
  %5656 = vmatprep.subr.bf16.mxu0 %v5519
  %5657 = vmatpush1.bf16.msra.mxu0 %v5518
  %5658 = vmatprep.subr.bf16.mxu0 %v5517
  %5659 = vmatpush1.bf16.msra.mxu0 %v5516
  %5660 = vmatprep.subr.bf16.mxu0 %v5547
  %5661 = vmatpush2.bf16.msra.mxu0 %v5546
  %5662 = vmatprep.subr.bf16.mxu0 %v5545
  %5663 = vmatpush2.bf16.msra.mxu0 %v5544
  %5664 = vmatprep.subr.bf16.mxu0 %v5543
  %5665 = vmatpush2.bf16.msra.mxu0 %v5542
  %5666 = vmatprep.subr.bf16.mxu0 %v5541
  %5667 = vmatpush2.bf16.msra.mxu0 %v5540
  %5668 = vmatprep.subr.bf16.mxu0 %v5539
  %5669 = vmatpush2.bf16.msra.mxu0 %v5538
  %5670 = vmatprep.subr.bf16.mxu0 %v5537
  %5671 = vmatpush2.bf16.msra.mxu0 %v5536
  %5672 = vmatprep.subr.bf16.mxu0 %v5535
  %5673 = vmatpush2.bf16.msra.mxu0 %v5534
  %5674 = vmatprep.subr.bf16.mxu0 %v5533
  %5675 = vmatpush2.bf16.msra.mxu0 %v5532
  %5676 = vmatprep.mubr.bf16.mxu0 %v5321
  %5677 = vmatmul.mubr.bf16.gmra.mxu0 %v5320
  %v5678 = vpop.f32.mrf.mxu0
  %v5679 = vadd.f32 0.0, %v5678
  %v5680 = vpop.f32.mrf.mxu0
  %v5681 = vadd.f32 0.0, %v5680
  %v5682 = vpop.f32.mrf.mxu0
  %v5683 = vpop.f32.mrf.mxu0
  %5684 = vdwg.mxu0
  %5685 = vmatprep.subr.bf16.mxu0 %v5563
  %5686 = vmatpush1.bf16.msra.mxu0 %v5562
  %5687 = vmatprep.subr.bf16.mxu0 %v5561
  %5688 = vmatpush1.bf16.msra.mxu0 %v5560
  %5689 = vmatprep.subr.bf16.mxu0 %v5559
  %5690 = vmatpush1.bf16.msra.mxu0 %v5558
  %5691 = vmatprep.subr.bf16.mxu0 %v5557
  %5692 = vmatpush1.bf16.msra.mxu0 %v5556
  %5693 = vmatprep.subr.bf16.mxu0 %v5555
  %5694 = vmatpush1.bf16.msra.mxu0 %v5554
  %5695 = vmatprep.subr.bf16.mxu0 %v5553
  %5696 = vmatpush1.bf16.msra.mxu0 %v5552
  %5697 = vmatprep.subr.bf16.mxu0 %v5551
  %5698 = vmatpush1.bf16.msra.mxu0 %v5550
  %5699 = vmatprep.subr.bf16.mxu0 %v5549
  %5700 = vmatpush1.bf16.msra.mxu0 %v5548
  %5701 = vmatprep.subr.bf16.mxu0 %v5579
  %5702 = vmatpush2.bf16.msra.mxu0 %v5578
  %5703 = vmatprep.subr.bf16.mxu0 %v5577
  %5704 = vmatpush2.bf16.msra.mxu0 %v5576
  %5705 = vmatprep.subr.bf16.mxu0 %v5575
  %5706 = vmatpush2.bf16.msra.mxu0 %v5574
  %5707 = vmatprep.subr.bf16.mxu0 %v5573
  %5708 = vmatpush2.bf16.msra.mxu0 %v5572
  %5709 = vmatprep.subr.bf16.mxu0 %v5571
  %5710 = vmatpush2.bf16.msra.mxu0 %v5570
  %5711 = vmatprep.subr.bf16.mxu0 %v5569
  %5712 = vmatpush2.bf16.msra.mxu0 %v5568
  %5713 = vmatprep.subr.bf16.mxu0 %v5567
  %5714 = vmatpush2.bf16.msra.mxu0 %v5566
  %5715 = vmatprep.subr.bf16.mxu0 %v5565
  %5716 = vmatpush2.bf16.msra.mxu0 %v5564
  %5717 = vmatprep.mubr.bf16.mxu0 %v5323
  %5718 = vmatmul.mubr.bf16.gmra.mxu0 %v5322
  %v5719 = vpop.f32.mrf.mxu0
  %v5720 = vadd.f32 %v5679, %v5719
  %v5721 = vpop.f32.mrf.mxu0
  %v5722 = vadd.f32 %v5681, %v5721
  %v5723 = vpop.f32.mrf.mxu0
  %v5724 = vpop.f32.mrf.mxu0
  %5725 = vdwg.mxu0
  %v5726 = vrot.slane %v5720, 4
  %v5727 = vadd.f32 %v5720, %v5726
  %v5728 = vrot.slane %v5727, 2
  %v5729 = vadd.f32 %v5727, %v5728
  %v5730 = vrot.slane %v5729, 1
  %v5731 = vadd.f32 %v5729, %v5730
  %v5732 = vrot.slane %v5722, 4
  %v5733 = vadd.f32 %v5722, %v5732
  %v5734 = vrot.slane %v5733, 2
  %v5735 = vadd.f32 %v5733, %v5734
  %v5736 = vrot.slane %v5735, 1
  %v5737 = vadd.f32 %v5735, %v5736
  %v5738 = vmul.f32 %v5731, %v441
  %v5739 = vmul.f32 %v5737, %v441
  %v5740 = vsub.f32 %v5720, %v5738
  %v5741 = vsub.f32 %v5722, %v5739
  %v5742 = vmul.f32 %v5740, %v5740
  %v5743 = vmul.f32 %v5741, %v5741
  %v5744 = vrot.slane %v5742, 4
  %v5745 = vadd.f32 %v5742, %v5744
  %v5746 = vrot.slane %v5745, 2
  %v5747 = vadd.f32 %v5745, %v5746
  %v5748 = vrot.slane %v5747, 1
  %v5749 = vadd.f32 %v5747, %v5748
  %v5750 = vrot.slane %v5743, 4
  %v5751 = vadd.f32 %v5743, %v5750
  %v5752 = vrot.slane %v5751, 2
  %v5753 = vadd.f32 %v5751, %v5752
  %v5754 = vrot.slane %v5753, 1
  %v5755 = vadd.f32 %v5753, %v5754
  %v5756 = vmul.f32 %v5749, %v441
  %v5757 = vmul.f32 %v5755, %v441
  %s5758 = scalar_lea.vmem %s1, 64
  %v5759 = vld [vmem:[%s5758] ss:$8 sm:$0x3]
  %s5760 = scalar_lea.vmem %s1, 65
  %v5761 = vld [vmem:[%s5760] ss:$8 sm:$0x3]
  %v5762 = vadd.f32 %v5756, 1e-05
  %v5763 = vadd.f32 %v5757, 1e-05
  %v5764 = vrsqrt.pop %v5762
  %v5765 = vrsqrt.pop %v5763
  %v5766 = vmul.f32 %v5740, %v5764
  %v5767 = vmul.f32 %v5741, %v5765
  %v5769 = vlaneseq
  %v5770 = vshrl.u32 %v5769, 7
  %v5771 = vsub.s32 0, %v5770
  %v5772 = vrot.slane %v5759, %v5771
  %v5773 = vlaneseq
  %v5774 = vshrl.u32 %v5773, 7
  %v5775 = vsub.s32 1, %v5774
  %v5776 = vrot.slane %v5759, %v5775
  %v5779 = vmul.f32 %v5766, %v5772
  %v5780 = vmul.f32 %v5767, %v5776
  %v5782 = vlaneseq
  %v5783 = vshrl.u32 %v5782, 7
  %v5784 = vsub.s32 0, %v5783
  %v5785 = vrot.slane %v5761, %v5784
  %v5786 = vlaneseq
  %v5787 = vshrl.u32 %v5786, 7
  %v5788 = vsub.s32 1, %v5787
  %v5789 = vrot.slane %v5761, %v5788
  %v5792 = vadd.f32 %v5779, %v5785
  %v5793 = vadd.f32 %v5780, %v5789
  %v5794 = vmax.f32 %v5792, 0.0
  %v5795 = vmax.f32 %v5793, 0.0
  %s5796 = smul.u32 %s499, 1
  %s5797 = sshll.u32 %s5796, 4
  %5798 = dma.done %s138, %s5797
  %v5799 = vld [vmem:[#allocation7] sm:$0xf]
  %v5800 = vld [vmem:[#allocation7 + $0x4] sm:$0xf]
  %v5801 = vld [vmem:[#allocation7 + $0x8] sm:$0xf]
  %v5802 = vld [vmem:[#allocation7 + $0xc] sm:$0xf]
  %v5803 = vld [vmem:[#allocation7 + $0x10] sm:$0xf]
  %v5804 = vld [vmem:[#allocation7 + $0x14] sm:$0xf]
  %v5805 = vld [vmem:[#allocation7 + $0x18] sm:$0xf]
  %v5806 = vld [vmem:[#allocation7 + $0x1c] sm:$0xf]
  %v5807 = vld [vmem:[#allocation7 + $0x20] sm:$0xf]
  %v5808 = vld [vmem:[#allocation7 + $0x24] sm:$0xf]
  %v5809 = vld [vmem:[#allocation7 + $0x28] sm:$0xf]
  %v5810 = vld [vmem:[#allocation7 + $0x2c] sm:$0xf]
  %v5811 = vld [vmem:[#allocation7 + $0x30] sm:$0xf]
  %v5812 = vld [vmem:[#allocation7 + $0x34] sm:$0xf]
  %v5813 = vld [vmem:[#allocation7 + $0x38] sm:$0xf]
  %v5814 = vld [vmem:[#allocation7 + $0x3c] sm:$0xf]
  %v5815 = vld [vmem:[#allocation7 + $0x40] sm:$0xf]
  %v5816 = vld [vmem:[#allocation7 + $0x44] sm:$0xf]
  %v5817 = vld [vmem:[#allocation7 + $0x48] sm:$0xf]
  %v5818 = vld [vmem:[#allocation7 + $0x4c] sm:$0xf]
  %v5819 = vld [vmem:[#allocation7 + $0x50] sm:$0xf]
  %v5820 = vld [vmem:[#allocation7 + $0x54] sm:$0xf]
  %v5821 = vld [vmem:[#allocation7 + $0x58] sm:$0xf]
  %v5822 = vld [vmem:[#allocation7 + $0x5c] sm:$0xf]
  %v5823 = vld [vmem:[#allocation7 + $0x60] sm:$0xf]
  %v5824 = vld [vmem:[#allocation7 + $0x64] sm:$0xf]
  %v5825 = vld [vmem:[#allocation7 + $0x68] sm:$0xf]
  %v5826 = vld [vmem:[#allocation7 + $0x6c] sm:$0xf]
  %v5827 = vld [vmem:[#allocation7 + $0x70] sm:$0xf]
  %v5828 = vld [vmem:[#allocation7 + $0x74] sm:$0xf]
  %v5829 = vld [vmem:[#allocation7 + $0x78] sm:$0xf]
  %v5830 = vld [vmem:[#allocation7 + $0x7c] sm:$0xf]
  %v5831 = vpack.c.bf16 %v5794, %v5794
  %v5832 = vpack.c.bf16 %v5795, %v5795
  %v5865 = vunpack.c.l.b16 %v5799
  %v5866 = vunpack.c.l.b16 %v5800
  %v5867 = vunpack.c.l.b16 %v5801
  %v5868 = vunpack.c.l.b16 %v5802
  %v5869 = vunpack.c.l.b16 %v5803
  %v5870 = vunpack.c.l.b16 %v5804
  %v5871 = vunpack.c.l.b16 %v5805
  %v5872 = vunpack.c.l.b16 %v5806
  %v5873 = vunpack.c.l.b16 %v5807
  %v5874 = vunpack.c.l.b16 %v5808
  %v5875 = vunpack.c.l.b16 %v5809
  %v5876 = vunpack.c.l.b16 %v5810
  %v5877 = vunpack.c.l.b16 %v5811
  %v5878 = vunpack.c.l.b16 %v5812
  %v5879 = vunpack.c.l.b16 %v5813
  %v5880 = vunpack.c.l.b16 %v5814
  %v5881 = vunpack.c.l.b16 %v5815
  %v5882 = vunpack.c.l.b16 %v5816
  %v5883 = vunpack.c.l.b16 %v5817
  %v5884 = vunpack.c.l.b16 %v5818
  %v5885 = vunpack.c.l.b16 %v5819
  %v5886 = vunpack.c.l.b16 %v5820
  %v5887 = vunpack.c.l.b16 %v5821
  %v5888 = vunpack.c.l.b16 %v5822
  %v5889 = vunpack.c.l.b16 %v5823
  %v5890 = vunpack.c.l.b16 %v5824
  %v5891 = vunpack.c.l.b16 %v5825
  %v5892 = vunpack.c.l.b16 %v5826
  %v5893 = vunpack.c.l.b16 %v5827
  %v5894 = vunpack.c.l.b16 %v5828
  %v5895 = vunpack.c.l.b16 %v5829
  %v5896 = vunpack.c.l.b16 %v5830
  %v5897 = vpack.c.b16 %v5866, %v5865
  %v5898 = vpack.c.b16 %v5868, %v5867
  %v5899 = vpack.c.b16 %v5870, %v5869
  %v5900 = vpack.c.b16 %v5872, %v5871
  %v5901 = vpack.c.b16 %v5874, %v5873
  %v5902 = vpack.c.b16 %v5876, %v5875
  %v5903 = vpack.c.b16 %v5878, %v5877
  %v5904 = vpack.c.b16 %v5880, %v5879
  %v5905 = vpack.c.b16 %v5882, %v5881
  %v5906 = vpack.c.b16 %v5884, %v5883
  %v5907 = vpack.c.b16 %v5886, %v5885
  %v5908 = vpack.c.b16 %v5888, %v5887
  %v5909 = vpack.c.b16 %v5890, %v5889
  %v5910 = vpack.c.b16 %v5892, %v5891
  %v5911 = vpack.c.b16 %v5894, %v5893
  %v5912 = vpack.c.b16 %v5896, %v5895
  %5929 = vmatprep.subr.bf16.mxu0 0
  %5930 = vmatpush1.bf16.msra.mxu0 %v5904
  %5931 = vmatprep.subr.bf16.mxu0 0
  %5932 = vmatpush1.bf16.msra.mxu0 %v5903
  %5933 = vmatprep.subr.bf16.mxu0 0
  %5934 = vmatpush1.bf16.msra.mxu0 %v5902
  %5935 = vmatprep.subr.bf16.mxu0 0
  %5936 = vmatpush1.bf16.msra.mxu0 %v5901
  %5937 = vmatprep.subr.bf16.mxu0 0
  %5938 = vmatpush1.bf16.msra.mxu0 %v5900
  %5939 = vmatprep.subr.bf16.mxu0 0
  %5940 = vmatpush1.bf16.msra.mxu0 %v5899
  %5941 = vmatprep.subr.bf16.mxu0 0
  %5942 = vmatpush1.bf16.msra.mxu0 %v5898
  %5943 = vmatprep.subr.bf16.mxu0 0
  %5944 = vmatpush1.bf16.msra.mxu0 %v5897
  %5945 = vmatprep.subr.bf16.mxu0 0
  %5946 = vmatpush2.bf16.msra.mxu0 %v5912
  %5947 = vmatprep.subr.bf16.mxu0 0
  %5948 = vmatpush2.bf16.msra.mxu0 %v5911
  %5949 = vmatprep.subr.bf16.mxu0 0
  %5950 = vmatpush2.bf16.msra.mxu0 %v5910
  %5951 = vmatprep.subr.bf16.mxu0 0
  %5952 = vmatpush2.bf16.msra.mxu0 %v5909
  %5953 = vmatprep.subr.bf16.mxu0 0
  %5954 = vmatpush2.bf16.msra.mxu0 %v5908
  %5955 = vmatprep.subr.bf16.mxu0 0
  %5956 = vmatpush2.bf16.msra.mxu0 %v5907
  %5957 = vmatprep.subr.bf16.mxu0 0
  %5958 = vmatpush2.bf16.msra.mxu0 %v5906
  %5959 = vmatprep.subr.bf16.mxu0 0
  %5960 = vmatpush2.bf16.msra.mxu0 %v5905
  %5961 = vmatprep.mubr.bf16.mxu0 %v5832
  %5962 = vmatmul.mubr.bf16.gmra.mxu0 %v5831
  %v5963 = vpop.f32.mrf.mxu0
  %v5964 = vadd.f32 0.0, %v5963
  %v5965 = vpop.f32.mrf.mxu0
  %v5966 = vpop.f32.mrf.mxu0
  %v5967 = vpop.f32.mrf.mxu0
  %5968 = vdwg.mxu0
  %v5969 = vsel %vm377, %v5964, 0.0
  %v5970 = vrot.slane %v5969, 4
  %v5971 = vadd.f32 %v5969, %v5970
  %v5972 = vrot.slane %v5971, 2
  %v5973 = vadd.f32 %v5971, %v5972
  %v5974 = vrot.slane %v5973, 1
  %v5975 = vadd.f32 %v5973, %v5974
  %v5976 = vmul.f32 %v5975, %v441
  %v5977 = vsub.f32 %v5964, %v5976
  %v5978 = vmul.f32 %v5977, %v5977
  %v5979 = vsel %vm377, %v5978, 0.0
  %v5980 = vrot.slane %v5979, 4
  %v5981 = vadd.f32 %v5979, %v5980
  %v5982 = vrot.slane %v5981, 2
  %v5983 = vadd.f32 %v5981, %v5982
  %v5984 = vrot.slane %v5983, 1
  %v5985 = vadd.f32 %v5983, %v5984
  %v5986 = vmul.f32 %v5985, %v441
  %v5987 = vld [vmem:[%s1 + $0x42] ss:$0 sm:$0xff]
  %v5988 = vld [vmem:[%s1 + $0x43] ss:$0 sm:$0xff]
  %v5989 = vadd.f32 %v5986, 1e-05
  %v5990 = vrsqrt.pop %v5989
  %v5991 = vmul.f32 %v5977, %v5990
  %v5992 = vmul.f32 %v5991, %v5987
  %v5993 = vadd.f32 %v5992, %v5988
  %v5994 = vmax.f32 %v5993, 0.0
  %s5995 = smul.u32 %s282, 1
  %s5996 = sshll.u32 %s5995, 4
  %5997 = dma.done %s212, %s5996
  %v5998 = vld [vmem:[#allocation8] sm:$0xf]
  %v5999 = vld [vmem:[#allocation8 + $0x4] sm:$0xf]
  %v6000 = vld [vmem:[#allocation8 + $0x8] sm:$0xf]
  %v6001 = vld [vmem:[#allocation8 + $0xc] sm:$0xf]
  %v6002 = vld [vmem:[#allocation8 + $0x10] sm:$0xf]
  %v6003 = vld [vmem:[#allocation8 + $0x14] sm:$0xf]
  %v6004 = vld [vmem:[#allocation8 + $0x18] sm:$0xf]
  %v6005 = vld [vmem:[#allocation8 + $0x1c] sm:$0xf]
  %v6006 = vld [vmem:[#allocation8 + $0x20] sm:$0xf]
  %v6007 = vld [vmem:[#allocation8 + $0x24] sm:$0xf]
  %v6008 = vld [vmem:[#allocation8 + $0x28] sm:$0xf]
  %v6009 = vld [vmem:[#allocation8 + $0x2c] sm:$0xf]
  %v6010 = vld [vmem:[#allocation8 + $0x30] sm:$0xf]
  %v6011 = vld [vmem:[#allocation8 + $0x34] sm:$0xf]
  %v6012 = vld [vmem:[#allocation8 + $0x38] sm:$0xf]
  %v6013 = vpack.c.bf16 %v5994, %v5994
  %v6014 = vld [vmem:[%s1 + $0x44] ss:$0 sm:$0xff]
  %v6030 = vunpack.c.l.b16 %v5998
  %v6031 = vunpack.c.l.b16 %v5999
  %v6032 = vunpack.c.l.b16 %v6000
  %v6033 = vunpack.c.l.b16 %v6001
  %v6034 = vunpack.c.l.b16 %v6002
  %v6035 = vunpack.c.l.b16 %v6003
  %v6036 = vunpack.c.l.b16 %v6004
  %v6037 = vunpack.c.l.b16 %v6005
  %v6038 = vunpack.c.l.b16 %v6006
  %v6039 = vunpack.c.l.b16 %v6007
  %v6040 = vunpack.c.l.b16 %v6008
  %v6041 = vunpack.c.l.b16 %v6009
  %v6042 = vunpack.c.l.b16 %v6010
  %v6043 = vunpack.c.l.b16 %v6011
  %v6044 = vunpack.c.l.b16 %v6012
  %v6045 = vpack.c.b16 %v6031, %v6030
  %v6046 = vpack.c.b16 %v6033, %v6032
  %v6047 = vpack.c.b16 %v6035, %v6034
  %v6048 = vpack.c.b16 %v6037, %v6036
  %v6049 = vpack.c.b16 %v6039, %v6038
  %v6050 = vpack.c.b16 %v6041, %v6040
  %v6051 = vpack.c.b16 %v6043, %v6042
  %v6052 = vpack.c.b16 %v6044, %v6044
  %v6061 = vsel %vm377, %v6013, 0
  %v6064 = vsel %vm381, %v6052, 0
  %6066 = vmatprep.subr.bf16.mxu0 0
  %6067 = vmatpush1.bf16.msra.mxu0 %v6064
  %6068 = vmatprep.subr.bf16.mxu0 0
  %6069 = vmatpush1.bf16.msra.mxu0 %v6051
  %6070 = vmatprep.subr.bf16.mxu0 0
  %6071 = vmatpush1.bf16.msra.mxu0 %v6050
  %6072 = vmatprep.subr.bf16.mxu0 0
  %6073 = vmatpush1.bf16.msra.mxu0 %v6049
  %6074 = vmatprep.subr.bf16.mxu0 0
  %6075 = vmatpush1.bf16.msra.mxu0 %v6048
  %6076 = vmatprep.subr.bf16.mxu0 0
  %6077 = vmatpush1.bf16.msra.mxu0 %v6047
  %6078 = vmatprep.subr.bf16.mxu0 0
  %6079 = vmatpush1.bf16.msra.mxu0 %v6046
  %6080 = vmatprep.subr.bf16.mxu0 0
  %6081 = vmatpush1.bf16.msra.mxu0 %v6045
  %6082 = vmatprep.subr.bf16.mxu0 0
  %6083 = vmatpush2.bf16.msra.mxu0 0
  %6084 = vmatprep.subr.bf16.mxu0 0
  %6085 = vmatpush2.bf16.msra.mxu0 0
  %6086 = vmatprep.subr.bf16.mxu0 0
  %6087 = vmatpush2.bf16.msra.mxu0 0
  %6088 = vmatprep.subr.bf16.mxu0 0
  %6089 = vmatpush2.bf16.msra.mxu0 0
  %6090 = vmatprep.subr.bf16.mxu0 0
  %6091 = vmatpush2.bf16.msra.mxu0 0
  %6092 = vmatprep.subr.bf16.mxu0 0
  %6093 = vmatpush2.bf16.msra.mxu0 0
  %6094 = vmatprep.subr.bf16.mxu0 0
  %6095 = vmatpush2.bf16.msra.mxu0 0
  %6096 = vmatprep.subr.bf16.mxu0 0
  %6097 = vmatpush2.bf16.msra.mxu0 0
  %6098 = vmatprep.mubr.bf16.mxu0 0
  %6099 = vmatmul.mubr.bf16.gmra.mxu0 %v6061
  %v6100 = vpop.f32.mrf.mxu0
  %v6101 = vadd.f32 %v6014, %v6100
  %v6102 = vpop.f32.mrf.mxu0
  %v6103 = vpop.f32.mrf.mxu0
  %v6104 = vpop.f32.mrf.mxu0
  %6105 = vdwg.mxu0
  %vm6106 = vcmask 15360
  %6107 = vst.msk [vmem:[%s9] sm:$0xff] %vm6106, %v6101
  // Predicated region
  $region131: #{tpu_custom_call.1} parent=0 // pred_check
    _
  $region132: #{tpu_custom_call.1} parent=0 // pred_check_branch
    %6109 = sbr.rel (0) target = $region134
  $region133: #{tpu_custom_call.1} parent=0 // pred_region
    _
  $region134: #{tpu_custom_call.1} parent=0 // pred_fallthru
    _
  // Predicated region
  $region135: #{tpu_custom_call.1} parent=0 // pred_check
    _
  $region136: #{tpu_custom_call.1} parent=0 // pred_check_branch
    %6111 = sbr.rel (0) target = $region138
  $region137: #{tpu_custom_call.1} parent=0 // pred_region
    _
  $region138: #{tpu_custom_call.1} parent=0 // pred_fallthru
    _
  %6112 = vsyncmov [#allocation9]
  %s6113 = vpop.sfrf %6112
  %p6114 = scmp.eq.s32.totalorder %s6113, 0
  %p6115 = pneg %p6114
  %6117 = shalt.err (%p6115)
  %s6118 = scalar_lea.sflag [#allocation9], 1
  %6119 = vsyncmov %s6118
  %s6120 = vpop.sfrf %6119
  %p6121 = scmp.eq.s32.totalorder %s6120, 0
  %p6122 = pneg %p6121
  %6124 = shalt.err (%p6122)
  %s6125 = scalar_lea.sflag [#allocation9], 2
  %6126 = vsyncmov %s6125
  %s6127 = vpop.sfrf %6126
  %p6128 = scmp.eq.s32.totalorder %s6127, 0
  %p6129 = pneg %p6128
  %6131 = shalt.err (%p6129)
  %s6132 = scalar_lea.sflag [#allocation9], 3
  %6133 = vsyncmov %s6132
  %s6134 = vpop.sfrf %6133
  %p6135 = scmp.eq.s32.totalorder %s6134, 0
  %p6136 = pneg %p6135
  %6138 = shalt.err (%p6136)
  %s6139 = scalar_lea.sflag [#allocation9], 4
  %6140 = vsyncmov %s6139
  %s6141 = vpop.sfrf %6140
  %p6142 = scmp.eq.s32.totalorder %s6141, 0
  %p6143 = pneg %p6142
  %6145 = shalt.err (%p6143)
  %s6146 = scalar_lea.sflag [#allocation9], 5
  %6147 = vsyncmov %s6146
  %s6148 = vpop.sfrf %6147
  %p6149 = scmp.eq.s32.totalorder %s6148, 0
  %p6150 = pneg %p6149
  %6152 = shalt.err (%p6150)
  %s6153 = scalar_lea.sflag [#allocation9], 6
  %6154 = vsyncmov %s6153
  %s6155 = vpop.sfrf %6154
  %p6156 = scmp.eq.s32.totalorder %s6155, 0
  %p6157 = pneg %p6156
  %6159 = shalt.err (%p6157)

</llo_original>
